<compile_context>
chip_gen: v7x
topology: tpu7x:2x2x1
jax: 0.10.0
libtpu: 0.0.40
codegen_flags: <defaults>
</compile_context>

<pallas_src>
import jax
import jax.numpy as jnp
import numpy as np
from jax import lax
from jax.experimental import pallas as pl
from jax.experimental.pallas import tpu as pltpu

# ---- static configuration ---------------------------------------------------
B, C, H, W = 2, 32, 16, 16          # batch, channels, spatial
K = 3                               # kernel_size
PAD = 1                             # padding
RD = int(C * 0.0625)                # SE reduced channels (= 2)
EPS = 1e-5                          # BatchNorm eps
HW = H * W                          # 256 pixels per image
KK = K * K                          # 9 taps
ROWPAD = 8 + W                      # 8 alignment rows + one H-pad image row
NP = HW + 2 * ROWPAD                # 304 rows in the flattened padded slab
CHUNK = 64                          # epilogue streaming chunk (rows)

assert (W & (W - 1)) == 0           # W power of two (cheap w-coordinate mask)
assert HW % CHUNK == 0
assert 2 + 3 * RD <= 8              # packed-param rows fit in an (8, C) tile


# ---- Pallas kernel (one batch element per grid step) ------------------------
def mobileone_kernel(xflat_ref, w_ref, pp_ref, o_ref, cols_ref, ybuf_ref):
    # xflat_ref: (NP, C)    bf16  flattened zero-padded image; pixel p=(h*W+w)
    #                              lives at row ROWPAD+p, pad rows are zeros.
    # w_ref    : (KK*C, C)  bf16  folded conv weight (all branches + BN),
    #                              rows ordered (dh, dw, cin).
    # pp_ref   : (8, C)     f32   packed small params:
    #                              row0 bias, row1 b_ex, rows2-3 w_rd,
    #                              rows4-5 w_ex^T, rows6-7 b_rd (lane-broadcast)
    # o_ref    : (HW, C)    bf16  output, pixel-major (flattened NHWC spatial)
    # cols_ref : (HW, KK*C) bf16  VMEM scratch: in-kernel im2col slab
    # ybuf_ref : (HW, C)    f32   VMEM scratch: conv result for streamed epilogue

    # ---- in-kernel im2col: 9 shifted sublane windows + W-boundary masking ----
    row_idx = lax.broadcasted_iota(jnp.int32, (HW, C), 0)
    w_coord = row_idx & (W - 1)                 # w coordinate of each pixel row
    mask_l = w_coord != 0                       # tap dw==0 invalid at w==0
    mask_r = w_coord != (W - 1)                 # tap dw==K-1 invalid at w==W-1

    for dh in range(K):
        for dw in range(K):
            t = dh * K + dw
            start = ROWPAD + (dh - 1) * W + (dw - 1)        # static offset
            tap = xflat_ref[start:start + HW, :]            # (HW, C) bf16
            if dw == 0:
                tap = jnp.where(mask_l, tap, jnp.zeros_like(tap))
            elif dw == K - 1:
                tap = jnp.where(mask_r, tap, jnp.zeros_like(tap))
            cols_ref[:, t * C:(t + 1) * C] = tap

    # ---- single MXU matmul, contraction depth KK*C = 288 (all branches folded)
    y = jnp.dot(cols_ref[...], w_ref[...],
                preferred_element_type=jnp.float32)          # (HW, C) f32
    ybuf_ref[...] = y

    # ---- SE squeeze/excite (tiny, VPU/XLU; RD == 2 -> no degenerate matmuls) -
    bias = pp_ref[0:1, :]                                    # (1, C) folded bias
    pooled = jnp.mean(y, axis=0, keepdims=True) + bias       # global avg pool
    e_pre = pp_ref[1:2, :]                                   # (1, C) b_ex
    for j in range(RD):                                      # static unroll
        rj = jnp.sum(pooled * pp_ref[2 + j:3 + j, :], axis=1,
                     keepdims=True) + pp_ref[6 + j:7 + j, 0:1]   # (1, 1)
        rj = jnp.maximum(rj, 0.0)                            # ReLU
        e_pre = e_pre + rj * pp_ref[4 + j:5 + j, :]
    e = jax.nn.sigmoid(e_pre)                                # (1, C)

    # hoist broadcasts out of the streaming loop
    e_b = jnp.broadcast_to(e, (CHUNK, C))
    be_b = jnp.broadcast_to(bias * e, (CHUNK, C))

    # ---- streamed epilogue: bias + SE scale + tanh-GELU, bf16 stores ---------
    def epilogue(i, carry):
        s = pl.multiple_of(i * CHUNK, CHUNK)
        yj = ybuf_ref[pl.ds(s, CHUNK), :]                    # (CHUNK, C) f32
        outj = yj * e_b + be_b                               # (y + bias) * e
        o_ref[pl.ds(s, CHUNK), :] = jax.nn.gelu(
            outj, approximate=True).astype(o_ref.dtype)      # tanh GELU -> EUP
        return carry

    lax.fori_loop(0, HW // CHUNK, epilogue, 0)


# ---- wrapper ----------------------------------------------------------------
def mobileone_forward(x_nchw, kp):
    """x_nchw: (B, C, H, W) float32 -> (B, C, H, W) float32."""
    # Layout prep only (tiny, fuses in XLA): NCHW->NHWC, bf16 cast, flatten the
    # spatial dims, zero-pad rows (8 alignment + one image row of H-padding on
    # each side).  W-padding is handled by masking inside the kernel.
    x = jnp.transpose(x_nchw, (0, 2, 3, 1)).astype(jnp.bfloat16)   # (B,H,W,C)
    xflat = jnp.pad(x.reshape(B, HW, C),
                    ((0, 0), (ROWPAD, ROWPAD), (0, 0)))            # (B,NP,C)

    out_flat = pl.pallas_call(
        mobileone_kernel,
        out_shape=jax.ShapeDtypeStruct((B, HW, C), jnp.bfloat16),
        grid=(B,),                                      # one image per step
        in_specs=[
            pl.BlockSpec((None, NP, C), lambda b: (b, 0, 0)),   # per-batch slab
            pl.BlockSpec((KK * C, C), lambda b: (0, 0)),        # folded weight
            pl.BlockSpec((8, C), lambda b: (0, 0)),             # packed params
        ],
        out_specs=pl.BlockSpec((None, HW, C), lambda b: (b, 0, 0)),
        scratch_shapes=[
            pltpu.VMEM((HW, KK * C), jnp.bfloat16),     # im2col slab (~147 KiB)
            pltpu.VMEM((HW, C), jnp.float32),           # conv-result buffer
        ],
        compiler_params=pltpu.CompilerParams(
            dimension_semantics=("parallel",)),         # batch across TCs (v7x)
    )(xflat, kp["w_folded"], kp["pp"])

    # Pure-reshape unpack (rows are pixel-major) + interface NHWC->NCHW.
    out = out_flat.reshape(B, H, W, C).astype(jnp.float32)
    return jnp.transpose(out, (0, 3, 1, 2))


# ---- parameter setup (deterministic, synthetic) -----------------------------
def make_params(key):
    ks = jax.random.split(key, 16)
    p = {}
    p["w_conv"] = jax.random.normal(ks[0], (C, C, K, K), jnp.float32) * 0.1
    p["w_scale"] = jax.random.normal(ks[1], (C, C, 1, 1), jnp.float32) * 0.1

    def bn_params(k):
        k1, k2, k3, k4 = jax.random.split(k, 4)
        gamma = jax.random.uniform(k1, (C,), jnp.float32, 0.5, 1.5)
        beta = jax.random.normal(k2, (C,), jnp.float32) * 0.1
        mean = jax.random.normal(k3, (C,), jnp.float32) * 0.1
        var = jax.random.uniform(k4, (C,), jnp.float32, 0.5, 1.5)
        return gamma, beta, mean, var

    p["bn_conv"] = bn_params(ks[2])
    p["bn_scale"] = bn_params(ks[3])
    p["bn_skip"] = bn_params(ks[4])

    p["w_rd"] = jax.random.normal(ks[5], (RD, C, 1, 1), jnp.float32) * 0.1
    p["b_rd"] = jax.random.normal(ks[6], (RD,), jnp.float32) * 0.1
    p["w_ex"] = jax.random.normal(ks[7], (C, RD, 1, 1), jnp.float32) * 0.1
    p["b_ex"] = jax.random.normal(ks[8], (C,), jnp.float32) * 0.1
    return p


def kernel_params(p):
    """Fold BN affines + all three branches into one 3x3 weight and bias
    (exact in eval mode; same math as MobileOneBlock._get_kernel_bias), and
    pack the tiny SE/bias parameters into a single (8, C) f32 tile."""
    def fuse(w_oihw, bn):
        g, b, m, v = bn
        t = g / jnp.sqrt(v + EPS)
        return w_oihw * t[:, None, None, None], b - m * t

    # rbr_conv (3x3 conv + BN)
    k_conv, b_conv = fuse(p["w_conv"], p["bn_conv"])
    # rbr_scale (1x1 conv + BN) -> 3x3 center tap
    k_s1, b_scale = fuse(p["w_scale"], p["bn_scale"])
    k_scale = jnp.zeros((C, C, K, K), jnp.float32).at[:, :, K // 2, K // 2].set(
        k_s1[:, :, 0, 0])
    # rbr_skip (BN) -> scaled identity at the center tap
    g, b, m, v = p["bn_skip"]
    t = g / jnp.sqrt(v + EPS)
    k_skip = jnp.zeros((C, C, K, K), jnp.float32).at[:, :, K // 2, K // 2].set(
        jnp.eye(C, dtype=jnp.float32) * t[:, None])
    b_skip = b - m * t

    k_total = k_conv + k_scale + k_skip           # (O, I, KH, KW)
    bias_total = b_conv + b_scale + b_skip        # (C,)

    # Match im2col column order (dh, dw, cin): OIHW -> (KH, KW, I, O) -> (9C, O)
    w_folded = jnp.transpose(k_total, (2, 3, 1, 0)).reshape(K * K * C, C)

    # Packed small params (one (8, C) f32 tile -> one DMA).
    pp = jnp.zeros((8, C), jnp.float32)
    pp = pp.at[0].set(bias_total)
    pp = pp.at[1].set(p["b_ex"])
    pp = pp.at[2:2 + RD].set(p["w_rd"][:, :, 0, 0])
    pp = pp.at[4:4 + RD].set(p["w_ex"][:, :, 0, 0].T)
    for j in range(RD):
        pp = pp.at[6 + j].set(jnp.full((C,), p["b_rd"][j], jnp.float32))

    return {
        "w_folded": w_folded.astype(jnp.bfloat16),   # MXU operand in bf16
        "pp": pp,                                    # (8, C) f32
    }


# ---- pure-JAX reference (un-folded multi-branch forward, f32, exact GELU) ---
def reference(x, p):
    def conv2d(x, w, pad):
        return jax.lax.conv_general_dilated(
            x, w, (1, 1), [(pad, pad), (pad, pad)],
            dimension_numbers=("NCHW", "OIHW", "NCHW"),
            precision=jax.lax.Precision.HIGHEST)

    def bn(x, bnp):
        g, b, m, v = bnp
        return ((x - m[None, :, None, None])
                / jnp.sqrt(v + EPS)[None, :, None, None]
                * g[None, :, None, None] + b[None, :, None, None])

    conv_out = bn(conv2d(x, p["w_conv"], PAD), p["bn_conv"])
    scale_out = bn(conv2d(x, p["w_scale"], 0), p["bn_scale"])
    skip_out = bn(x, p["bn_skip"])
    out = scale_out + skip_out + conv_out
    pooled = jnp.mean(out, axis=(2, 3), keepdims=True)
    r = jax.nn.relu(conv2d(pooled, p["w_rd"], 0) + p["b_rd"][None, :, None, None])
    e = jax.nn.sigmoid(conv2d(r, p["w_ex"], 0) + p["b_ex"][None, :, None, None])
    out = out * e
    return jax.nn.gelu(out, approximate=False)


if __name__ == "__main__":
    key = jax.random.PRNGKey(0)
    pkey, xkey = jax.random.split(key)
    params = make_params(pkey)
    kp = kernel_params(params)
    x = jax.random.normal(xkey, (B, C, H, W), jnp.float32)   # PyTorch NCHW input

    out = jax.block_until_ready(mobileone_forward(x, kp))

    ref = jax.block_until_ready(reference(x, params))
    assert out.shape == (B, C, H, W)
    # bf16 operands + bf16 output + tanh-GELU (vs exact erf in the reference):
    # tolerance loosened accordingly (review: both effects << 2e-2).
    np.testing.assert_allclose(np.asarray(out), np.asarray(ref),
                               rtol=2e-2, atol=2.5e-2)
    print("KERNEL_OK")
</pallas_src>

<mosaic_0001>
module attributes {stable_mosaic.version = 11 : i64} {
  func.func @mobileone_kernel(%arg0: i32, %arg1: memref<1x304x32xbf16, #tpu.memory_space<vmem>>, %arg2: memref<288x32xbf16, #tpu.memory_space<vmem>>, %arg3: memref<8x32xf32, #tpu.memory_space<vmem>>, %arg4: memref<1x256x32xbf16, #tpu.memory_space<vmem>>, %arg5: memref<256x288xbf16, #tpu.memory_space<vmem>>, %arg6: memref<256x32xf32, #tpu.memory_space<vmem>>) attributes {dimension_semantics = [#tpu.dimension_semantics<parallel>], iteration_bounds = array<i64: 2>, scalar_prefetch = 0 : i64, scratch_operands = 2 : i64, tpu.core_type = #tpu.core_type<tc>, window_params = [{transform_indices = @transform_0, window_bounds = array<i64: 1, 304, 32>}, {pipeline_mode = #tpu.pipeline_mode<synchronous>, transform_indices = @transform_1, window_bounds = array<i64: 288, 32>}, {pipeline_mode = #tpu.pipeline_mode<synchronous>, transform_indices = @transform_2, window_bounds = array<i64: 8, 32>}, {transform_indices = @transform_3, window_bounds = array<i64: 1, 256, 32>}]} {
    %0 = tpu.iota {dimensions = array<i32: 0>} : vector<256x32xi32>
    %c15_i32 = arith.constant 15 : i32
    %1 = vector.broadcast %c15_i32 : i32 to vector<256x32xi32>
    %2 = arith.andi %0, %1 : vector<256x32xi32>
    %c0_i32 = arith.constant 0 : i32
    %3 = vector.broadcast %c0_i32 : i32 to vector<256x32xi32>
    %4 = arith.cmpi ne, %2, %3 : vector<256x32xi32>
    %c15_i32_0 = arith.constant 15 : i32
    %5 = vector.broadcast %c15_i32_0 : i32 to vector<256x32xi32>
    %6 = arith.cmpi ne, %2, %5 : vector<256x32xi32>
    %c0 = arith.constant 0 : index
    %c7 = arith.constant 7 : index
    %c0_1 = arith.constant 0 : index
    %7 = vector.load %arg1[%c0, %c7, %c0_1] : memref<1x304x32xbf16, #tpu.memory_space<vmem>>, vector<1x256x32xbf16>
    %8 = vector.shape_cast %7 : vector<1x256x32xbf16> to vector<256x32xbf16>
    %cst = arith.constant 0.000000e+00 : bf16
    %9 = vector.broadcast %cst : bf16 to vector<256x32xbf16>
    %10 = arith.select %4, %8, %9 : vector<256x32xi1>, vector<256x32xbf16>
    %c0_2 = arith.constant 0 : index
    %c0_3 = arith.constant 0 : index
    %11 = vector.load %arg5[%c0_2, %c0_3] : memref<256x288xbf16, #tpu.memory_space<vmem>>, vector<256x32xbf16>
    tpu.vector_store %arg5[%c0_2, %c0_3], %10 {strides = array<i32>} : memref<256x288xbf16, #tpu.memory_space<vmem>>, vector<256x32xbf16>,
    %c0_4 = arith.constant 0 : index
    %c8 = arith.constant 8 : index
    %c0_5 = arith.constant 0 : index
    %12 = vector.load %arg1[%c0_4, %c8, %c0_5] : memref<1x304x32xbf16, #tpu.memory_space<vmem>>, vector<1x256x32xbf16>
    %13 = vector.shape_cast %12 : vector<1x256x32xbf16> to vector<256x32xbf16>
    %c0_6 = arith.constant 0 : index
    %c32 = arith.constant 32 : index
    %14 = vector.load %arg5[%c0_6, %c32] : memref<256x288xbf16, #tpu.memory_space<vmem>>, vector<256x32xbf16>
    tpu.vector_store %arg5[%c0_6, %c32], %13 {strides = array<i32>} : memref<256x288xbf16, #tpu.memory_space<vmem>>, vector<256x32xbf16>,
    %c0_7 = arith.constant 0 : index
    %c9 = arith.constant 9 : index
    %c0_8 = arith.constant 0 : index
    %15 = vector.load %arg1[%c0_7, %c9, %c0_8] : memref<1x304x32xbf16, #tpu.memory_space<vmem>>, vector<1x256x32xbf16>
    %16 = vector.shape_cast %15 : vector<1x256x32xbf16> to vector<256x32xbf16>
    %cst_9 = arith.constant 0.000000e+00 : bf16
    %17 = vector.broadcast %cst_9 : bf16 to vector<256x32xbf16>
    %18 = arith.select %6, %16, %17 : vector<256x32xi1>, vector<256x32xbf16>
    %c0_10 = arith.constant 0 : index
    %c64 = arith.constant 64 : index
    %19 = vector.load %arg5[%c0_10, %c64] : memref<256x288xbf16, #tpu.memory_space<vmem>>, vector<256x32xbf16>
    tpu.vector_store %arg5[%c0_10, %c64], %18 {strides = array<i32>} : memref<256x288xbf16, #tpu.memory_space<vmem>>, vector<256x32xbf16>,
    %c0_11 = arith.constant 0 : index
    %c23 = arith.constant 23 : index
    %c0_12 = arith.constant 0 : index
    %20 = vector.load %arg1[%c0_11, %c23, %c0_12] : memref<1x304x32xbf16, #tpu.memory_space<vmem>>, vector<1x256x32xbf16>
    %21 = vector.shape_cast %20 : vector<1x256x32xbf16> to vector<256x32xbf16>
    %cst_13 = arith.constant 0.000000e+00 : bf16
    %22 = vector.broadcast %cst_13 : bf16 to vector<256x32xbf16>
    %23 = arith.select %4, %21, %22 : vector<256x32xi1>, vector<256x32xbf16>
    %c0_14 = arith.constant 0 : index
    %c96 = arith.constant 96 : index
    %24 = vector.load %arg5[%c0_14, %c96] : memref<256x288xbf16, #tpu.memory_space<vmem>>, vector<256x32xbf16>
    tpu.vector_store %arg5[%c0_14, %c96], %23 {strides = array<i32>} : memref<256x288xbf16, #tpu.memory_space<vmem>>, vector<256x32xbf16>,
    %c0_15 = arith.constant 0 : index
    %c24 = arith.constant 24 : index
    %c0_16 = arith.constant 0 : index
    %25 = vector.load %arg1[%c0_15, %c24, %c0_16] : memref<1x304x32xbf16, #tpu.memory_space<vmem>>, vector<1x256x32xbf16>
    %26 = vector.shape_cast %25 : vector<1x256x32xbf16> to vector<256x32xbf16>
    %c0_17 = arith.constant 0 : index
    %c128 = arith.constant 128 : index
    %27 = vector.load %arg5[%c0_17, %c128] : memref<256x288xbf16, #tpu.memory_space<vmem>>, vector<256x32xbf16>
    tpu.vector_store %arg5[%c0_17, %c128], %26 {strides = array<i32>} : memref<256x288xbf16, #tpu.memory_space<vmem>>, vector<256x32xbf16>,
    %c0_18 = arith.constant 0 : index
    %c25 = arith.constant 25 : index
    %c0_19 = arith.constant 0 : index
    %28 = vector.load %arg1[%c0_18, %c25, %c0_19] : memref<1x304x32xbf16, #tpu.memory_space<vmem>>, vector<1x256x32xbf16>
    %29 = vector.shape_cast %28 : vector<1x256x32xbf16> to vector<256x32xbf16>
    %cst_20 = arith.constant 0.000000e+00 : bf16
    %30 = vector.broadcast %cst_20 : bf16 to vector<256x32xbf16>
    %31 = arith.select %6, %29, %30 : vector<256x32xi1>, vector<256x32xbf16>
    %c0_21 = arith.constant 0 : index
    %c160 = arith.constant 160 : index
    %32 = vector.load %arg5[%c0_21, %c160] : memref<256x288xbf16, #tpu.memory_space<vmem>>, vector<256x32xbf16>
    tpu.vector_store %arg5[%c0_21, %c160], %31 {strides = array<i32>} : memref<256x288xbf16, #tpu.memory_space<vmem>>, vector<256x32xbf16>,
    %c0_22 = arith.constant 0 : index
    %c39 = arith.constant 39 : index
    %c0_23 = arith.constant 0 : index
    %33 = vector.load %arg1[%c0_22, %c39, %c0_23] : memref<1x304x32xbf16, #tpu.memory_space<vmem>>, vector<1x256x32xbf16>
    %34 = vector.shape_cast %33 : vector<1x256x32xbf16> to vector<256x32xbf16>
    %cst_24 = arith.constant 0.000000e+00 : bf16
    %35 = vector.broadcast %cst_24 : bf16 to vector<256x32xbf16>
    %36 = arith.select %4, %34, %35 : vector<256x32xi1>, vector<256x32xbf16>
    %c0_25 = arith.constant 0 : index
    %c192 = arith.constant 192 : index
    %37 = vector.load %arg5[%c0_25, %c192] : memref<256x288xbf16, #tpu.memory_space<vmem>>, vector<256x32xbf16>
    tpu.vector_store %arg5[%c0_25, %c192], %36 {strides = array<i32>} : memref<256x288xbf16, #tpu.memory_space<vmem>>, vector<256x32xbf16>,
    %c0_26 = arith.constant 0 : index
    %c40 = arith.constant 40 : index
    %c0_27 = arith.constant 0 : index
    %38 = vector.load %arg1[%c0_26, %c40, %c0_27] : memref<1x304x32xbf16, #tpu.memory_space<vmem>>, vector<1x256x32xbf16>
    %39 = vector.shape_cast %38 : vector<1x256x32xbf16> to vector<256x32xbf16>
    %c0_28 = arith.constant 0 : index
    %c224 = arith.constant 224 : index
    %40 = vector.load %arg5[%c0_28, %c224] : memref<256x288xbf16, #tpu.memory_space<vmem>>, vector<256x32xbf16>
    tpu.vector_store %arg5[%c0_28, %c224], %39 {strides = array<i32>} : memref<256x288xbf16, #tpu.memory_space<vmem>>, vector<256x32xbf16>,
    %c0_29 = arith.constant 0 : index
    %c41 = arith.constant 41 : index
    %c0_30 = arith.constant 0 : index
    %41 = vector.load %arg1[%c0_29, %c41, %c0_30] : memref<1x304x32xbf16, #tpu.memory_space<vmem>>, vector<1x256x32xbf16>
    %42 = vector.shape_cast %41 : vector<1x256x32xbf16> to vector<256x32xbf16>
    %cst_31 = arith.constant 0.000000e+00 : bf16
    %43 = vector.broadcast %cst_31 : bf16 to vector<256x32xbf16>
    %44 = arith.select %6, %42, %43 : vector<256x32xi1>, vector<256x32xbf16>
    %c0_32 = arith.constant 0 : index
    %c256 = arith.constant 256 : index
    %45 = vector.load %arg5[%c0_32, %c256] : memref<256x288xbf16, #tpu.memory_space<vmem>>, vector<256x32xbf16>
    tpu.vector_store %arg5[%c0_32, %c256], %44 {strides = array<i32>} : memref<256x288xbf16, #tpu.memory_space<vmem>>, vector<256x32xbf16>,
    %c0_33 = arith.constant 0 : index
    %c0_34 = arith.constant 0 : index
    %46 = vector.load %arg5[%c0_33, %c0_34] : memref<256x288xbf16, #tpu.memory_space<vmem>>, vector<256x288xbf16>
    %c0_35 = arith.constant 0 : index
    %c0_36 = arith.constant 0 : index
    %47 = vector.load %arg2[%c0_35, %c0_36] : memref<288x32xbf16, #tpu.memory_space<vmem>>, vector<288x32xbf16>
    %cst_37 = arith.constant dense<0.000000e+00> : vector<256x32xf32>
    %48 = tpu.matmul %46, %47, %cst_37 {dimension_numbers = #tpu.dot_dimension_numbers<[1], [0], [0], [1], [0, 0, 1, 1], [], []>} : vector<256x288xbf16>, vector<288x32xbf16>, vector<256x32xf32> -> vector<256x32xf32>
    %c0_38 = arith.constant 0 : index
    %c0_39 = arith.constant 0 : index
    %49 = vector.load %arg6[%c0_38, %c0_39] : memref<256x32xf32, #tpu.memory_space<vmem>>, vector<256x32xf32>
    tpu.vector_store %arg6[%c0_38, %c0_39], %48 {strides = array<i32>} : memref<256x32xf32, #tpu.memory_space<vmem>>, vector<256x32xf32>,
    %c0_40 = arith.constant 0 : index
    %c0_41 = arith.constant 0 : index
    %50 = vector.load %arg3[%c0_40, %c0_41] : memref<8x32xf32, #tpu.memory_space<vmem>>, vector<1x32xf32>
    %cst_42 = arith.constant dense<0.000000e+00> : vector<32xf32>
    %51 = vector.multi_reduction <add>, %48, %cst_42 [0] : vector<256x32xf32> to vector<32xf32>
    %52 = vector.shape_cast %51 : vector<32xf32> to vector<1x32xf32>
    %cst_43 = arith.constant 2.560000e+02 : f32
    %53 = vector.broadcast %cst_43 : f32 to vector<1x32xf32>
    %54 = arith.divf %52, %53 : vector<1x32xf32>
    %55 = arith.addf %54, %50 : vector<1x32xf32>
    %c1 = arith.constant 1 : index
    %c0_44 = arith.constant 0 : index
    %56 = vector.load %arg3[%c1, %c0_44] : memref<8x32xf32, #tpu.memory_space<vmem>>, vector<1x32xf32>
    %c2 = arith.constant 2 : index
    %c0_45 = arith.constant 0 : index
    %57 = vector.load %arg3[%c2, %c0_45] : memref<8x32xf32, #tpu.memory_space<vmem>>, vector<1x32xf32>
    %58 = arith.mulf %55, %57 : vector<1x32xf32>
    %cst_46 = arith.constant dense<0.000000e+00> : vector<1xf32>
    %59 = vector.multi_reduction <add>, %58, %cst_46 [1] : vector<1x32xf32> to vector<1xf32>
    %60 = vector.shape_cast %59 : vector<1xf32> to vector<1x1xf32>
    %c6 = arith.constant 6 : index
    %c0_47 = arith.constant 0 : index
    %61 = vector.load %arg3[%c6, %c0_47] : memref<8x32xf32, #tpu.memory_space<vmem>>, vector<1x1xf32>
    %62 = arith.addf %60, %61 : vector<1x1xf32>
    %cst_48 = arith.constant 0.000000e+00 : f32
    %63 = vector.broadcast %cst_48 : f32 to vector<1x1xf32>
    %64 = arith.maximumf %62, %63 : vector<1x1xf32>
    %c4 = arith.constant 4 : index
    %c0_49 = arith.constant 0 : index
    %65 = vector.load %arg3[%c4, %c0_49] : memref<8x32xf32, #tpu.memory_space<vmem>>, vector<1x32xf32>
    %66 = vector.broadcast %64 : vector<1x1xf32> to vector<1x32xf32>
    %67 = arith.mulf %66, %65 : vector<1x32xf32>
    %68 = arith.addf %56, %67 : vector<1x32xf32>
    %c3 = arith.constant 3 : index
    %c0_50 = arith.constant 0 : index
    %69 = vector.load %arg3[%c3, %c0_50] : memref<8x32xf32, #tpu.memory_space<vmem>>, vector<1x32xf32>
    %70 = arith.mulf %55, %69 : vector<1x32xf32>
    %cst_51 = arith.constant dense<0.000000e+00> : vector<1xf32>
    %71 = vector.multi_reduction <add>, %70, %cst_51 [1] : vector<1x32xf32> to vector<1xf32>
    %72 = vector.shape_cast %71 : vector<1xf32> to vector<1x1xf32>
    %c7_52 = arith.constant 7 : index
    %c0_53 = arith.constant 0 : index
    %73 = vector.load %arg3[%c7_52, %c0_53] : memref<8x32xf32, #tpu.memory_space<vmem>>, vector<1x1xf32>
    %74 = arith.addf %72, %73 : vector<1x1xf32>
    %cst_54 = arith.constant 0.000000e+00 : f32
    %75 = vector.broadcast %cst_54 : f32 to vector<1x1xf32>
    %76 = arith.maximumf %74, %75 : vector<1x1xf32>
    %c5 = arith.constant 5 : index
    %c0_55 = arith.constant 0 : index
    %77 = vector.load %arg3[%c5, %c0_55] : memref<8x32xf32, #tpu.memory_space<vmem>>, vector<1x32xf32>
    %78 = vector.broadcast %76 : vector<1x1xf32> to vector<1x32xf32>
    %79 = arith.mulf %78, %77 : vector<1x32xf32>
    %80 = arith.addf %68, %79 : vector<1x32xf32>
    %81 = arith.negf %80 : vector<1x32xf32>
    %82 = math.exp %81 : vector<1x32xf32>
    %cst_56 = arith.constant 1.000000e+00 : f32
    %83 = vector.broadcast %cst_56 : f32 to vector<1x32xf32>
    %84 = arith.addf %83, %82 : vector<1x32xf32>
    %85 = arith.divf %83, %84 : vector<1x32xf32>
    %86 = vector.shape_cast %85 : vector<1x32xf32> to vector<1x32xf32>
    %87 = vector.broadcast %86 : vector<1x32xf32> to vector<64x32xf32>
    %88 = arith.mulf %50, %85 : vector<1x32xf32>
    %89 = vector.shape_cast %88 : vector<1x32xf32> to vector<1x32xf32>
    %90 = vector.broadcast %89 : vector<1x32xf32> to vector<64x32xf32>
    %c0_i32_57 = arith.constant 0 : i32
    %c4_i32 = arith.constant 4 : i32
    %91 = arith.addi %c0_i32_57, %c4_i32 : i32
    %c1_i32 = arith.constant 1 : i32
    scf.for %arg7 = %c0_i32_57 to %91 step %c1_i32  : i32 {
      %c64_i32 = arith.constant 64 : i32
      %92 = arith.muli %arg7, %c64_i32 : i32
      %93 = tpu.assume_multiple %92, 64 : i32
      %94 = arith.index_cast %93 : i32 to index
      %c0_59 = arith.constant 0 : index
      %95 = vector.load %arg6[%94, %c0_59] : memref<256x32xf32, #tpu.memory_space<vmem>>, vector<64x32xf32>
      %96 = arith.mulf %95, %87 : vector<64x32xf32>
      %97 = arith.addf %96, %90 : vector<64x32xf32>
      %98 = arith.mulf %97, %97 : vector<64x32xf32>
      %99 = arith.mulf %97, %98 : vector<64x32xf32>
      %cst_60 = arith.constant 4.471500e-02 : f32
      %100 = vector.broadcast %cst_60 : f32 to vector<64x32xf32>
      %101 = arith.mulf %100, %99 : vector<64x32xf32>
      %102 = arith.addf %97, %101 : vector<64x32xf32>
      %cst_61 = arith.constant 0.797884583 : f32
      %103 = vector.broadcast %cst_61 : f32 to vector<64x32xf32>
      %104 = arith.mulf %103, %102 : vector<64x32xf32>
      %105 = math.tanh %104 : vector<64x32xf32>
      %cst_62 = arith.constant 1.000000e+00 : f32
      %106 = vector.broadcast %cst_62 : f32 to vector<64x32xf32>
      %107 = arith.addf %106, %105 : vector<64x32xf32>
      %cst_63 = arith.constant 5.000000e-01 : f32
      %108 = vector.broadcast %cst_63 : f32 to vector<64x32xf32>
      %109 = arith.mulf %108, %107 : vector<64x32xf32>
      %110 = arith.mulf %97, %109 : vector<64x32xf32>
      %111 = arith.truncf %110 : vector<64x32xf32> to vector<64x32xbf16>
      %c0_64 = arith.constant 0 : index
      %112 = arith.index_cast %93 : i32 to index
      %c0_65 = arith.constant 0 : index
      %113 = vector.load %arg4[%c0_64, %112, %c0_65] : memref<1x256x32xbf16, #tpu.memory_space<vmem>>, vector<1x64x32xbf16>
      %114 = vector.shape_cast %113 : vector<1x64x32xbf16> to vector<64x32xbf16>
      %115 = vector.shape_cast %111 : vector<64x32xbf16> to vector<1x64x32xbf16>
      tpu.vector_store %arg4[%c0_64, %112, %c0_65], %115 {strides = array<i32>} : memref<1x256x32xbf16, #tpu.memory_space<vmem>>, vector<1x64x32xbf16>,
    }
    %c4_i32_58 = arith.constant 4 : i32
    return
  }
  func.func @transform_0(%arg0: i32) -> (i32, i32, i32) {
    %c0_i32 = arith.constant 0 : i32
    %c0_i32_0 = arith.constant 0 : i32
    %c0_i32_1 = arith.constant 0 : i32
    return %arg0, %c0_i32, %c0_i32_0 : i32, i32, i32
  }
  func.func @transform_1(%arg0: i32) -> (i32, i32) {
    %c0_i32 = arith.constant 0 : i32
    %c0_i32_0 = arith.constant 0 : i32
    %c0_i32_1 = arith.constant 0 : i32
    return %c0_i32, %c0_i32_0 : i32, i32
  }
  func.func @transform_2(%arg0: i32) -> (i32, i32) {
    %c0_i32 = arith.constant 0 : i32
    %c0_i32_0 = arith.constant 0 : i32
    %c0_i32_1 = arith.constant 0 : i32
    return %c0_i32, %c0_i32_0 : i32, i32
  }
  func.func @transform_3(%arg0: i32) -> (i32, i32, i32) {
    %c0_i32 = arith.constant 0 : i32
    %c0_i32_0 = arith.constant 0 : i32
    %c0_i32_1 = arith.constant 0 : i32
    return %arg0, %c0_i32, %c0_i32_0 : i32, i32, i32
  }
}

</mosaic_0001>

<llo_original>
// kernel: tpu_custom_call.1
$region0: #{tpu_custom_call.1}
  #allocation0 [shape = 'u32[]', space=smem, size = 0x4, offset = 0x4, fixed_abs, tag = 'smem constant byte address 0x4 - core index']
  #allocation1 [shape = 'u32[144,128]{1,0:T(1,128)}', space=vmem, size = 0x12000, scoped, tag = 'internal scratch']
  #allocation2 [shape = 'bf16[256,288]{1,0:T(16,128)(2,1)}', space=vmem, size = 0x30000, scoped, tag = 'scratch operand']
  #allocation3 [shape = 'f32[256,32]{1,0:T(8,128)}', space=vmem, size = 0x20000, scoped, tag = 'scratch operand']
  %s0 = inlined_call_operand.vmem [shape: bf16[2,304,32], index: 0, kind: input, shape index: {}]
  %s1 = inlined_call_operand.vmem [shape: bf16[288,32], index: 1, kind: input, shape index: {}]
  %s2 = inlined_call_operand.vmem [shape: f32[8,32], index: 2, kind: input, shape index: {}]
  %s3 = inlined_call_operand.vmem [shape: bf16[2,256,32], index: 3, kind: output, shape index: {}]
  %s4 = sld [smem:[#allocation0]]
  $region52: #{tpu_custom_call.1} parent=0
    _
  %s6 = ssub.s32 1, %s4
  %s7 = scalar_select 0, %s6, %s4
  loop: start=0, step=1, limit=4
  $region2: #{tpu_custom_call.1} parent=0 // loop_pre_header
    _
  $region3: #{tpu_custom_call.1} parent=0 // loop_header
    %s9 = sphi 0, %s13
    %p10 = scmp.ge.s32.totalorder %s9, 4
    %s19 = sphi 0, %s21
    %s22 = sphi 0, %s19
    %s23 = sphi 0, %s22
    %s39 = sphi 0, %s23
    %s43 = sphi 0, %s43
    %s45 = sphi 0, %s43
    %s46 = sphi 0, %s45
    %s60 = sphi 0, %s46
    %s64 = sphi 0, %s64
    %s66 = sphi 0, %s64
    %s67 = sphi 0, %s66
    %s81 = sphi 0, %s67
    %s87 = sphi 0, %s89
    %s90 = sphi 0, %s87
    %s91 = sphi 0, %s90
    %s107 = sphi 0, %s91
  $region4: #{tpu_custom_call.1} parent=0 // loop_header_branch
    %12 = sbr.rel (%p10) target = $region8
  $region5: #{tpu_custom_call.1} parent=0 // loop_body
    %s14 = ssub.s32 %s9, 1
    %s15 = ssub.s32 %s9, 2
    %s16 = sadd.s32 %s9, 1
    %s17 = ssub.s32 %s9, %s16
    %p18 = scmp.eq.s32.totalorder %s17, 0
    %s20 = sadd.s32 %s19, 1
    %s21 = scalar_select %p18, %s19, %s20
    %p24 = pneg %p18
    %p25 = scmp.eq.s32.totalorder %s9, 1
    %p26 = por %p24, %p25
    %p27 = scmp.ne.s32.totalorder %s19, %s22
    %p28 = scmp.eq.s32.totalorder %s9, 0
    %p29 = por %p27, %p28
    %p30 = scmp.ne.s32.totalorder %s19, %s22
    %p31 = scmp.eq.s32.totalorder %s14, 1
    %p32 = por %p30, %p31
    %p33 = scmp.ne.s32.totalorder %s22, %s23
    %p34 = scmp.eq.s32.totalorder %s14, 0
    %p35 = por %p33, %p34
    %p36 = scmp.ne.s32.totalorder %s22, %s23
    %p37 = scmp.eq.s32.totalorder %s15, 1
    %p38 = por %p36, %p37
    %p40 = scmp.ne.s32.totalorder %s23, %s39
    %p41 = scmp.eq.s32.totalorder %s15, 0
    %p42 = por %p40, %p41
    %s44 = sadd.s32 %s43, 1
    %p47 = scmp.eq.s32.totalorder %s9, 1
    %p48 = scmp.ne.s32.totalorder %s43, %s45
    %p49 = scmp.eq.s32.totalorder %s9, 0
    %p50 = por %p48, %p49
    %p51 = scmp.ne.s32.totalorder %s43, %s45
    %p52 = scmp.eq.s32.totalorder %s14, 1
    %p53 = por %p51, %p52
    %p54 = scmp.ne.s32.totalorder %s45, %s46
    %p55 = scmp.eq.s32.totalorder %s14, 0
    %p56 = por %p54, %p55
    %p57 = scmp.ne.s32.totalorder %s45, %s46
    %p58 = scmp.eq.s32.totalorder %s15, 1
    %p59 = por %p57, %p58
    %p61 = scmp.ne.s32.totalorder %s46, %s60
    %p62 = scmp.eq.s32.totalorder %s15, 0
    %p63 = por %p61, %p62
    %s65 = sadd.s32 %s64, 1
    %p68 = scmp.eq.s32.totalorder %s9, 1
    %p69 = scmp.ne.s32.totalorder %s64, %s66
    %p70 = scmp.eq.s32.totalorder %s9, 0
    %p71 = por %p69, %p70
    %p72 = scmp.ne.s32.totalorder %s64, %s66
    %p73 = scmp.eq.s32.totalorder %s14, 1
    %p74 = por %p72, %p73
    %p75 = scmp.ne.s32.totalorder %s66, %s67
    %p76 = scmp.eq.s32.totalorder %s14, 0
    %p77 = por %p75, %p76
    %p78 = scmp.ne.s32.totalorder %s66, %s67
    %p79 = scmp.eq.s32.totalorder %s15, 1
    %p80 = por %p78, %p79
    %p82 = scmp.ne.s32.totalorder %s67, %s81
    %p83 = scmp.eq.s32.totalorder %s15, 0
    %p84 = por %p82, %p83
    %s85 = ssub.s32 %s9, %s16
    %p86 = scmp.eq.s32.totalorder %s85, 0
    %s88 = sadd.s32 %s87, 1
    %s89 = scalar_select %p86, %s87, %s88
    %p92 = pneg %p86
    %p93 = scmp.eq.s32.totalorder %s9, 1
    %p94 = por %p92, %p93
    %p95 = scmp.ne.s32.totalorder %s87, %s90
    %p96 = scmp.eq.s32.totalorder %s9, 0
    %p97 = por %p95, %p96
    %p98 = scmp.ne.s32.totalorder %s87, %s90
    %p99 = scmp.eq.s32.totalorder %s14, 1
    %p100 = por %p98, %p99
    %p101 = scmp.ne.s32.totalorder %s90, %s91
    %p102 = scmp.eq.s32.totalorder %s14, 0
    %p103 = por %p101, %p102
    %p104 = scmp.ne.s32.totalorder %s90, %s91
    %p105 = scmp.eq.s32.totalorder %s15, 1
    %p106 = por %p104, %p105
    %p108 = scmp.ne.s32.totalorder %s91, %s107
    %p109 = scmp.eq.s32.totalorder %s15, 0
    %p110 = por %p108, %p109
    %p111 = scmp.le.s32.totalorder 1, %s9
    %p112 = scmp.lt.s32.totalorder %s9, 3
    %p113 = pnand %p111, %p112
    %p114 = pneg %p113
    // Predicated region
    $region9: #{tpu_custom_call.1} parent=5 // pred_check
      _
    $region10: #{tpu_custom_call.1} parent=5 // pred_check_branch
      %116 = sbr.rel (%p113) target = $region12
    $region11: #{tpu_custom_call.1} parent=5 // pred_region
      %s117 = ssub.s32 %s9, 1
      // Predicated region
      $region13: #{tpu_custom_call.1} parent=11 // pred_check
        %p118 = pneg %p56
      $region14: #{tpu_custom_call.1} parent=11 // pred_check_branch
        %120 = sbr.rel (%p118) target = $region16
      $region15: #{tpu_custom_call.1} parent=11 // pred_region
        _
      $region16: #{tpu_custom_call.1} parent=11 // pred_fallthru
        _
      // Predicated region
      $region17: #{tpu_custom_call.1} parent=11 // pred_check
        %p121 = pneg %p77
      $region18: #{tpu_custom_call.1} parent=11 // pred_check_branch
        %123 = sbr.rel (%p121) target = $region20
      $region19: #{tpu_custom_call.1} parent=11 // pred_region
        _
      $region20: #{tpu_custom_call.1} parent=11 // pred_fallthru
        _
    $region12: #{tpu_custom_call.1} parent=5 // pred_fallthru
      _
    %p124 = scmp.lt.s32.totalorder %s9, 2
    // Predicated region
    $region21: #{tpu_custom_call.1} parent=5 // pred_check
      %p125 = pneg %p124
    $region22: #{tpu_custom_call.1} parent=5 // pred_check_branch
      %127 = sbr.rel (%p125) target = $region24
    $region23: #{tpu_custom_call.1} parent=5 // pred_region
      // Predicated region
      $region25: #{tpu_custom_call.1} parent=23 // pred_check
        %p128 = pneg %p29
      $region26: #{tpu_custom_call.1} parent=23 // pred_check_branch
        %130 = sbr.rel (%p128) target = $region28
      $region27: #{tpu_custom_call.1} parent=23 // pred_region
        %p131 = scmp.lt.s32.totalorder %s9, 1
        %s132 = scalar_select %p131, %s9, 1
        %s133 = smul.addr %s132, 38
        %s134 = smul.addr %s133, 4
        %s135 = scalar_lea.vmem %s0, %s134
      $region28: #{tpu_custom_call.1} parent=23 // pred_fallthru
        _
    $region24: #{tpu_custom_call.1} parent=5 // pred_fallthru
      _
    %p136 = scmp.le.s32.totalorder 1, %s9
    %p137 = scmp.lt.s32.totalorder %s9, 3
    %p138 = pnand %p136, %p137
    %p139 = pneg %p138
    // Predicated region
    $region29: #{tpu_custom_call.1} parent=5 // pred_check
      _
    $region30: #{tpu_custom_call.1} parent=5 // pred_check_branch
      %141 = sbr.rel (%p138) target = $region32
    $region31: #{tpu_custom_call.1} parent=5 // pred_region
      %s142 = ssub.s32 %s9, 1
      %p143 = scmp.lt.s32.totalorder %s14, 1
      %s144 = scalar_select %p143, %s14, 1
      %s145 = smul.addr %s144, 38
      %s146 = smul.addr %s145, 4
      %s147 = scalar_lea.vmem %s0, %s146
      %p148 = pneg %p35
      %p149 = pneg %p32
      %p150 = pneg %p56
      %p151 = pneg %p53
      %p152 = pneg %p77
      %p153 = pneg %p74
      %p154 = pneg %p103
      %p155 = pneg %p100
      %p156 = scmp.lt.s32.totalorder %s14, 1
      %s157 = scalar_select %p156, %s14, 1
      %s158 = smul.addr %s157, 32
      %s159 = smul.addr %s158, 4
      %s160 = scalar_lea.vmem %s3, %s159
      %p161 = scmp.lt.s32.totalorder %s14, 1
      %s162 = scalar_select %p161, %s14, 1
      %s163 = smul.addr %s162, 38
      %s164 = smul.addr %s163, 4
      %s165 = scalar_lea.vmem %s0, %s164
      %p166 = scmp.lt.s32.totalorder %s14, 1
      %s167 = scalar_select %p166, %s14, 1
      %s168 = smul.addr %s167, 32
      %s169 = smul.addr %s168, 4
      %s170 = scalar_lea.vmem %s3, %s169
      %v174 = vlaneseq
      %v175 = vshrl.u32 %v174, 7
      %v176 = vadd.s32 %v175, 8
      %v177 = vadd.s32 %v175, 16
      %v178 = vadd.s32 %v175, 24
      %v179 = vadd.s32 %v175, 32
      %v180 = vadd.s32 %v175, 40
      %v181 = vadd.s32 %v175, 48
      %v182 = vadd.s32 %v175, 56
      %v183 = vadd.s32 %v175, 64
      %v184 = vadd.s32 %v175, 72
      %v185 = vadd.s32 %v175, 80
      %v186 = vadd.s32 %v175, 88
      %v187 = vadd.s32 %v175, 96
      %v188 = vadd.s32 %v175, 104
      %v189 = vadd.s32 %v175, 112
      %v190 = vadd.s32 %v175, 120
      %v191 = vadd.s32 %v175, 128
      %v192 = vadd.s32 %v175, 136
      %v193 = vadd.s32 %v175, 144
      %v194 = vadd.s32 %v175, 152
      %v195 = vadd.s32 %v175, 160
      %v196 = vadd.s32 %v175, 168
      %v197 = vadd.s32 %v175, 176
      %v198 = vadd.s32 %v175, 184
      %v199 = vadd.s32 %v175, 192
      %v200 = vadd.s32 %v175, 200
      %v201 = vadd.s32 %v175, 208
      %v202 = vadd.s32 %v175, 216
      %v203 = vadd.s32 %v175, 224
      %v204 = vadd.s32 %v175, 232
      %v205 = vadd.s32 %v175, 240
      %v206 = vadd.s32 %v175, 248
      %v207 = vand.u32 %v175, 15
      %v208 = vand.u32 %v176, 15
      %v209 = vand.u32 %v177, 15
      %v210 = vand.u32 %v178, 15
      %v211 = vand.u32 %v179, 15
      %v212 = vand.u32 %v180, 15
      %v213 = vand.u32 %v181, 15
      %v214 = vand.u32 %v182, 15
      %v215 = vand.u32 %v183, 15
      %v216 = vand.u32 %v184, 15
      %v217 = vand.u32 %v185, 15
      %v218 = vand.u32 %v186, 15
      %v219 = vand.u32 %v187, 15
      %v220 = vand.u32 %v188, 15
      %v221 = vand.u32 %v189, 15
      %v222 = vand.u32 %v190, 15
      %v223 = vand.u32 %v191, 15
      %v224 = vand.u32 %v192, 15
      %v225 = vand.u32 %v193, 15
      %v226 = vand.u32 %v194, 15
      %v227 = vand.u32 %v195, 15
      %v228 = vand.u32 %v196, 15
      %v229 = vand.u32 %v197, 15
      %v230 = vand.u32 %v198, 15
      %v231 = vand.u32 %v199, 15
      %v232 = vand.u32 %v200, 15
      %v233 = vand.u32 %v201, 15
      %v234 = vand.u32 %v202, 15
      %v235 = vand.u32 %v203, 15
      %v236 = vand.u32 %v204, 15
      %v237 = vand.u32 %v205, 15
      %v238 = vand.u32 %v206, 15
      %vm239 = vcmp.ne.s32.totalorder %v207, 0
      %vm240 = vcmp.ne.s32.totalorder %v208, 0
      %vm241 = vcmp.ne.s32.totalorder %v209, 0
      %vm242 = vcmp.ne.s32.totalorder %v210, 0
      %vm243 = vcmp.ne.s32.totalorder %v211, 0
      %vm244 = vcmp.ne.s32.totalorder %v212, 0
      %vm245 = vcmp.ne.s32.totalorder %v213, 0
      %vm246 = vcmp.ne.s32.totalorder %v214, 0
      %vm247 = vcmp.ne.s32.totalorder %v215, 0
      %vm248 = vcmp.ne.s32.totalorder %v216, 0
      %vm249 = vcmp.ne.s32.totalorder %v217, 0
      %vm250 = vcmp.ne.s32.totalorder %v218, 0
      %vm251 = vcmp.ne.s32.totalorder %v219, 0
      %vm252 = vcmp.ne.s32.totalorder %v220, 0
      %vm253 = vcmp.ne.s32.totalorder %v221, 0
      %vm254 = vcmp.ne.s32.totalorder %v222, 0
      %vm255 = vcmp.ne.s32.totalorder %v223, 0
      %vm256 = vcmp.ne.s32.totalorder %v224, 0
      %vm257 = vcmp.ne.s32.totalorder %v225, 0
      %vm258 = vcmp.ne.s32.totalorder %v226, 0
      %vm259 = vcmp.ne.s32.totalorder %v227, 0
      %vm260 = vcmp.ne.s32.totalorder %v228, 0
      %vm261 = vcmp.ne.s32.totalorder %v229, 0
      %vm262 = vcmp.ne.s32.totalorder %v230, 0
      %vm263 = vcmp.ne.s32.totalorder %v231, 0
      %vm264 = vcmp.ne.s32.totalorder %v232, 0
      %vm265 = vcmp.ne.s32.totalorder %v233, 0
      %vm266 = vcmp.ne.s32.totalorder %v234, 0
      %vm267 = vcmp.ne.s32.totalorder %v235, 0
      %vm268 = vcmp.ne.s32.totalorder %v236, 0
      %vm269 = vcmp.ne.s32.totalorder %v237, 0
      %vm270 = vcmp.ne.s32.totalorder %v238, 0
      %vm271 = vcmp.ne.s32.totalorder %v207, 15
      %vm272 = vcmp.ne.s32.totalorder %v208, 15
      %vm273 = vcmp.ne.s32.totalorder %v209, 15
      %vm274 = vcmp.ne.s32.totalorder %v210, 15
      %vm275 = vcmp.ne.s32.totalorder %v211, 15
      %vm276 = vcmp.ne.s32.totalorder %v212, 15
      %vm277 = vcmp.ne.s32.totalorder %v213, 15
      %vm278 = vcmp.ne.s32.totalorder %v214, 15
      %vm279 = vcmp.ne.s32.totalorder %v215, 15
      %vm280 = vcmp.ne.s32.totalorder %v216, 15
      %vm281 = vcmp.ne.s32.totalorder %v217, 15
      %vm282 = vcmp.ne.s32.totalorder %v218, 15
      %vm283 = vcmp.ne.s32.totalorder %v219, 15
      %vm284 = vcmp.ne.s32.totalorder %v220, 15
      %vm285 = vcmp.ne.s32.totalorder %v221, 15
      %vm286 = vcmp.ne.s32.totalorder %v222, 15
      %vm287 = vcmp.ne.s32.totalorder %v223, 15
      %vm288 = vcmp.ne.s32.totalorder %v224, 15
      %vm289 = vcmp.ne.s32.totalorder %v225, 15
      %vm290 = vcmp.ne.s32.totalorder %v226, 15
      %vm291 = vcmp.ne.s32.totalorder %v227, 15
      %vm292 = vcmp.ne.s32.totalorder %v228, 15
      %vm293 = vcmp.ne.s32.totalorder %v229, 15
      %vm294 = vcmp.ne.s32.totalorder %v230, 15
      %vm295 = vcmp.ne.s32.totalorder %v231, 15
      %vm296 = vcmp.ne.s32.totalorder %v232, 15
      %vm297 = vcmp.ne.s32.totalorder %v233, 15
      %vm298 = vcmp.ne.s32.totalorder %v234, 15
      %vm299 = vcmp.ne.s32.totalorder %v235, 15
      %vm300 = vcmp.ne.s32.totalorder %v236, 15
      %vm301 = vcmp.ne.s32.totalorder %v237, 15
      %vm302 = vcmp.ne.s32.totalorder %v238, 15
      %v303 = vld [vmem:[%s165] sm:$0x8]
      %v304 = vld [vmem:[%s165 + $0x4] sm:$0xf]
      %v305 = vld [vmem:[%s165 + $0x8] sm:$0xf]
      %v306 = vld [vmem:[%s165 + $0xc] sm:$0xf]
      %v307 = vld [vmem:[%s165 + $0x10] sm:$0xf]
      %v308 = vld [vmem:[%s165 + $0x14] sm:$0xf]
      %v309 = vld [vmem:[%s165 + $0x18] sm:$0xf]
      %v310 = vld [vmem:[%s165 + $0x1c] sm:$0xf]
      %v311 = vld [vmem:[%s165 + $0x20] sm:$0xf]
      %v312 = vld [vmem:[%s165 + $0x24] sm:$0xf]
      %v313 = vld [vmem:[%s165 + $0x28] sm:$0xf]
      %v314 = vld [vmem:[%s165 + $0x2c] sm:$0xf]
      %v315 = vld [vmem:[%s165 + $0x30] sm:$0xf]
      %v316 = vld [vmem:[%s165 + $0x34] sm:$0xf]
      %v317 = vld [vmem:[%s165 + $0x38] sm:$0xf]
      %v318 = vld [vmem:[%s165 + $0x3c] sm:$0xf]
      %v319 = vld [vmem:[%s165 + $0x40] sm:$0xf]
      %v320 = vld [vmem:[%s165 + $0x44] sm:$0xf]
      %v321 = vld [vmem:[%s165 + $0x48] sm:$0xf]
      %v322 = vld [vmem:[%s165 + $0x4c] sm:$0xf]
      %v323 = vld [vmem:[%s165 + $0x50] sm:$0xf]
      %v324 = vld [vmem:[%s165 + $0x54] sm:$0xf]
      %v325 = vld [vmem:[%s165 + $0x58] sm:$0xf]
      %v326 = vld [vmem:[%s165 + $0x5c] sm:$0xf]
      %v327 = vld [vmem:[%s165 + $0x60] sm:$0xf]
      %v328 = vld [vmem:[%s165 + $0x64] sm:$0xf]
      %v329 = vld [vmem:[%s165 + $0x68] sm:$0xf]
      %v330 = vld [vmem:[%s165 + $0x6c] sm:$0xf]
      %v331 = vld [vmem:[%s165 + $0x70] sm:$0xf]
      %v332 = vld [vmem:[%s165 + $0x74] sm:$0xf]
      %v333 = vld [vmem:[%s165 + $0x78] sm:$0xf]
      %v334 = vld [vmem:[%s165 + $0x7c] sm:$0xf]
      %v335 = vld [vmem:[%s165 + $0x80] sm:$0xf]
      %vm336 = vmpackc.low %vm239, %vm239
      %vm337 = vmpackc.low %vm240, %vm240
      %vm338 = vmpackc.low %vm241, %vm241
      %vm339 = vmpackc.low %vm242, %vm242
      %vm340 = vmpackc.low %vm243, %vm243
      %vm341 = vmpackc.low %vm244, %vm244
      %vm342 = vmpackc.low %vm245, %vm245
      %vm343 = vmpackc.low %vm246, %vm246
      %vm344 = vmpackc.low %vm247, %vm247
      %vm345 = vmpackc.low %vm248, %vm248
      %vm346 = vmpackc.low %vm249, %vm249
      %vm347 = vmpackc.low %vm250, %vm250
      %vm348 = vmpackc.low %vm251, %vm251
      %vm349 = vmpackc.low %vm252, %vm252
      %vm350 = vmpackc.low %vm253, %vm253
      %vm351 = vmpackc.low %vm254, %vm254
      %vm352 = vmpackc.low %vm255, %vm255
      %vm353 = vmpackc.low %vm256, %vm256
      %vm354 = vmpackc.low %vm257, %vm257
      %vm355 = vmpackc.low %vm258, %vm258
      %vm356 = vmpackc.low %vm259, %vm259
      %vm357 = vmpackc.low %vm260, %vm260
      %vm358 = vmpackc.low %vm261, %vm261
      %vm359 = vmpackc.low %vm262, %vm262
      %vm360 = vmpackc.low %vm263, %vm263
      %vm361 = vmpackc.low %vm264, %vm264
      %vm362 = vmpackc.low %vm265, %vm265
      %vm363 = vmpackc.low %vm266, %vm266
      %vm364 = vmpackc.low %vm267, %vm267
      %vm365 = vmpackc.low %vm268, %vm268
      %vm366 = vmpackc.low %vm269, %vm269
      %vm367 = vmpackc.low %vm270, %vm270
      %v368 = vsel %vm336, 65537, 0
      %v369 = vsel %vm337, 65537, 0
      %v370 = vsel %vm338, 65537, 0
      %v371 = vsel %vm339, 65537, 0
      %v372 = vsel %vm340, 65537, 0
      %v373 = vsel %vm341, 65537, 0
      %v374 = vsel %vm342, 65537, 0
      %v375 = vsel %vm343, 65537, 0
      %v376 = vsel %vm344, 65537, 0
      %v377 = vsel %vm345, 65537, 0
      %v378 = vsel %vm346, 65537, 0
      %v379 = vsel %vm347, 65537, 0
      %v380 = vsel %vm348, 65537, 0
      %v381 = vsel %vm349, 65537, 0
      %v382 = vsel %vm350, 65537, 0
      %v383 = vsel %vm351, 65537, 0
      %v384 = vsel %vm352, 65537, 0
      %v385 = vsel %vm353, 65537, 0
      %v386 = vsel %vm354, 65537, 0
      %v387 = vsel %vm355, 65537, 0
      %v388 = vsel %vm356, 65537, 0
      %v389 = vsel %vm357, 65537, 0
      %v390 = vsel %vm358, 65537, 0
      %v391 = vsel %vm359, 65537, 0
      %v392 = vsel %vm360, 65537, 0
      %v393 = vsel %vm361, 65537, 0
      %v394 = vsel %vm362, 65537, 0
      %v395 = vsel %vm363, 65537, 0
      %v396 = vsel %vm364, 65537, 0
      %v397 = vsel %vm365, 65537, 0
      %v398 = vsel %vm366, 65537, 0
      %v399 = vsel %vm367, 65537, 0
      %vm400 = vsmask.f32 3328
      %vm401 = vsmask.f32 7440
      %vm402 = vmor %vm400, %vm401
      %v404 = vshll.u32 %v368, 16
      %v406 = vrot.slane %v404, 5
      %v407 = vshrl.u32 %v368, 16
      %v409 = vrot.slane %v407, 4
      %v410 = vor.u32 %v409, %v406
      %v411 = vrot.slane %v410, 4
      %v413 = vshll.u32 %v369, 16
      %v415 = vrot.slane %v413, 5
      %v416 = vsel %vm402, %v411, %v415
      %v417 = vshrl.u32 %v369, 16
      %v419 = vrot.slane %v417, 4
      %v420 = vor.u32 %v419, %v415
      %v421 = vrot.slane %v420, 4
      %v423 = vshll.u32 %v370, 16
      %v425 = vrot.slane %v423, 5
      %v426 = vsel %vm402, %v421, %v425
      %v427 = vshrl.u32 %v370, 16
      %v429 = vrot.slane %v427, 4
      %v430 = vor.u32 %v429, %v425
      %v431 = vrot.slane %v430, 4
      %v433 = vshll.u32 %v371, 16
      %v435 = vrot.slane %v433, 5
      %v436 = vsel %vm402, %v431, %v435
      %v437 = vshrl.u32 %v371, 16
      %v439 = vrot.slane %v437, 4
      %v440 = vor.u32 %v439, %v435
      %v441 = vrot.slane %v440, 4
      %v443 = vshll.u32 %v372, 16
      %v445 = vrot.slane %v443, 5
      %v446 = vsel %vm402, %v441, %v445
      %v447 = vshrl.u32 %v372, 16
      %v449 = vrot.slane %v447, 4
      %v450 = vor.u32 %v449, %v445
      %v451 = vrot.slane %v450, 4
      %v453 = vshll.u32 %v373, 16
      %v455 = vrot.slane %v453, 5
      %v456 = vsel %vm402, %v451, %v455
      %v457 = vshrl.u32 %v373, 16
      %v459 = vrot.slane %v457, 4
      %v460 = vor.u32 %v459, %v455
      %v461 = vrot.slane %v460, 4
      %v463 = vshll.u32 %v374, 16
      %v465 = vrot.slane %v463, 5
      %v466 = vsel %vm402, %v461, %v465
      %v467 = vshrl.u32 %v374, 16
      %v469 = vrot.slane %v467, 4
      %v470 = vor.u32 %v469, %v465
      %v471 = vrot.slane %v470, 4
      %v473 = vshll.u32 %v375, 16
      %v475 = vrot.slane %v473, 5
      %v476 = vsel %vm402, %v471, %v475
      %v477 = vshrl.u32 %v375, 16
      %v479 = vrot.slane %v477, 4
      %v480 = vor.u32 %v479, %v475
      %v481 = vrot.slane %v480, 4
      %v483 = vshll.u32 %v376, 16
      %v485 = vrot.slane %v483, 5
      %v486 = vsel %vm402, %v481, %v485
      %v487 = vshrl.u32 %v376, 16
      %v489 = vrot.slane %v487, 4
      %v490 = vor.u32 %v489, %v485
      %v491 = vrot.slane %v490, 4
      %v493 = vshll.u32 %v377, 16
      %v495 = vrot.slane %v493, 5
      %v496 = vsel %vm402, %v491, %v495
      %v497 = vshrl.u32 %v377, 16
      %v499 = vrot.slane %v497, 4
      %v500 = vor.u32 %v499, %v495
      %v501 = vrot.slane %v500, 4
      %v503 = vshll.u32 %v378, 16
      %v505 = vrot.slane %v503, 5
      %v506 = vsel %vm402, %v501, %v505
      %v507 = vshrl.u32 %v378, 16
      %v509 = vrot.slane %v507, 4
      %v510 = vor.u32 %v509, %v505
      %v511 = vrot.slane %v510, 4
      %v513 = vshll.u32 %v379, 16
      %v515 = vrot.slane %v513, 5
      %v516 = vsel %vm402, %v511, %v515
      %v517 = vshrl.u32 %v379, 16
      %v519 = vrot.slane %v517, 4
      %v520 = vor.u32 %v519, %v515
      %v521 = vrot.slane %v520, 4
      %v523 = vshll.u32 %v380, 16
      %v525 = vrot.slane %v523, 5
      %v526 = vsel %vm402, %v521, %v525
      %v527 = vshrl.u32 %v380, 16
      %v529 = vrot.slane %v527, 4
      %v530 = vor.u32 %v529, %v525
      %v531 = vrot.slane %v530, 4
      %v533 = vshll.u32 %v381, 16
      %v535 = vrot.slane %v533, 5
      %v536 = vsel %vm402, %v531, %v535
      %v537 = vshrl.u32 %v381, 16
      %v539 = vrot.slane %v537, 4
      %v540 = vor.u32 %v539, %v535
      %v541 = vrot.slane %v540, 4
      %v543 = vshll.u32 %v382, 16
      %v545 = vrot.slane %v543, 5
      %v546 = vsel %vm402, %v541, %v545
      %v547 = vshrl.u32 %v382, 16
      %v549 = vrot.slane %v547, 4
      %v550 = vor.u32 %v549, %v545
      %v551 = vrot.slane %v550, 4
      %v553 = vshll.u32 %v383, 16
      %v555 = vrot.slane %v553, 5
      %v556 = vsel %vm402, %v551, %v555
      %v557 = vshrl.u32 %v383, 16
      %v559 = vrot.slane %v557, 4
      %v560 = vor.u32 %v559, %v555
      %v561 = vrot.slane %v560, 4
      %v563 = vshll.u32 %v384, 16
      %v565 = vrot.slane %v563, 5
      %v566 = vsel %vm402, %v561, %v565
      %v567 = vshrl.u32 %v384, 16
      %v569 = vrot.slane %v567, 4
      %v570 = vor.u32 %v569, %v565
      %v571 = vrot.slane %v570, 4
      %v573 = vshll.u32 %v385, 16
      %v575 = vrot.slane %v573, 5
      %v576 = vsel %vm402, %v571, %v575
      %v577 = vshrl.u32 %v385, 16
      %v579 = vrot.slane %v577, 4
      %v580 = vor.u32 %v579, %v575
      %v581 = vrot.slane %v580, 4
      %v583 = vshll.u32 %v386, 16
      %v585 = vrot.slane %v583, 5
      %v586 = vsel %vm402, %v581, %v585
      %v587 = vshrl.u32 %v386, 16
      %v589 = vrot.slane %v587, 4
      %v590 = vor.u32 %v589, %v585
      %v591 = vrot.slane %v590, 4
      %v593 = vshll.u32 %v387, 16
      %v595 = vrot.slane %v593, 5
      %v596 = vsel %vm402, %v591, %v595
      %v597 = vshrl.u32 %v387, 16
      %v599 = vrot.slane %v597, 4
      %v600 = vor.u32 %v599, %v595
      %v601 = vrot.slane %v600, 4
      %v603 = vshll.u32 %v388, 16
      %v605 = vrot.slane %v603, 5
      %v606 = vsel %vm402, %v601, %v605
      %v607 = vshrl.u32 %v388, 16
      %v609 = vrot.slane %v607, 4
      %v610 = vor.u32 %v609, %v605
      %v611 = vrot.slane %v610, 4
      %v613 = vshll.u32 %v389, 16
      %v615 = vrot.slane %v613, 5
      %v616 = vsel %vm402, %v611, %v615
      %v617 = vshrl.u32 %v389, 16
      %v619 = vrot.slane %v617, 4
      %v620 = vor.u32 %v619, %v615
      %v621 = vrot.slane %v620, 4
      %v623 = vshll.u32 %v390, 16
      %v625 = vrot.slane %v623, 5
      %v626 = vsel %vm402, %v621, %v625
      %v627 = vshrl.u32 %v390, 16
      %v629 = vrot.slane %v627, 4
      %v630 = vor.u32 %v629, %v625
      %v631 = vrot.slane %v630, 4
      %v633 = vshll.u32 %v391, 16
      %v635 = vrot.slane %v633, 5
      %v636 = vsel %vm402, %v631, %v635
      %v637 = vshrl.u32 %v391, 16
      %v639 = vrot.slane %v637, 4
      %v640 = vor.u32 %v639, %v635
      %v641 = vrot.slane %v640, 4
      %v643 = vshll.u32 %v392, 16
      %v645 = vrot.slane %v643, 5
      %v646 = vsel %vm402, %v641, %v645
      %v647 = vshrl.u32 %v392, 16
      %v649 = vrot.slane %v647, 4
      %v650 = vor.u32 %v649, %v645
      %v651 = vrot.slane %v650, 4
      %v653 = vshll.u32 %v393, 16
      %v655 = vrot.slane %v653, 5
      %v656 = vsel %vm402, %v651, %v655
      %v657 = vshrl.u32 %v393, 16
      %v659 = vrot.slane %v657, 4
      %v660 = vor.u32 %v659, %v655
      %v661 = vrot.slane %v660, 4
      %v663 = vshll.u32 %v394, 16
      %v665 = vrot.slane %v663, 5
      %v666 = vsel %vm402, %v661, %v665
      %v667 = vshrl.u32 %v394, 16
      %v669 = vrot.slane %v667, 4
      %v670 = vor.u32 %v669, %v665
      %v671 = vrot.slane %v670, 4
      %v673 = vshll.u32 %v395, 16
      %v675 = vrot.slane %v673, 5
      %v676 = vsel %vm402, %v671, %v675
      %v677 = vshrl.u32 %v395, 16
      %v679 = vrot.slane %v677, 4
      %v680 = vor.u32 %v679, %v675
      %v681 = vrot.slane %v680, 4
      %v683 = vshll.u32 %v396, 16
      %v685 = vrot.slane %v683, 5
      %v686 = vsel %vm402, %v681, %v685
      %v687 = vshrl.u32 %v396, 16
      %v689 = vrot.slane %v687, 4
      %v690 = vor.u32 %v689, %v685
      %v691 = vrot.slane %v690, 4
      %v693 = vshll.u32 %v397, 16
      %v695 = vrot.slane %v693, 5
      %v696 = vsel %vm402, %v691, %v695
      %v697 = vshrl.u32 %v397, 16
      %v699 = vrot.slane %v697, 4
      %v700 = vor.u32 %v699, %v695
      %v701 = vrot.slane %v700, 4
      %v703 = vshll.u32 %v398, 16
      %v705 = vrot.slane %v703, 5
      %v706 = vsel %vm402, %v701, %v705
      %v707 = vshrl.u32 %v398, 16
      %v709 = vrot.slane %v707, 4
      %v710 = vor.u32 %v709, %v705
      %v711 = vrot.slane %v710, 4
      %v713 = vshll.u32 %v399, 16
      %v715 = vrot.slane %v713, 5
      %v716 = vsel %vm402, %v711, %v715
      %v717 = vshrl.u32 %v399, 16
      %v719 = vrot.slane %v717, 4
      %v720 = vor.u32 %v719, %v715
      %v721 = vrot.slane %v720, 4
      %vm722 = vcmp.ne.s16.totalorder %v406, 0
      %vm723 = vcmp.ne.s16.totalorder %v416, 0
      %vm724 = vcmp.ne.s16.totalorder %v426, 0
      %vm725 = vcmp.ne.s16.totalorder %v436, 0
      %vm726 = vcmp.ne.s16.totalorder %v446, 0
      %vm727 = vcmp.ne.s16.totalorder %v456, 0
      %vm728 = vcmp.ne.s16.totalorder %v466, 0
      %vm729 = vcmp.ne.s16.totalorder %v476, 0
      %vm730 = vcmp.ne.s16.totalorder %v486, 0
      %vm731 = vcmp.ne.s16.totalorder %v496, 0
      %vm732 = vcmp.ne.s16.totalorder %v506, 0
      %vm733 = vcmp.ne.s16.totalorder %v516, 0
      %vm734 = vcmp.ne.s16.totalorder %v526, 0
      %vm735 = vcmp.ne.s16.totalorder %v536, 0
      %vm736 = vcmp.ne.s16.totalorder %v546, 0
      %vm737 = vcmp.ne.s16.totalorder %v556, 0
      %vm738 = vcmp.ne.s16.totalorder %v566, 0
      %vm739 = vcmp.ne.s16.totalorder %v576, 0
      %vm740 = vcmp.ne.s16.totalorder %v586, 0
      %vm741 = vcmp.ne.s16.totalorder %v596, 0
      %vm742 = vcmp.ne.s16.totalorder %v606, 0
      %vm743 = vcmp.ne.s16.totalorder %v616, 0
      %vm744 = vcmp.ne.s16.totalorder %v626, 0
      %vm745 = vcmp.ne.s16.totalorder %v636, 0
      %vm746 = vcmp.ne.s16.totalorder %v646, 0
      %vm747 = vcmp.ne.s16.totalorder %v656, 0
      %vm748 = vcmp.ne.s16.totalorder %v666, 0
      %vm749 = vcmp.ne.s16.totalorder %v676, 0
      %vm750 = vcmp.ne.s16.totalorder %v686, 0
      %vm751 = vcmp.ne.s16.totalorder %v696, 0
      %vm752 = vcmp.ne.s16.totalorder %v706, 0
      %vm753 = vcmp.ne.s16.totalorder %v716, 0
      %vm754 = vcmp.ne.s16.totalorder %v721, 0
      %v755 = vsel %vm722, %v303, 0
      %v756 = vsel %vm723, %v304, 0
      %v757 = vsel %vm724, %v305, 0
      %v758 = vsel %vm725, %v306, 0
      %v759 = vsel %vm726, %v307, 0
      %v760 = vsel %vm727, %v308, 0
      %v761 = vsel %vm728, %v309, 0
      %v762 = vsel %vm729, %v310, 0
      %v763 = vsel %vm730, %v311, 0
      %v764 = vsel %vm731, %v312, 0
      %v765 = vsel %vm732, %v313, 0
      %v766 = vsel %vm733, %v314, 0
      %v767 = vsel %vm734, %v315, 0
      %v768 = vsel %vm735, %v316, 0
      %v769 = vsel %vm736, %v317, 0
      %v770 = vsel %vm737, %v318, 0
      %v771 = vsel %vm738, %v319, 0
      %v772 = vsel %vm739, %v320, 0
      %v773 = vsel %vm740, %v321, 0
      %v774 = vsel %vm741, %v322, 0
      %v775 = vsel %vm742, %v323, 0
      %v776 = vsel %vm743, %v324, 0
      %v777 = vsel %vm744, %v325, 0
      %v778 = vsel %vm745, %v326, 0
      %v779 = vsel %vm746, %v327, 0
      %v780 = vsel %vm747, %v328, 0
      %v781 = vsel %vm748, %v329, 0
      %v782 = vsel %vm749, %v330, 0
      %v783 = vsel %vm750, %v331, 0
      %v784 = vsel %vm751, %v332, 0
      %v785 = vsel %vm752, %v333, 0
      %v786 = vsel %vm753, %v334, 0
      %v787 = vsel %vm754, %v335, 0
      %v821 = vunpack.c.l.b16 %v755
      %v822 = vunpack.c.l.b16 %v756
      %v823 = vunpack.c.l.b16 %v757
      %v824 = vunpack.c.l.b16 %v758
      %v825 = vunpack.c.l.b16 %v759
      %v826 = vunpack.c.l.b16 %v760
      %v827 = vunpack.c.l.b16 %v761
      %v828 = vunpack.c.l.b16 %v762
      %v829 = vunpack.c.l.b16 %v763
      %v830 = vunpack.c.l.b16 %v764
      %v831 = vunpack.c.l.b16 %v765
      %v832 = vunpack.c.l.b16 %v766
      %v833 = vunpack.c.l.b16 %v767
      %v834 = vunpack.c.l.b16 %v768
      %v835 = vunpack.c.l.b16 %v769
      %v836 = vunpack.c.l.b16 %v770
      %v837 = vunpack.c.l.b16 %v771
      %v838 = vunpack.c.l.b16 %v772
      %v839 = vunpack.c.l.b16 %v773
      %v840 = vunpack.c.l.b16 %v774
      %v841 = vunpack.c.l.b16 %v775
      %v842 = vunpack.c.l.b16 %v776
      %v843 = vunpack.c.l.b16 %v777
      %v844 = vunpack.c.l.b16 %v778
      %v845 = vunpack.c.l.b16 %v779
      %v846 = vunpack.c.l.b16 %v780
      %v847 = vunpack.c.l.b16 %v781
      %v848 = vunpack.c.l.b16 %v782
      %v849 = vunpack.c.l.b16 %v783
      %v850 = vunpack.c.l.b16 %v784
      %v851 = vunpack.c.l.b16 %v785
      %v852 = vunpack.c.l.b16 %v786
      %v853 = vunpack.c.l.b16 %v787
      %v854 = vpack.c.b16 %v822, %v821
      %v855 = vpack.c.b16 %v824, %v823
      %v856 = vpack.c.b16 %v826, %v825
      %v857 = vpack.c.b16 %v828, %v827
      %v858 = vpack.c.b16 %v830, %v829
      %v859 = vpack.c.b16 %v832, %v831
      %v860 = vpack.c.b16 %v834, %v833
      %v861 = vpack.c.b16 %v836, %v835
      %v862 = vpack.c.b16 %v838, %v837
      %v863 = vpack.c.b16 %v840, %v839
      %v864 = vpack.c.b16 %v842, %v841
      %v865 = vpack.c.b16 %v844, %v843
      %v866 = vpack.c.b16 %v846, %v845
      %v867 = vpack.c.b16 %v848, %v847
      %v868 = vpack.c.b16 %v850, %v849
      %v869 = vpack.c.b16 %v852, %v851
      %v870 = vpack.c.b16 %v853, %v853
      %vm871 = vsmask.f32 4352
      %v873 = vshrl.u32 %v854, 16
      %v875 = vrot.slane %v873, 3
      %v876 = vshll.u32 %v854, 16
      %v878 = vrot.slane %v876, 4
      %v879 = vor.u32 %v875, %v878
      %v881 = vshrl.u32 %v855, 16
      %v883 = vrot.slane %v881, 3
      %v884 = vshll.u32 %v855, 16
      %v886 = vrot.slane %v884, 4
      %v887 = vor.u32 %v883, %v886
      %v888 = vsel %vm871, %v879, %v887
      %v890 = vshrl.u32 %v856, 16
      %v892 = vrot.slane %v890, 3
      %v893 = vshll.u32 %v856, 16
      %v895 = vrot.slane %v893, 4
      %v896 = vor.u32 %v892, %v895
      %v897 = vsel %vm871, %v887, %v896
      %v899 = vshrl.u32 %v857, 16
      %v901 = vrot.slane %v899, 3
      %v902 = vshll.u32 %v857, 16
      %v904 = vrot.slane %v902, 4
      %v905 = vor.u32 %v901, %v904
      %v906 = vsel %vm871, %v896, %v905
      %v908 = vshrl.u32 %v858, 16
      %v910 = vrot.slane %v908, 3
      %v911 = vshll.u32 %v858, 16
      %v913 = vrot.slane %v911, 4
      %v914 = vor.u32 %v910, %v913
      %v915 = vsel %vm871, %v905, %v914
      %v917 = vshrl.u32 %v859, 16
      %v919 = vrot.slane %v917, 3
      %v920 = vshll.u32 %v859, 16
      %v922 = vrot.slane %v920, 4
      %v923 = vor.u32 %v919, %v922
      %v924 = vsel %vm871, %v914, %v923
      %v926 = vshrl.u32 %v860, 16
      %v928 = vrot.slane %v926, 3
      %v929 = vshll.u32 %v860, 16
      %v931 = vrot.slane %v929, 4
      %v932 = vor.u32 %v928, %v931
      %v933 = vsel %vm871, %v923, %v932
      %v935 = vshrl.u32 %v861, 16
      %v937 = vrot.slane %v935, 3
      %v938 = vshll.u32 %v861, 16
      %v940 = vrot.slane %v938, 4
      %v941 = vor.u32 %v937, %v940
      %v942 = vsel %vm871, %v932, %v941
      %v944 = vshrl.u32 %v862, 16
      %v946 = vrot.slane %v944, 3
      %v947 = vshll.u32 %v862, 16
      %v949 = vrot.slane %v947, 4
      %v950 = vor.u32 %v946, %v949
      %v951 = vsel %vm871, %v941, %v950
      %v953 = vshrl.u32 %v863, 16
      %v955 = vrot.slane %v953, 3
      %v956 = vshll.u32 %v863, 16
      %v958 = vrot.slane %v956, 4
      %v959 = vor.u32 %v955, %v958
      %v960 = vsel %vm871, %v950, %v959
      %v962 = vshrl.u32 %v864, 16
      %v964 = vrot.slane %v962, 3
      %v965 = vshll.u32 %v864, 16
      %v967 = vrot.slane %v965, 4
      %v968 = vor.u32 %v964, %v967
      %v969 = vsel %vm871, %v959, %v968
      %v971 = vshrl.u32 %v865, 16
      %v973 = vrot.slane %v971, 3
      %v974 = vshll.u32 %v865, 16
      %v976 = vrot.slane %v974, 4
      %v977 = vor.u32 %v973, %v976
      %v978 = vsel %vm871, %v968, %v977
      %v980 = vshrl.u32 %v866, 16
      %v982 = vrot.slane %v980, 3
      %v983 = vshll.u32 %v866, 16
      %v985 = vrot.slane %v983, 4
      %v986 = vor.u32 %v982, %v985
      %v987 = vsel %vm871, %v977, %v986
      %v989 = vshrl.u32 %v867, 16
      %v991 = vrot.slane %v989, 3
      %v992 = vshll.u32 %v867, 16
      %v994 = vrot.slane %v992, 4
      %v995 = vor.u32 %v991, %v994
      %v996 = vsel %vm871, %v986, %v995
      %v998 = vshrl.u32 %v868, 16
      %v1000 = vrot.slane %v998, 3
      %v1001 = vshll.u32 %v868, 16
      %v1003 = vrot.slane %v1001, 4
      %v1004 = vor.u32 %v1000, %v1003
      %v1005 = vsel %vm871, %v995, %v1004
      %v1007 = vshrl.u32 %v869, 16
      %v1009 = vrot.slane %v1007, 3
      %v1010 = vshll.u32 %v869, 16
      %v1012 = vrot.slane %v1010, 4
      %v1013 = vor.u32 %v1009, %v1012
      %v1014 = vsel %vm871, %v1004, %v1013
      %v1016 = vshrl.u32 %v870, 16
      %v1018 = vrot.slane %v1016, 3
      %v1019 = vshll.u32 %v870, 16
      %v1021 = vrot.slane %v1019, 4
      %v1022 = vor.u32 %v1018, %v1021
      %v1023 = vsel %vm871, %v1013, %v1022
      %vm1040 = vcmask 261120
      %1041 = vst.msk [vmem:[#allocation2] sm:$0xff] %vm1040, %v888
      %1042 = vst.msk [vmem:[#allocation2 + $0x18] sm:$0xff] %vm1040, %v897
      %1043 = vst.msk [vmem:[#allocation2 + $0x30] sm:$0xff] %vm1040, %v906
      %1044 = vst.msk [vmem:[#allocation2 + $0x48] sm:$0xff] %vm1040, %v915
      %1045 = vst.msk [vmem:[#allocation2 + $0x60] sm:$0xff] %vm1040, %v924
      %1046 = vst.msk [vmem:[#allocation2 + $0x78] sm:$0xff] %vm1040, %v933
      %1047 = vst.msk [vmem:[#allocation2 + $0x90] sm:$0xff] %vm1040, %v942
      %1048 = vst.msk [vmem:[#allocation2 + $0xa8] sm:$0xff] %vm1040, %v951
      %1049 = vst.msk [vmem:[#allocation2 + $0xc0] sm:$0xff] %vm1040, %v960
      %1050 = vst.msk [vmem:[#allocation2 + $0xd8] sm:$0xff] %vm1040, %v969
      %1051 = vst.msk [vmem:[#allocation2 + $0xf0] sm:$0xff] %vm1040, %v978
      %1052 = vst.msk [vmem:[#allocation2 + $0x108] sm:$0xff] %vm1040, %v987
      %1053 = vst.msk [vmem:[#allocation2 + $0x120] sm:$0xff] %vm1040, %v996
      %1054 = vst.msk [vmem:[#allocation2 + $0x138] sm:$0xff] %vm1040, %v1005
      %1055 = vst.msk [vmem:[#allocation2 + $0x150] sm:$0xff] %vm1040, %v1014
      %1056 = vst.msk [vmem:[#allocation2 + $0x168] sm:$0xff] %vm1040, %v1023
      %v1057 = vld [vmem:[%s165 + $0x4] sm:$0xf]
      %v1058 = vld [vmem:[%s165 + $0x8] sm:$0xf]
      %v1059 = vld [vmem:[%s165 + $0xc] sm:$0xf]
      %v1060 = vld [vmem:[%s165 + $0x10] sm:$0xf]
      %v1061 = vld [vmem:[%s165 + $0x14] sm:$0xf]
      %v1062 = vld [vmem:[%s165 + $0x18] sm:$0xf]
      %v1063 = vld [vmem:[%s165 + $0x1c] sm:$0xf]
      %v1064 = vld [vmem:[%s165 + $0x20] sm:$0xf]
      %v1065 = vld [vmem:[%s165 + $0x24] sm:$0xf]
      %v1066 = vld [vmem:[%s165 + $0x28] sm:$0xf]
      %v1067 = vld [vmem:[%s165 + $0x2c] sm:$0xf]
      %v1068 = vld [vmem:[%s165 + $0x30] sm:$0xf]
      %v1069 = vld [vmem:[%s165 + $0x34] sm:$0xf]
      %v1070 = vld [vmem:[%s165 + $0x38] sm:$0xf]
      %v1071 = vld [vmem:[%s165 + $0x3c] sm:$0xf]
      %v1072 = vld [vmem:[%s165 + $0x40] sm:$0xf]
      %v1073 = vld [vmem:[%s165 + $0x44] sm:$0xf]
      %v1074 = vld [vmem:[%s165 + $0x48] sm:$0xf]
      %v1075 = vld [vmem:[%s165 + $0x4c] sm:$0xf]
      %v1076 = vld [vmem:[%s165 + $0x50] sm:$0xf]
      %v1077 = vld [vmem:[%s165 + $0x54] sm:$0xf]
      %v1078 = vld [vmem:[%s165 + $0x58] sm:$0xf]
      %v1079 = vld [vmem:[%s165 + $0x5c] sm:$0xf]
      %v1080 = vld [vmem:[%s165 + $0x60] sm:$0xf]
      %v1081 = vld [vmem:[%s165 + $0x64] sm:$0xf]
      %v1082 = vld [vmem:[%s165 + $0x68] sm:$0xf]
      %v1083 = vld [vmem:[%s165 + $0x6c] sm:$0xf]
      %v1084 = vld [vmem:[%s165 + $0x70] sm:$0xf]
      %v1085 = vld [vmem:[%s165 + $0x74] sm:$0xf]
      %v1086 = vld [vmem:[%s165 + $0x78] sm:$0xf]
      %v1087 = vld [vmem:[%s165 + $0x7c] sm:$0xf]
      %v1088 = vld [vmem:[%s165 + $0x80] sm:$0xf]
      %v1121 = vunpack.c.l.b16 %v1057
      %v1122 = vunpack.c.l.b16 %v1058
      %v1123 = vunpack.c.l.b16 %v1059
      %v1124 = vunpack.c.l.b16 %v1060
      %v1125 = vunpack.c.l.b16 %v1061
      %v1126 = vunpack.c.l.b16 %v1062
      %v1127 = vunpack.c.l.b16 %v1063
      %v1128 = vunpack.c.l.b16 %v1064
      %v1129 = vunpack.c.l.b16 %v1065
      %v1130 = vunpack.c.l.b16 %v1066
      %v1131 = vunpack.c.l.b16 %v1067
      %v1132 = vunpack.c.l.b16 %v1068
      %v1133 = vunpack.c.l.b16 %v1069
      %v1134 = vunpack.c.l.b16 %v1070
      %v1135 = vunpack.c.l.b16 %v1071
      %v1136 = vunpack.c.l.b16 %v1072
      %v1137 = vunpack.c.l.b16 %v1073
      %v1138 = vunpack.c.l.b16 %v1074
      %v1139 = vunpack.c.l.b16 %v1075
      %v1140 = vunpack.c.l.b16 %v1076
      %v1141 = vunpack.c.l.b16 %v1077
      %v1142 = vunpack.c.l.b16 %v1078
      %v1143 = vunpack.c.l.b16 %v1079
      %v1144 = vunpack.c.l.b16 %v1080
      %v1145 = vunpack.c.l.b16 %v1081
      %v1146 = vunpack.c.l.b16 %v1082
      %v1147 = vunpack.c.l.b16 %v1083
      %v1148 = vunpack.c.l.b16 %v1084
      %v1149 = vunpack.c.l.b16 %v1085
      %v1150 = vunpack.c.l.b16 %v1086
      %v1151 = vunpack.c.l.b16 %v1087
      %v1152 = vunpack.c.l.b16 %v1088
      %v1153 = vpack.c.b16 %v1122, %v1121
      %v1154 = vpack.c.b16 %v1124, %v1123
      %v1155 = vpack.c.b16 %v1126, %v1125
      %v1156 = vpack.c.b16 %v1128, %v1127
      %v1157 = vpack.c.b16 %v1130, %v1129
      %v1158 = vpack.c.b16 %v1132, %v1131
      %v1159 = vpack.c.b16 %v1134, %v1133
      %v1160 = vpack.c.b16 %v1136, %v1135
      %v1161 = vpack.c.b16 %v1138, %v1137
      %v1162 = vpack.c.b16 %v1140, %v1139
      %v1163 = vpack.c.b16 %v1142, %v1141
      %v1164 = vpack.c.b16 %v1144, %v1143
      %v1165 = vpack.c.b16 %v1146, %v1145
      %v1166 = vpack.c.b16 %v1148, %v1147
      %v1167 = vpack.c.b16 %v1150, %v1149
      %v1168 = vpack.c.b16 %v1152, %v1151
      %1169 = vrot.lane.b32.xlu0 %v1153, 32
      %v1170 = vpop.permute.xlu0 %1169
      %1171 = vrot.lane.b32.xlu0 %v1154, 32
      %v1172 = vpop.permute.xlu0 %1171
      %1173 = vrot.lane.b32.xlu0 %v1155, 32
      %v1174 = vpop.permute.xlu0 %1173
      %1175 = vrot.lane.b32.xlu0 %v1156, 32
      %v1176 = vpop.permute.xlu0 %1175
      %1177 = vrot.lane.b32.xlu0 %v1157, 32
      %v1178 = vpop.permute.xlu0 %1177
      %1179 = vrot.lane.b32.xlu0 %v1158, 32
      %v1180 = vpop.permute.xlu0 %1179
      %1181 = vrot.lane.b32.xlu0 %v1159, 32
      %v1182 = vpop.permute.xlu0 %1181
      %1183 = vrot.lane.b32.xlu0 %v1160, 32
      %v1184 = vpop.permute.xlu0 %1183
      %1185 = vrot.lane.b32.xlu0 %v1161, 32
      %v1186 = vpop.permute.xlu0 %1185
      %1187 = vrot.lane.b32.xlu0 %v1162, 32
      %v1188 = vpop.permute.xlu0 %1187
      %1189 = vrot.lane.b32.xlu0 %v1163, 32
      %v1190 = vpop.permute.xlu0 %1189
      %1191 = vrot.lane.b32.xlu0 %v1164, 32
      %v1192 = vpop.permute.xlu0 %1191
      %1193 = vrot.lane.b32.xlu0 %v1165, 32
      %v1194 = vpop.permute.xlu0 %1193
      %1195 = vrot.lane.b32.xlu0 %v1166, 32
      %v1196 = vpop.permute.xlu0 %1195
      %1197 = vrot.lane.b32.xlu0 %v1167, 32
      %v1198 = vpop.permute.xlu0 %1197
      %1199 = vrot.lane.b32.xlu0 %v1168, 32
      %v1200 = vpop.permute.xlu0 %1199
      %vm1217 = vcmask 523520
      %1218 = vst.msk [vmem:[#allocation2] sm:$0xff] %vm1217, %v1170
      %1219 = vst.msk [vmem:[#allocation2 + $0x18] sm:$0xff] %vm1217, %v1172
      %1220 = vst.msk [vmem:[#allocation2 + $0x30] sm:$0xff] %vm1217, %v1174
      %1221 = vst.msk [vmem:[#allocation2 + $0x48] sm:$0xff] %vm1217, %v1176
      %1222 = vst.msk [vmem:[#allocation2 + $0x60] sm:$0xff] %vm1217, %v1178
      %1223 = vst.msk [vmem:[#allocation2 + $0x78] sm:$0xff] %vm1217, %v1180
      %1224 = vst.msk [vmem:[#allocation2 + $0x90] sm:$0xff] %vm1217, %v1182
      %1225 = vst.msk [vmem:[#allocation2 + $0xa8] sm:$0xff] %vm1217, %v1184
      %1226 = vst.msk [vmem:[#allocation2 + $0xc0] sm:$0xff] %vm1217, %v1186
      %1227 = vst.msk [vmem:[#allocation2 + $0xd8] sm:$0xff] %vm1217, %v1188
      %1228 = vst.msk [vmem:[#allocation2 + $0xf0] sm:$0xff] %vm1217, %v1190
      %1229 = vst.msk [vmem:[#allocation2 + $0x108] sm:$0xff] %vm1217, %v1192
      %1230 = vst.msk [vmem:[#allocation2 + $0x120] sm:$0xff] %vm1217, %v1194
      %1231 = vst.msk [vmem:[#allocation2 + $0x138] sm:$0xff] %vm1217, %v1196
      %1232 = vst.msk [vmem:[#allocation2 + $0x150] sm:$0xff] %vm1217, %v1198
      %1233 = vst.msk [vmem:[#allocation2 + $0x168] sm:$0xff] %vm1217, %v1200
      %v1234 = vld [vmem:[%s165 + $0x4] sm:$0xf]
      %v1235 = vld [vmem:[%s165 + $0x8] sm:$0xf]
      %v1236 = vld [vmem:[%s165 + $0xc] sm:$0xf]
      %v1237 = vld [vmem:[%s165 + $0x10] sm:$0xf]
      %v1238 = vld [vmem:[%s165 + $0x14] sm:$0xf]
      %v1239 = vld [vmem:[%s165 + $0x18] sm:$0xf]
      %v1240 = vld [vmem:[%s165 + $0x1c] sm:$0xf]
      %v1241 = vld [vmem:[%s165 + $0x20] sm:$0xf]
      %v1242 = vld [vmem:[%s165 + $0x24] sm:$0xf]
      %v1243 = vld [vmem:[%s165 + $0x28] sm:$0xf]
      %v1244 = vld [vmem:[%s165 + $0x2c] sm:$0xf]
      %v1245 = vld [vmem:[%s165 + $0x30] sm:$0xf]
      %v1246 = vld [vmem:[%s165 + $0x34] sm:$0xf]
      %v1247 = vld [vmem:[%s165 + $0x38] sm:$0xf]
      %v1248 = vld [vmem:[%s165 + $0x3c] sm:$0xf]
      %v1249 = vld [vmem:[%s165 + $0x40] sm:$0xf]
      %v1250 = vld [vmem:[%s165 + $0x44] sm:$0xf]
      %v1251 = vld [vmem:[%s165 + $0x48] sm:$0xf]
      %v1252 = vld [vmem:[%s165 + $0x4c] sm:$0xf]
      %v1253 = vld [vmem:[%s165 + $0x50] sm:$0xf]
      %v1254 = vld [vmem:[%s165 + $0x54] sm:$0xf]
      %v1255 = vld [vmem:[%s165 + $0x58] sm:$0xf]
      %v1256 = vld [vmem:[%s165 + $0x5c] sm:$0xf]
      %v1257 = vld [vmem:[%s165 + $0x60] sm:$0xf]
      %v1258 = vld [vmem:[%s165 + $0x64] sm:$0xf]
      %v1259 = vld [vmem:[%s165 + $0x68] sm:$0xf]
      %v1260 = vld [vmem:[%s165 + $0x6c] sm:$0xf]
      %v1261 = vld [vmem:[%s165 + $0x70] sm:$0xf]
      %v1262 = vld [vmem:[%s165 + $0x74] sm:$0xf]
      %v1263 = vld [vmem:[%s165 + $0x78] sm:$0xf]
      %v1264 = vld [vmem:[%s165 + $0x7c] sm:$0xf]
      %v1265 = vld [vmem:[%s165 + $0x80] sm:$0xf]
      %v1266 = vld [vmem:[%s165 + $0x84] sm:$0x1]
      %vm1267 = vmpackc.low %vm271, %vm271
      %vm1268 = vmpackc.low %vm272, %vm272
      %vm1269 = vmpackc.low %vm273, %vm273
      %vm1270 = vmpackc.low %vm274, %vm274
      %vm1271 = vmpackc.low %vm275, %vm275
      %vm1272 = vmpackc.low %vm276, %vm276
      %vm1273 = vmpackc.low %vm277, %vm277
      %vm1274 = vmpackc.low %vm278, %vm278
      %vm1275 = vmpackc.low %vm279, %vm279
      %vm1276 = vmpackc.low %vm280, %vm280
      %vm1277 = vmpackc.low %vm281, %vm281
      %vm1278 = vmpackc.low %vm282, %vm282
      %vm1279 = vmpackc.low %vm283, %vm283
      %vm1280 = vmpackc.low %vm284, %vm284
      %vm1281 = vmpackc.low %vm285, %vm285
      %vm1282 = vmpackc.low %vm286, %vm286
      %vm1283 = vmpackc.low %vm287, %vm287
      %vm1284 = vmpackc.low %vm288, %vm288
      %vm1285 = vmpackc.low %vm289, %vm289
      %vm1286 = vmpackc.low %vm290, %vm290
      %vm1287 = vmpackc.low %vm291, %vm291
      %vm1288 = vmpackc.low %vm292, %vm292
      %vm1289 = vmpackc.low %vm293, %vm293
      %vm1290 = vmpackc.low %vm294, %vm294
      %vm1291 = vmpackc.low %vm295, %vm295
      %vm1292 = vmpackc.low %vm296, %vm296
      %vm1293 = vmpackc.low %vm297, %vm297
      %vm1294 = vmpackc.low %vm298, %vm298
      %vm1295 = vmpackc.low %vm299, %vm299
      %vm1296 = vmpackc.low %vm300, %vm300
      %vm1297 = vmpackc.low %vm301, %vm301
      %vm1298 = vmpackc.low %vm302, %vm302
      %v1299 = vsel %vm1267, 65537, 0
      %v1300 = vsel %vm1268, 65537, 0
      %v1301 = vsel %vm1269, 65537, 0
      %v1302 = vsel %vm1270, 65537, 0
      %v1303 = vsel %vm1271, 65537, 0
      %v1304 = vsel %vm1272, 65537, 0
      %v1305 = vsel %vm1273, 65537, 0
      %v1306 = vsel %vm1274, 65537, 0
      %v1307 = vsel %vm1275, 65537, 0
      %v1308 = vsel %vm1276, 65537, 0
      %v1309 = vsel %vm1277, 65537, 0
      %v1310 = vsel %vm1278, 65537, 0
      %v1311 = vsel %vm1279, 65537, 0
      %v1312 = vsel %vm1280, 65537, 0
      %v1313 = vsel %vm1281, 65537, 0
      %v1314 = vsel %vm1282, 65537, 0
      %v1315 = vsel %vm1283, 65537, 0
      %v1316 = vsel %vm1284, 65537, 0
      %v1317 = vsel %vm1285, 65537, 0
      %v1318 = vsel %vm1286, 65537, 0
      %v1319 = vsel %vm1287, 65537, 0
      %v1320 = vsel %vm1288, 65537, 0
      %v1321 = vsel %vm1289, 65537, 0
      %v1322 = vsel %vm1290, 65537, 0
      %v1323 = vsel %vm1291, 65537, 0
      %v1324 = vsel %vm1292, 65537, 0
      %v1325 = vsel %vm1293, 65537, 0
      %v1326 = vsel %vm1294, 65537, 0
      %v1327 = vsel %vm1295, 65537, 0
      %v1328 = vsel %vm1296, 65537, 0
      %v1329 = vsel %vm1297, 65537, 0
      %v1330 = vsel %vm1298, 65537, 0
      %vm1331 = vsmask.f32 256
      %vm1332 = vsmask.f32 4368
      %vm1333 = vmor %vm1331, %vm1332
      %v1335 = vshrl.u32 %v1299, 16
      %v1337 = vrot.slane %v1335, 7
      %v1338 = vshll.u32 %v1299, 16
      %v1340 = vor.u32 %v1337, %v1338
      %v1341 = vrot.slane %v1337, 4
      %v1343 = vshrl.u32 %v1300, 16
      %v1345 = vrot.slane %v1343, 7
      %v1346 = vshll.u32 %v1300, 16
      %v1348 = vor.u32 %v1345, %v1346
      %v1349 = vsel %vm1333, %v1341, %v1348
      %v1350 = vrot.slane %v1345, 4
      %v1352 = vshrl.u32 %v1301, 16
      %v1354 = vrot.slane %v1352, 7
      %v1355 = vshll.u32 %v1301, 16
      %v1357 = vor.u32 %v1354, %v1355
      %v1358 = vsel %vm1333, %v1350, %v1357
      %v1359 = vrot.slane %v1354, 4
      %v1361 = vshrl.u32 %v1302, 16
      %v1363 = vrot.slane %v1361, 7
      %v1364 = vshll.u32 %v1302, 16
      %v1366 = vor.u32 %v1363, %v1364
      %v1367 = vsel %vm1333, %v1359, %v1366
      %v1368 = vrot.slane %v1363, 4
      %v1370 = vshrl.u32 %v1303, 16
      %v1372 = vrot.slane %v1370, 7
      %v1373 = vshll.u32 %v1303, 16
      %v1375 = vor.u32 %v1372, %v1373
      %v1376 = vsel %vm1333, %v1368, %v1375
      %v1377 = vrot.slane %v1372, 4
      %v1379 = vshrl.u32 %v1304, 16
      %v1381 = vrot.slane %v1379, 7
      %v1382 = vshll.u32 %v1304, 16
      %v1384 = vor.u32 %v1381, %v1382
      %v1385 = vsel %vm1333, %v1377, %v1384
      %v1386 = vrot.slane %v1381, 4
      %v1388 = vshrl.u32 %v1305, 16
      %v1390 = vrot.slane %v1388, 7
      %v1391 = vshll.u32 %v1305, 16
      %v1393 = vor.u32 %v1390, %v1391
      %v1394 = vsel %vm1333, %v1386, %v1393
      %v1395 = vrot.slane %v1390, 4
      %v1397 = vshrl.u32 %v1306, 16
      %v1399 = vrot.slane %v1397, 7
      %v1400 = vshll.u32 %v1306, 16
      %v1402 = vor.u32 %v1399, %v1400
      %v1403 = vsel %vm1333, %v1395, %v1402
      %v1404 = vrot.slane %v1399, 4
      %v1406 = vshrl.u32 %v1307, 16
      %v1408 = vrot.slane %v1406, 7
      %v1409 = vshll.u32 %v1307, 16
      %v1411 = vor.u32 %v1408, %v1409
      %v1412 = vsel %vm1333, %v1404, %v1411
      %v1413 = vrot.slane %v1408, 4
      %v1415 = vshrl.u32 %v1308, 16
      %v1417 = vrot.slane %v1415, 7
      %v1418 = vshll.u32 %v1308, 16
      %v1420 = vor.u32 %v1417, %v1418
      %v1421 = vsel %vm1333, %v1413, %v1420
      %v1422 = vrot.slane %v1417, 4
      %v1424 = vshrl.u32 %v1309, 16
      %v1426 = vrot.slane %v1424, 7
      %v1427 = vshll.u32 %v1309, 16
      %v1429 = vor.u32 %v1426, %v1427
      %v1430 = vsel %vm1333, %v1422, %v1429
      %v1431 = vrot.slane %v1426, 4
      %v1433 = vshrl.u32 %v1310, 16
      %v1435 = vrot.slane %v1433, 7
      %v1436 = vshll.u32 %v1310, 16
      %v1438 = vor.u32 %v1435, %v1436
      %v1439 = vsel %vm1333, %v1431, %v1438
      %v1440 = vrot.slane %v1435, 4
      %v1442 = vshrl.u32 %v1311, 16
      %v1444 = vrot.slane %v1442, 7
      %v1445 = vshll.u32 %v1311, 16
      %v1447 = vor.u32 %v1444, %v1445
      %v1448 = vsel %vm1333, %v1440, %v1447
      %v1449 = vrot.slane %v1444, 4
      %v1451 = vshrl.u32 %v1312, 16
      %v1453 = vrot.slane %v1451, 7
      %v1454 = vshll.u32 %v1312, 16
      %v1456 = vor.u32 %v1453, %v1454
      %v1457 = vsel %vm1333, %v1449, %v1456
      %v1458 = vrot.slane %v1453, 4
      %v1460 = vshrl.u32 %v1313, 16
      %v1462 = vrot.slane %v1460, 7
      %v1463 = vshll.u32 %v1313, 16
      %v1465 = vor.u32 %v1462, %v1463
      %v1466 = vsel %vm1333, %v1458, %v1465
      %v1467 = vrot.slane %v1462, 4
      %v1469 = vshrl.u32 %v1314, 16
      %v1471 = vrot.slane %v1469, 7
      %v1472 = vshll.u32 %v1314, 16
      %v1474 = vor.u32 %v1471, %v1472
      %v1475 = vsel %vm1333, %v1467, %v1474
      %v1476 = vrot.slane %v1471, 4
      %v1478 = vshrl.u32 %v1315, 16
      %v1480 = vrot.slane %v1478, 7
      %v1481 = vshll.u32 %v1315, 16
      %v1483 = vor.u32 %v1480, %v1481
      %v1484 = vsel %vm1333, %v1476, %v1483
      %v1485 = vrot.slane %v1480, 4
      %v1487 = vshrl.u32 %v1316, 16
      %v1489 = vrot.slane %v1487, 7
      %v1490 = vshll.u32 %v1316, 16
      %v1492 = vor.u32 %v1489, %v1490
      %v1493 = vsel %vm1333, %v1485, %v1492
      %v1494 = vrot.slane %v1489, 4
      %v1496 = vshrl.u32 %v1317, 16
      %v1498 = vrot.slane %v1496, 7
      %v1499 = vshll.u32 %v1317, 16
      %v1501 = vor.u32 %v1498, %v1499
      %v1502 = vsel %vm1333, %v1494, %v1501
      %v1503 = vrot.slane %v1498, 4
      %v1505 = vshrl.u32 %v1318, 16
      %v1507 = vrot.slane %v1505, 7
      %v1508 = vshll.u32 %v1318, 16
      %v1510 = vor.u32 %v1507, %v1508
      %v1511 = vsel %vm1333, %v1503, %v1510
      %v1512 = vrot.slane %v1507, 4
      %v1514 = vshrl.u32 %v1319, 16
      %v1516 = vrot.slane %v1514, 7
      %v1517 = vshll.u32 %v1319, 16
      %v1519 = vor.u32 %v1516, %v1517
      %v1520 = vsel %vm1333, %v1512, %v1519
      %v1521 = vrot.slane %v1516, 4
      %v1523 = vshrl.u32 %v1320, 16
      %v1525 = vrot.slane %v1523, 7
      %v1526 = vshll.u32 %v1320, 16
      %v1528 = vor.u32 %v1525, %v1526
      %v1529 = vsel %vm1333, %v1521, %v1528
      %v1530 = vrot.slane %v1525, 4
      %v1532 = vshrl.u32 %v1321, 16
      %v1534 = vrot.slane %v1532, 7
      %v1535 = vshll.u32 %v1321, 16
      %v1537 = vor.u32 %v1534, %v1535
      %v1538 = vsel %vm1333, %v1530, %v1537
      %v1539 = vrot.slane %v1534, 4
      %v1541 = vshrl.u32 %v1322, 16
      %v1543 = vrot.slane %v1541, 7
      %v1544 = vshll.u32 %v1322, 16
      %v1546 = vor.u32 %v1543, %v1544
      %v1547 = vsel %vm1333, %v1539, %v1546
      %v1548 = vrot.slane %v1543, 4
      %v1550 = vshrl.u32 %v1323, 16
      %v1552 = vrot.slane %v1550, 7
      %v1553 = vshll.u32 %v1323, 16
      %v1555 = vor.u32 %v1552, %v1553
      %v1556 = vsel %vm1333, %v1548, %v1555
      %v1557 = vrot.slane %v1552, 4
      %v1559 = vshrl.u32 %v1324, 16
      %v1561 = vrot.slane %v1559, 7
      %v1562 = vshll.u32 %v1324, 16
      %v1564 = vor.u32 %v1561, %v1562
      %v1565 = vsel %vm1333, %v1557, %v1564
      %v1566 = vrot.slane %v1561, 4
      %v1568 = vshrl.u32 %v1325, 16
      %v1570 = vrot.slane %v1568, 7
      %v1571 = vshll.u32 %v1325, 16
      %v1573 = vor.u32 %v1570, %v1571
      %v1574 = vsel %vm1333, %v1566, %v1573
      %v1575 = vrot.slane %v1570, 4
      %v1577 = vshrl.u32 %v1326, 16
      %v1579 = vrot.slane %v1577, 7
      %v1580 = vshll.u32 %v1326, 16
      %v1582 = vor.u32 %v1579, %v1580
      %v1583 = vsel %vm1333, %v1575, %v1582
      %v1584 = vrot.slane %v1579, 4
      %v1586 = vshrl.u32 %v1327, 16
      %v1588 = vrot.slane %v1586, 7
      %v1589 = vshll.u32 %v1327, 16
      %v1591 = vor.u32 %v1588, %v1589
      %v1592 = vsel %vm1333, %v1584, %v1591
      %v1593 = vrot.slane %v1588, 4
      %v1595 = vshrl.u32 %v1328, 16
      %v1597 = vrot.slane %v1595, 7
      %v1598 = vshll.u32 %v1328, 16
      %v1600 = vor.u32 %v1597, %v1598
      %v1601 = vsel %vm1333, %v1593, %v1600
      %v1602 = vrot.slane %v1597, 4
      %v1604 = vshrl.u32 %v1329, 16
      %v1606 = vrot.slane %v1604, 7
      %v1607 = vshll.u32 %v1329, 16
      %v1609 = vor.u32 %v1606, %v1607
      %v1610 = vsel %vm1333, %v1602, %v1609
      %v1611 = vrot.slane %v1606, 4
      %v1613 = vshrl.u32 %v1330, 16
      %v1615 = vrot.slane %v1613, 7
      %v1616 = vshll.u32 %v1330, 16
      %v1618 = vor.u32 %v1615, %v1616
      %v1619 = vsel %vm1333, %v1611, %v1618
      %v1620 = vrot.slane %v1615, 4
      %vm1621 = vcmp.ne.s16.totalorder %v1340, 0
      %vm1622 = vcmp.ne.s16.totalorder %v1349, 0
      %vm1623 = vcmp.ne.s16.totalorder %v1358, 0
      %vm1624 = vcmp.ne.s16.totalorder %v1367, 0
      %vm1625 = vcmp.ne.s16.totalorder %v1376, 0
      %vm1626 = vcmp.ne.s16.totalorder %v1385, 0
      %vm1627 = vcmp.ne.s16.totalorder %v1394, 0
      %vm1628 = vcmp.ne.s16.totalorder %v1403, 0
      %vm1629 = vcmp.ne.s16.totalorder %v1412, 0
      %vm1630 = vcmp.ne.s16.totalorder %v1421, 0
      %vm1631 = vcmp.ne.s16.totalorder %v1430, 0
      %vm1632 = vcmp.ne.s16.totalorder %v1439, 0
      %vm1633 = vcmp.ne.s16.totalorder %v1448, 0
      %vm1634 = vcmp.ne.s16.totalorder %v1457, 0
      %vm1635 = vcmp.ne.s16.totalorder %v1466, 0
      %vm1636 = vcmp.ne.s16.totalorder %v1475, 0
      %vm1637 = vcmp.ne.s16.totalorder %v1484, 0
      %vm1638 = vcmp.ne.s16.totalorder %v1493, 0
      %vm1639 = vcmp.ne.s16.totalorder %v1502, 0
      %vm1640 = vcmp.ne.s16.totalorder %v1511, 0
      %vm1641 = vcmp.ne.s16.totalorder %v1520, 0
      %vm1642 = vcmp.ne.s16.totalorder %v1529, 0
      %vm1643 = vcmp.ne.s16.totalorder %v1538, 0
      %vm1644 = vcmp.ne.s16.totalorder %v1547, 0
      %vm1645 = vcmp.ne.s16.totalorder %v1556, 0
      %vm1646 = vcmp.ne.s16.totalorder %v1565, 0
      %vm1647 = vcmp.ne.s16.totalorder %v1574, 0
      %vm1648 = vcmp.ne.s16.totalorder %v1583, 0
      %vm1649 = vcmp.ne.s16.totalorder %v1592, 0
      %vm1650 = vcmp.ne.s16.totalorder %v1601, 0
      %vm1651 = vcmp.ne.s16.totalorder %v1610, 0
      %vm1652 = vcmp.ne.s16.totalorder %v1619, 0
      %vm1653 = vcmp.ne.s16.totalorder %v1620, 0
      %v1654 = vsel %vm1621, %v1234, 0
      %v1655 = vsel %vm1622, %v1235, 0
      %v1656 = vsel %vm1623, %v1236, 0
      %v1657 = vsel %vm1624, %v1237, 0
      %v1658 = vsel %vm1625, %v1238, 0
      %v1659 = vsel %vm1626, %v1239, 0
      %v1660 = vsel %vm1627, %v1240, 0
      %v1661 = vsel %vm1628, %v1241, 0
      %v1662 = vsel %vm1629, %v1242, 0
      %v1663 = vsel %vm1630, %v1243, 0
      %v1664 = vsel %vm1631, %v1244, 0
      %v1665 = vsel %vm1632, %v1245, 0
      %v1666 = vsel %vm1633, %v1246, 0
      %v1667 = vsel %vm1634, %v1247, 0
      %v1668 = vsel %vm1635, %v1248, 0
      %v1669 = vsel %vm1636, %v1249, 0
      %v1670 = vsel %vm1637, %v1250, 0
      %v1671 = vsel %vm1638, %v1251, 0
      %v1672 = vsel %vm1639, %v1252, 0
      %v1673 = vsel %vm1640, %v1253, 0
      %v1674 = vsel %vm1641, %v1254, 0
      %v1675 = vsel %vm1642, %v1255, 0
      %v1676 = vsel %vm1643, %v1256, 0
      %v1677 = vsel %vm1644, %v1257, 0
      %v1678 = vsel %vm1645, %v1258, 0
      %v1679 = vsel %vm1646, %v1259, 0
      %v1680 = vsel %vm1647, %v1260, 0
      %v1681 = vsel %vm1648, %v1261, 0
      %v1682 = vsel %vm1649, %v1262, 0
      %v1683 = vsel %vm1650, %v1263, 0
      %v1684 = vsel %vm1651, %v1264, 0
      %v1685 = vsel %vm1652, %v1265, 0
      %v1686 = vsel %vm1653, %v1266, 0
      %v1720 = vunpack.c.l.b16 %v1654
      %v1721 = vunpack.c.l.b16 %v1655
      %v1722 = vunpack.c.l.b16 %v1656
      %v1723 = vunpack.c.l.b16 %v1657
      %v1724 = vunpack.c.l.b16 %v1658
      %v1725 = vunpack.c.l.b16 %v1659
      %v1726 = vunpack.c.l.b16 %v1660
      %v1727 = vunpack.c.l.b16 %v1661
      %v1728 = vunpack.c.l.b16 %v1662
      %v1729 = vunpack.c.l.b16 %v1663
      %v1730 = vunpack.c.l.b16 %v1664
      %v1731 = vunpack.c.l.b16 %v1665
      %v1732 = vunpack.c.l.b16 %v1666
      %v1733 = vunpack.c.l.b16 %v1667
      %v1734 = vunpack.c.l.b16 %v1668
      %v1735 = vunpack.c.l.b16 %v1669
      %v1736 = vunpack.c.l.b16 %v1670
      %v1737 = vunpack.c.l.b16 %v1671
      %v1738 = vunpack.c.l.b16 %v1672
      %v1739 = vunpack.c.l.b16 %v1673
      %v1740 = vunpack.c.l.b16 %v1674
      %v1741 = vunpack.c.l.b16 %v1675
      %v1742 = vunpack.c.l.b16 %v1676
      %v1743 = vunpack.c.l.b16 %v1677
      %v1744 = vunpack.c.l.b16 %v1678
      %v1745 = vunpack.c.l.b16 %v1679
      %v1746 = vunpack.c.l.b16 %v1680
      %v1747 = vunpack.c.l.b16 %v1681
      %v1748 = vunpack.c.l.b16 %v1682
      %v1749 = vunpack.c.l.b16 %v1683
      %v1750 = vunpack.c.l.b16 %v1684
      %v1751 = vunpack.c.l.b16 %v1685
      %v1752 = vunpack.c.l.b16 %v1686
      %v1753 = vpack.c.b16 %v1721, %v1720
      %v1754 = vpack.c.b16 %v1723, %v1722
      %v1755 = vpack.c.b16 %v1725, %v1724
      %v1756 = vpack.c.b16 %v1727, %v1726
      %v1757 = vpack.c.b16 %v1729, %v1728
      %v1758 = vpack.c.b16 %v1731, %v1730
      %v1759 = vpack.c.b16 %v1733, %v1732
      %v1760 = vpack.c.b16 %v1735, %v1734
      %v1761 = vpack.c.b16 %v1737, %v1736
      %v1762 = vpack.c.b16 %v1739, %v1738
      %v1763 = vpack.c.b16 %v1741, %v1740
      %v1764 = vpack.c.b16 %v1743, %v1742
      %v1765 = vpack.c.b16 %v1745, %v1744
      %v1766 = vpack.c.b16 %v1747, %v1746
      %v1767 = vpack.c.b16 %v1749, %v1748
      %v1768 = vpack.c.b16 %v1751, %v1750
      %v1769 = vpack.c.b16 %v1752, %v1752
      %vm1770 = vsmask.f32 7424
      %v1772 = vshrl.u32 %v1753, 16
      %v1774 = vshll.u32 %v1753, 16
      %v1776 = vrot.slane %v1774, 1
      %v1777 = vor.u32 %v1772, %v1776
      %v1779 = vshll.u32 %v1754, 16
      %v1781 = vrot.slane %v1779, 1
      %v1782 = vsel %vm1770, %v1777, %v1781
      %v1783 = vshrl.u32 %v1754, 16
      %v1785 = vor.u32 %v1783, %v1781
      %v1787 = vshll.u32 %v1755, 16
      %v1789 = vrot.slane %v1787, 1
      %v1790 = vsel %vm1770, %v1785, %v1789
      %v1791 = vshrl.u32 %v1755, 16
      %v1793 = vor.u32 %v1791, %v1789
      %v1795 = vshll.u32 %v1756, 16
      %v1797 = vrot.slane %v1795, 1
      %v1798 = vsel %vm1770, %v1793, %v1797
      %v1799 = vshrl.u32 %v1756, 16
      %v1801 = vor.u32 %v1799, %v1797
      %v1803 = vshll.u32 %v1757, 16
      %v1805 = vrot.slane %v1803, 1
      %v1806 = vsel %vm1770, %v1801, %v1805
      %v1807 = vshrl.u32 %v1757, 16
      %v1809 = vor.u32 %v1807, %v1805
      %v1811 = vshll.u32 %v1758, 16
      %v1813 = vrot.slane %v1811, 1
      %v1814 = vsel %vm1770, %v1809, %v1813
      %v1815 = vshrl.u32 %v1758, 16
      %v1817 = vor.u32 %v1815, %v1813
      %v1819 = vshll.u32 %v1759, 16
      %v1821 = vrot.slane %v1819, 1
      %v1822 = vsel %vm1770, %v1817, %v1821
      %v1823 = vshrl.u32 %v1759, 16
      %v1825 = vor.u32 %v1823, %v1821
      %v1827 = vshll.u32 %v1760, 16
      %v1829 = vrot.slane %v1827, 1
      %v1830 = vsel %vm1770, %v1825, %v1829
      %v1831 = vshrl.u32 %v1760, 16
      %v1833 = vor.u32 %v1831, %v1829
      %v1835 = vshll.u32 %v1761, 16
      %v1837 = vrot.slane %v1835, 1
      %v1838 = vsel %vm1770, %v1833, %v1837
      %v1839 = vshrl.u32 %v1761, 16
      %v1841 = vor.u32 %v1839, %v1837
      %v1843 = vshll.u32 %v1762, 16
      %v1845 = vrot.slane %v1843, 1
      %v1846 = vsel %vm1770, %v1841, %v1845
      %v1847 = vshrl.u32 %v1762, 16
      %v1849 = vor.u32 %v1847, %v1845
      %v1851 = vshll.u32 %v1763, 16
      %v1853 = vrot.slane %v1851, 1
      %v1854 = vsel %vm1770, %v1849, %v1853
      %v1855 = vshrl.u32 %v1763, 16
      %v1857 = vor.u32 %v1855, %v1853
      %v1859 = vshll.u32 %v1764, 16
      %v1861 = vrot.slane %v1859, 1
      %v1862 = vsel %vm1770, %v1857, %v1861
      %v1863 = vshrl.u32 %v1764, 16
      %v1865 = vor.u32 %v1863, %v1861
      %v1867 = vshll.u32 %v1765, 16
      %v1869 = vrot.slane %v1867, 1
      %v1870 = vsel %vm1770, %v1865, %v1869
      %v1871 = vshrl.u32 %v1765, 16
      %v1873 = vor.u32 %v1871, %v1869
      %v1875 = vshll.u32 %v1766, 16
      %v1877 = vrot.slane %v1875, 1
      %v1878 = vsel %vm1770, %v1873, %v1877
      %v1879 = vshrl.u32 %v1766, 16
      %v1881 = vor.u32 %v1879, %v1877
      %v1883 = vshll.u32 %v1767, 16
      %v1885 = vrot.slane %v1883, 1
      %v1886 = vsel %vm1770, %v1881, %v1885
      %v1887 = vshrl.u32 %v1767, 16
      %v1889 = vor.u32 %v1887, %v1885
      %v1891 = vshll.u32 %v1768, 16
      %v1893 = vrot.slane %v1891, 1
      %v1894 = vsel %vm1770, %v1889, %v1893
      %v1895 = vshrl.u32 %v1768, 16
      %v1897 = vor.u32 %v1895, %v1893
      %v1899 = vshll.u32 %v1769, 16
      %v1901 = vrot.slane %v1899, 1
      %v1902 = vsel %vm1770, %v1897, %v1901
      %1903 = vrot.lane.b32.xlu0 %v1782, 64
      %v1904 = vpop.permute.xlu0 %1903
      %1905 = vrot.lane.b32.xlu0 %v1790, 64
      %v1906 = vpop.permute.xlu0 %1905
      %1907 = vrot.lane.b32.xlu0 %v1798, 64
      %v1908 = vpop.permute.xlu0 %1907
      %1909 = vrot.lane.b32.xlu0 %v1806, 64
      %v1910 = vpop.permute.xlu0 %1909
      %1911 = vrot.lane.b32.xlu0 %v1814, 64
      %v1912 = vpop.permute.xlu0 %1911
      %1913 = vrot.lane.b32.xlu0 %v1822, 64
      %v1914 = vpop.permute.xlu0 %1913
      %1915 = vrot.lane.b32.xlu0 %v1830, 64
      %v1916 = vpop.permute.xlu0 %1915
      %1917 = vrot.lane.b32.xlu0 %v1838, 64
      %v1918 = vpop.permute.xlu0 %1917
      %1919 = vrot.lane.b32.xlu0 %v1846, 64
      %v1920 = vpop.permute.xlu0 %1919
      %1921 = vrot.lane.b32.xlu0 %v1854, 64
      %v1922 = vpop.permute.xlu0 %1921
      %1923 = vrot.lane.b32.xlu0 %v1862, 64
      %v1924 = vpop.permute.xlu0 %1923
      %1925 = vrot.lane.b32.xlu0 %v1870, 64
      %v1926 = vpop.permute.xlu0 %1925
      %1927 = vrot.lane.b32.xlu0 %v1878, 64
      %v1928 = vpop.permute.xlu0 %1927
      %1929 = vrot.lane.b32.xlu0 %v1886, 64
      %v1930 = vpop.permute.xlu0 %1929
      %1931 = vrot.lane.b32.xlu0 %v1894, 64
      %v1932 = vpop.permute.xlu0 %1931
      %1933 = vrot.lane.b32.xlu0 %v1902, 64
      %v1934 = vpop.permute.xlu0 %1933
      %vm1951 = vcmask 785920
      %1952 = vst.msk [vmem:[#allocation2] sm:$0xff] %vm1951, %v1904
      %1953 = vst.msk [vmem:[#allocation2 + $0x18] sm:$0xff] %vm1951, %v1906
      %1954 = vst.msk [vmem:[#allocation2 + $0x30] sm:$0xff] %vm1951, %v1908
      %1955 = vst.msk [vmem:[#allocation2 + $0x48] sm:$0xff] %vm1951, %v1910
      %1956 = vst.msk [vmem:[#allocation2 + $0x60] sm:$0xff] %vm1951, %v1912
      %1957 = vst.msk [vmem:[#allocation2 + $0x78] sm:$0xff] %vm1951, %v1914
      %1958 = vst.msk [vmem:[#allocation2 + $0x90] sm:$0xff] %vm1951, %v1916
      %1959 = vst.msk [vmem:[#allocation2 + $0xa8] sm:$0xff] %vm1951, %v1918
      %1960 = vst.msk [vmem:[#allocation2 + $0xc0] sm:$0xff] %vm1951, %v1920
      %1961 = vst.msk [vmem:[#allocation2 + $0xd8] sm:$0xff] %vm1951, %v1922
      %1962 = vst.msk [vmem:[#allocation2 + $0xf0] sm:$0xff] %vm1951, %v1924
      %1963 = vst.msk [vmem:[#allocation2 + $0x108] sm:$0xff] %vm1951, %v1926
      %1964 = vst.msk [vmem:[#allocation2 + $0x120] sm:$0xff] %vm1951, %v1928
      %1965 = vst.msk [vmem:[#allocation2 + $0x138] sm:$0xff] %vm1951, %v1930
      %1966 = vst.msk [vmem:[#allocation2 + $0x150] sm:$0xff] %vm1951, %v1932
      %1967 = vst.msk [vmem:[#allocation2 + $0x168] sm:$0xff] %vm1951, %v1934
      %v1968 = vld [vmem:[%s165 + $0x8] sm:$0x8]
      %v1969 = vld [vmem:[%s165 + $0xc] sm:$0xf]
      %v1970 = vld [vmem:[%s165 + $0x10] sm:$0xf]
      %v1971 = vld [vmem:[%s165 + $0x14] sm:$0xf]
      %v1972 = vld [vmem:[%s165 + $0x18] sm:$0xf]
      %v1973 = vld [vmem:[%s165 + $0x1c] sm:$0xf]
      %v1974 = vld [vmem:[%s165 + $0x20] sm:$0xf]
      %v1975 = vld [vmem:[%s165 + $0x24] sm:$0xf]
      %v1976 = vld [vmem:[%s165 + $0x28] sm:$0xf]
      %v1977 = vld [vmem:[%s165 + $0x2c] sm:$0xf]
      %v1978 = vld [vmem:[%s165 + $0x30] sm:$0xf]
      %v1979 = vld [vmem:[%s165 + $0x34] sm:$0xf]
      %v1980 = vld [vmem:[%s165 + $0x38] sm:$0xf]
      %v1981 = vld [vmem:[%s165 + $0x3c] sm:$0xf]
      %v1982 = vld [vmem:[%s165 + $0x40] sm:$0xf]
      %v1983 = vld [vmem:[%s165 + $0x44] sm:$0xf]
      %v1984 = vld [vmem:[%s165 + $0x48] sm:$0xf]
      %v1985 = vld [vmem:[%s165 + $0x4c] sm:$0xf]
      %v1986 = vld [vmem:[%s165 + $0x50] sm:$0xf]
      %v1987 = vld [vmem:[%s165 + $0x54] sm:$0xf]
      %v1988 = vld [vmem:[%s165 + $0x58] sm:$0xf]
      %v1989 = vld [vmem:[%s165 + $0x5c] sm:$0xf]
      %v1990 = vld [vmem:[%s165 + $0x60] sm:$0xf]
      %v1991 = vld [vmem:[%s165 + $0x64] sm:$0xf]
      %v1992 = vld [vmem:[%s165 + $0x68] sm:$0xf]
      %v1993 = vld [vmem:[%s165 + $0x6c] sm:$0xf]
      %v1994 = vld [vmem:[%s165 + $0x70] sm:$0xf]
      %v1995 = vld [vmem:[%s165 + $0x74] sm:$0xf]
      %v1996 = vld [vmem:[%s165 + $0x78] sm:$0xf]
      %v1997 = vld [vmem:[%s165 + $0x7c] sm:$0xf]
      %v1998 = vld [vmem:[%s165 + $0x80] sm:$0xf]
      %v1999 = vld [vmem:[%s165 + $0x84] sm:$0xf]
      %v2000 = vld [vmem:[%s165 + $0x88] sm:$0xf]
      %v2001 = vsel %vm722, %v1968, 0
      %v2002 = vsel %vm723, %v1969, 0
      %v2003 = vsel %vm724, %v1970, 0
      %v2004 = vsel %vm725, %v1971, 0
      %v2005 = vsel %vm726, %v1972, 0
      %v2006 = vsel %vm727, %v1973, 0
      %v2007 = vsel %vm728, %v1974, 0
      %v2008 = vsel %vm729, %v1975, 0
      %v2009 = vsel %vm730, %v1976, 0
      %v2010 = vsel %vm731, %v1977, 0
      %v2011 = vsel %vm732, %v1978, 0
      %v2012 = vsel %vm733, %v1979, 0
      %v2013 = vsel %vm734, %v1980, 0
      %v2014 = vsel %vm735, %v1981, 0
      %v2015 = vsel %vm736, %v1982, 0
      %v2016 = vsel %vm737, %v1983, 0
      %v2017 = vsel %vm738, %v1984, 0
      %v2018 = vsel %vm739, %v1985, 0
      %v2019 = vsel %vm740, %v1986, 0
      %v2020 = vsel %vm741, %v1987, 0
      %v2021 = vsel %vm742, %v1988, 0
      %v2022 = vsel %vm743, %v1989, 0
      %v2023 = vsel %vm744, %v1990, 0
      %v2024 = vsel %vm745, %v1991, 0
      %v2025 = vsel %vm746, %v1992, 0
      %v2026 = vsel %vm747, %v1993, 0
      %v2027 = vsel %vm748, %v1994, 0
      %v2028 = vsel %vm749, %v1995, 0
      %v2029 = vsel %vm750, %v1996, 0
      %v2030 = vsel %vm751, %v1997, 0
      %v2031 = vsel %vm752, %v1998, 0
      %v2032 = vsel %vm753, %v1999, 0
      %v2033 = vsel %vm754, %v2000, 0
      %v2067 = vunpack.c.l.b16 %v2001
      %v2068 = vunpack.c.l.b16 %v2002
      %v2069 = vunpack.c.l.b16 %v2003
      %v2070 = vunpack.c.l.b16 %v2004
      %v2071 = vunpack.c.l.b16 %v2005
      %v2072 = vunpack.c.l.b16 %v2006
      %v2073 = vunpack.c.l.b16 %v2007
      %v2074 = vunpack.c.l.b16 %v2008
      %v2075 = vunpack.c.l.b16 %v2009
      %v2076 = vunpack.c.l.b16 %v2010
      %v2077 = vunpack.c.l.b16 %v2011
      %v2078 = vunpack.c.l.b16 %v2012
      %v2079 = vunpack.c.l.b16 %v2013
      %v2080 = vunpack.c.l.b16 %v2014
      %v2081 = vunpack.c.l.b16 %v2015
      %v2082 = vunpack.c.l.b16 %v2016
      %v2083 = vunpack.c.l.b16 %v2017
      %v2084 = vunpack.c.l.b16 %v2018
      %v2085 = vunpack.c.l.b16 %v2019
      %v2086 = vunpack.c.l.b16 %v2020
      %v2087 = vunpack.c.l.b16 %v2021
      %v2088 = vunpack.c.l.b16 %v2022
      %v2089 = vunpack.c.l.b16 %v2023
      %v2090 = vunpack.c.l.b16 %v2024
      %v2091 = vunpack.c.l.b16 %v2025
      %v2092 = vunpack.c.l.b16 %v2026
      %v2093 = vunpack.c.l.b16 %v2027
      %v2094 = vunpack.c.l.b16 %v2028
      %v2095 = vunpack.c.l.b16 %v2029
      %v2096 = vunpack.c.l.b16 %v2030
      %v2097 = vunpack.c.l.b16 %v2031
      %v2098 = vunpack.c.l.b16 %v2032
      %v2099 = vunpack.c.l.b16 %v2033
      %v2100 = vpack.c.b16 %v2068, %v2067
      %v2101 = vpack.c.b16 %v2070, %v2069
      %v2102 = vpack.c.b16 %v2072, %v2071
      %v2103 = vpack.c.b16 %v2074, %v2073
      %v2104 = vpack.c.b16 %v2076, %v2075
      %v2105 = vpack.c.b16 %v2078, %v2077
      %v2106 = vpack.c.b16 %v2080, %v2079
      %v2107 = vpack.c.b16 %v2082, %v2081
      %v2108 = vpack.c.b16 %v2084, %v2083
      %v2109 = vpack.c.b16 %v2086, %v2085
      %v2110 = vpack.c.b16 %v2088, %v2087
      %v2111 = vpack.c.b16 %v2090, %v2089
      %v2112 = vpack.c.b16 %v2092, %v2091
      %v2113 = vpack.c.b16 %v2094, %v2093
      %v2114 = vpack.c.b16 %v2096, %v2095
      %v2115 = vpack.c.b16 %v2098, %v2097
      %v2116 = vpack.c.b16 %v2099, %v2099
      %v2118 = vshrl.u32 %v2100, 16
      %v2120 = vrot.slane %v2118, 3
      %v2121 = vshll.u32 %v2100, 16
      %v2123 = vrot.slane %v2121, 4
      %v2124 = vor.u32 %v2120, %v2123
      %v2126 = vshrl.u32 %v2101, 16
      %v2128 = vrot.slane %v2126, 3
      %v2129 = vshll.u32 %v2101, 16
      %v2131 = vrot.slane %v2129, 4
      %v2132 = vor.u32 %v2128, %v2131
      %v2133 = vsel %vm871, %v2124, %v2132
      %v2135 = vshrl.u32 %v2102, 16
      %v2137 = vrot.slane %v2135, 3
      %v2138 = vshll.u32 %v2102, 16
      %v2140 = vrot.slane %v2138, 4
      %v2141 = vor.u32 %v2137, %v2140
      %v2142 = vsel %vm871, %v2132, %v2141
      %v2144 = vshrl.u32 %v2103, 16
      %v2146 = vrot.slane %v2144, 3
      %v2147 = vshll.u32 %v2103, 16
      %v2149 = vrot.slane %v2147, 4
      %v2150 = vor.u32 %v2146, %v2149
      %v2151 = vsel %vm871, %v2141, %v2150
      %v2153 = vshrl.u32 %v2104, 16
      %v2155 = vrot.slane %v2153, 3
      %v2156 = vshll.u32 %v2104, 16
      %v2158 = vrot.slane %v2156, 4
      %v2159 = vor.u32 %v2155, %v2158
      %v2160 = vsel %vm871, %v2150, %v2159
      %v2162 = vshrl.u32 %v2105, 16
      %v2164 = vrot.slane %v2162, 3
      %v2165 = vshll.u32 %v2105, 16
      %v2167 = vrot.slane %v2165, 4
      %v2168 = vor.u32 %v2164, %v2167
      %v2169 = vsel %vm871, %v2159, %v2168
      %v2171 = vshrl.u32 %v2106, 16
      %v2173 = vrot.slane %v2171, 3
      %v2174 = vshll.u32 %v2106, 16
      %v2176 = vrot.slane %v2174, 4
      %v2177 = vor.u32 %v2173, %v2176
      %v2178 = vsel %vm871, %v2168, %v2177
      %v2180 = vshrl.u32 %v2107, 16
      %v2182 = vrot.slane %v2180, 3
      %v2183 = vshll.u32 %v2107, 16
      %v2185 = vrot.slane %v2183, 4
      %v2186 = vor.u32 %v2182, %v2185
      %v2187 = vsel %vm871, %v2177, %v2186
      %v2189 = vshrl.u32 %v2108, 16
      %v2191 = vrot.slane %v2189, 3
      %v2192 = vshll.u32 %v2108, 16
      %v2194 = vrot.slane %v2192, 4
      %v2195 = vor.u32 %v2191, %v2194
      %v2196 = vsel %vm871, %v2186, %v2195
      %v2198 = vshrl.u32 %v2109, 16
      %v2200 = vrot.slane %v2198, 3
      %v2201 = vshll.u32 %v2109, 16
      %v2203 = vrot.slane %v2201, 4
      %v2204 = vor.u32 %v2200, %v2203
      %v2205 = vsel %vm871, %v2195, %v2204
      %v2207 = vshrl.u32 %v2110, 16
      %v2209 = vrot.slane %v2207, 3
      %v2210 = vshll.u32 %v2110, 16
      %v2212 = vrot.slane %v2210, 4
      %v2213 = vor.u32 %v2209, %v2212
      %v2214 = vsel %vm871, %v2204, %v2213
      %v2216 = vshrl.u32 %v2111, 16
      %v2218 = vrot.slane %v2216, 3
      %v2219 = vshll.u32 %v2111, 16
      %v2221 = vrot.slane %v2219, 4
      %v2222 = vor.u32 %v2218, %v2221
      %v2223 = vsel %vm871, %v2213, %v2222
      %v2225 = vshrl.u32 %v2112, 16
      %v2227 = vrot.slane %v2225, 3
      %v2228 = vshll.u32 %v2112, 16
      %v2230 = vrot.slane %v2228, 4
      %v2231 = vor.u32 %v2227, %v2230
      %v2232 = vsel %vm871, %v2222, %v2231
      %v2234 = vshrl.u32 %v2113, 16
      %v2236 = vrot.slane %v2234, 3
      %v2237 = vshll.u32 %v2113, 16
      %v2239 = vrot.slane %v2237, 4
      %v2240 = vor.u32 %v2236, %v2239
      %v2241 = vsel %vm871, %v2231, %v2240
      %v2243 = vshrl.u32 %v2114, 16
      %v2245 = vrot.slane %v2243, 3
      %v2246 = vshll.u32 %v2114, 16
      %v2248 = vrot.slane %v2246, 4
      %v2249 = vor.u32 %v2245, %v2248
      %v2250 = vsel %vm871, %v2240, %v2249
      %v2252 = vshrl.u32 %v2115, 16
      %v2254 = vrot.slane %v2252, 3
      %v2255 = vshll.u32 %v2115, 16
      %v2257 = vrot.slane %v2255, 4
      %v2258 = vor.u32 %v2254, %v2257
      %v2259 = vsel %vm871, %v2249, %v2258
      %v2261 = vshrl.u32 %v2116, 16
      %v2263 = vrot.slane %v2261, 3
      %v2264 = vshll.u32 %v2116, 16
      %v2266 = vrot.slane %v2264, 4
      %v2267 = vor.u32 %v2263, %v2266
      %v2268 = vsel %vm871, %v2258, %v2267
      %2269 = vrot.lane.b32.xlu0 %v2133, 96
      %v2270 = vpop.permute.xlu0 %2269
      %2271 = vrot.lane.b32.xlu0 %v2142, 96
      %v2272 = vpop.permute.xlu0 %2271
      %2273 = vrot.lane.b32.xlu0 %v2151, 96
      %v2274 = vpop.permute.xlu0 %2273
      %2275 = vrot.lane.b32.xlu0 %v2160, 96
      %v2276 = vpop.permute.xlu0 %2275
      %2277 = vrot.lane.b32.xlu0 %v2169, 96
      %v2278 = vpop.permute.xlu0 %2277
      %2279 = vrot.lane.b32.xlu0 %v2178, 96
      %v2280 = vpop.permute.xlu0 %2279
      %2281 = vrot.lane.b32.xlu0 %v2187, 96
      %v2282 = vpop.permute.xlu0 %2281
      %2283 = vrot.lane.b32.xlu0 %v2196, 96
      %v2284 = vpop.permute.xlu0 %2283
      %2285 = vrot.lane.b32.xlu0 %v2205, 96
      %v2286 = vpop.permute.xlu0 %2285
      %2287 = vrot.lane.b32.xlu0 %v2214, 96
      %v2288 = vpop.permute.xlu0 %2287
      %2289 = vrot.lane.b32.xlu0 %v2223, 96
      %v2290 = vpop.permute.xlu0 %2289
      %2291 = vrot.lane.b32.xlu0 %v2232, 96
      %v2292 = vpop.permute.xlu0 %2291
      %2293 = vrot.lane.b32.xlu0 %v2241, 96
      %v2294 = vpop.permute.xlu0 %2293
      %2295 = vrot.lane.b32.xlu0 %v2250, 96
      %v2296 = vpop.permute.xlu0 %2295
      %2297 = vrot.lane.b32.xlu0 %v2259, 96
      %v2298 = vpop.permute.xlu0 %2297
      %2299 = vrot.lane.b32.xlu0 %v2268, 96
      %v2300 = vpop.permute.xlu0 %2299
      %vm2317 = vcmask 1048320
      %2318 = vst.msk [vmem:[#allocation2] sm:$0xff] %vm2317, %v2270
      %2319 = vst.msk [vmem:[#allocation2 + $0x18] sm:$0xff] %vm2317, %v2272
      %2320 = vst.msk [vmem:[#allocation2 + $0x30] sm:$0xff] %vm2317, %v2274
      %2321 = vst.msk [vmem:[#allocation2 + $0x48] sm:$0xff] %vm2317, %v2276
      %2322 = vst.msk [vmem:[#allocation2 + $0x60] sm:$0xff] %vm2317, %v2278
      %2323 = vst.msk [vmem:[#allocation2 + $0x78] sm:$0xff] %vm2317, %v2280
      %2324 = vst.msk [vmem:[#allocation2 + $0x90] sm:$0xff] %vm2317, %v2282
      %2325 = vst.msk [vmem:[#allocation2 + $0xa8] sm:$0xff] %vm2317, %v2284
      %2326 = vst.msk [vmem:[#allocation2 + $0xc0] sm:$0xff] %vm2317, %v2286
      %2327 = vst.msk [vmem:[#allocation2 + $0xd8] sm:$0xff] %vm2317, %v2288
      %2328 = vst.msk [vmem:[#allocation2 + $0xf0] sm:$0xff] %vm2317, %v2290
      %2329 = vst.msk [vmem:[#allocation2 + $0x108] sm:$0xff] %vm2317, %v2292
      %2330 = vst.msk [vmem:[#allocation2 + $0x120] sm:$0xff] %vm2317, %v2294
      %2331 = vst.msk [vmem:[#allocation2 + $0x138] sm:$0xff] %vm2317, %v2296
      %2332 = vst.msk [vmem:[#allocation2 + $0x150] sm:$0xff] %vm2317, %v2298
      %2333 = vst.msk [vmem:[#allocation2 + $0x168] sm:$0xff] %vm2317, %v2300
      %v2334 = vld [vmem:[%s165 + $0xc] sm:$0xf]
      %v2335 = vld [vmem:[%s165 + $0x10] sm:$0xf]
      %v2336 = vld [vmem:[%s165 + $0x14] sm:$0xf]
      %v2337 = vld [vmem:[%s165 + $0x18] sm:$0xf]
      %v2338 = vld [vmem:[%s165 + $0x1c] sm:$0xf]
      %v2339 = vld [vmem:[%s165 + $0x20] sm:$0xf]
      %v2340 = vld [vmem:[%s165 + $0x24] sm:$0xf]
      %v2341 = vld [vmem:[%s165 + $0x28] sm:$0xf]
      %v2342 = vld [vmem:[%s165 + $0x2c] sm:$0xf]
      %v2343 = vld [vmem:[%s165 + $0x30] sm:$0xf]
      %v2344 = vld [vmem:[%s165 + $0x34] sm:$0xf]
      %v2345 = vld [vmem:[%s165 + $0x38] sm:$0xf]
      %v2346 = vld [vmem:[%s165 + $0x3c] sm:$0xf]
      %v2347 = vld [vmem:[%s165 + $0x40] sm:$0xf]
      %v2348 = vld [vmem:[%s165 + $0x44] sm:$0xf]
      %v2349 = vld [vmem:[%s165 + $0x48] sm:$0xf]
      %v2350 = vld [vmem:[%s165 + $0x4c] sm:$0xf]
      %v2351 = vld [vmem:[%s165 + $0x50] sm:$0xf]
      %v2352 = vld [vmem:[%s165 + $0x54] sm:$0xf]
      %v2353 = vld [vmem:[%s165 + $0x58] sm:$0xf]
      %v2354 = vld [vmem:[%s165 + $0x5c] sm:$0xf]
      %v2355 = vld [vmem:[%s165 + $0x60] sm:$0xf]
      %v2356 = vld [vmem:[%s165 + $0x64] sm:$0xf]
      %v2357 = vld [vmem:[%s165 + $0x68] sm:$0xf]
      %v2358 = vld [vmem:[%s165 + $0x6c] sm:$0xf]
      %v2359 = vld [vmem:[%s165 + $0x70] sm:$0xf]
      %v2360 = vld [vmem:[%s165 + $0x74] sm:$0xf]
      %v2361 = vld [vmem:[%s165 + $0x78] sm:$0xf]
      %v2362 = vld [vmem:[%s165 + $0x7c] sm:$0xf]
      %v2363 = vld [vmem:[%s165 + $0x80] sm:$0xf]
      %v2364 = vld [vmem:[%s165 + $0x84] sm:$0xf]
      %v2365 = vld [vmem:[%s165 + $0x88] sm:$0xf]
      %v2398 = vunpack.c.l.b16 %v2334
      %v2399 = vunpack.c.l.b16 %v2335
      %v2400 = vunpack.c.l.b16 %v2336
      %v2401 = vunpack.c.l.b16 %v2337
      %v2402 = vunpack.c.l.b16 %v2338
      %v2403 = vunpack.c.l.b16 %v2339
      %v2404 = vunpack.c.l.b16 %v2340
      %v2405 = vunpack.c.l.b16 %v2341
      %v2406 = vunpack.c.l.b16 %v2342
      %v2407 = vunpack.c.l.b16 %v2343
      %v2408 = vunpack.c.l.b16 %v2344
      %v2409 = vunpack.c.l.b16 %v2345
      %v2410 = vunpack.c.l.b16 %v2346
      %v2411 = vunpack.c.l.b16 %v2347
      %v2412 = vunpack.c.l.b16 %v2348
      %v2413 = vunpack.c.l.b16 %v2349
      %v2414 = vunpack.c.l.b16 %v2350
      %v2415 = vunpack.c.l.b16 %v2351
      %v2416 = vunpack.c.l.b16 %v2352
      %v2417 = vunpack.c.l.b16 %v2353
      %v2418 = vunpack.c.l.b16 %v2354
      %v2419 = vunpack.c.l.b16 %v2355
      %v2420 = vunpack.c.l.b16 %v2356
      %v2421 = vunpack.c.l.b16 %v2357
      %v2422 = vunpack.c.l.b16 %v2358
      %v2423 = vunpack.c.l.b16 %v2359
      %v2424 = vunpack.c.l.b16 %v2360
      %v2425 = vunpack.c.l.b16 %v2361
      %v2426 = vunpack.c.l.b16 %v2362
      %v2427 = vunpack.c.l.b16 %v2363
      %v2428 = vunpack.c.l.b16 %v2364
      %v2429 = vunpack.c.l.b16 %v2365
      %v2430 = vpack.c.b16 %v2399, %v2398
      %v2431 = vpack.c.b16 %v2401, %v2400
      %v2432 = vpack.c.b16 %v2403, %v2402
      %v2433 = vpack.c.b16 %v2405, %v2404
      %v2434 = vpack.c.b16 %v2407, %v2406
      %v2435 = vpack.c.b16 %v2409, %v2408
      %v2436 = vpack.c.b16 %v2411, %v2410
      %v2437 = vpack.c.b16 %v2413, %v2412
      %v2438 = vpack.c.b16 %v2415, %v2414
      %v2439 = vpack.c.b16 %v2417, %v2416
      %v2440 = vpack.c.b16 %v2419, %v2418
      %v2441 = vpack.c.b16 %v2421, %v2420
      %v2442 = vpack.c.b16 %v2423, %v2422
      %v2443 = vpack.c.b16 %v2425, %v2424
      %v2444 = vpack.c.b16 %v2427, %v2426
      %v2445 = vpack.c.b16 %v2429, %v2428
      %2462 = vst.msk [vmem:[#allocation2 + $0x8] sm:$0xff] %vm1040, %v2430
      %2463 = vst.msk [vmem:[#allocation2 + $0x20] sm:$0xff] %vm1040, %v2431
      %2464 = vst.msk [vmem:[#allocation2 + $0x38] sm:$0xff] %vm1040, %v2432
      %2465 = vst.msk [vmem:[#allocation2 + $0x50] sm:$0xff] %vm1040, %v2433
      %2466 = vst.msk [vmem:[#allocation2 + $0x68] sm:$0xff] %vm1040, %v2434
      %2467 = vst.msk [vmem:[#allocation2 + $0x80] sm:$0xff] %vm1040, %v2435
      %2468 = vst.msk [vmem:[#allocation2 + $0x98] sm:$0xff] %vm1040, %v2436
      %2469 = vst.msk [vmem:[#allocation2 + $0xb0] sm:$0xff] %vm1040, %v2437
      %2470 = vst.msk [vmem:[#allocation2 + $0xc8] sm:$0xff] %vm1040, %v2438
      %2471 = vst.msk [vmem:[#allocation2 + $0xe0] sm:$0xff] %vm1040, %v2439
      %2472 = vst.msk [vmem:[#allocation2 + $0xf8] sm:$0xff] %vm1040, %v2440
      %2473 = vst.msk [vmem:[#allocation2 + $0x110] sm:$0xff] %vm1040, %v2441
      %2474 = vst.msk [vmem:[#allocation2 + $0x128] sm:$0xff] %vm1040, %v2442
      %2475 = vst.msk [vmem:[#allocation2 + $0x140] sm:$0xff] %vm1040, %v2443
      %2476 = vst.msk [vmem:[#allocation2 + $0x158] sm:$0xff] %vm1040, %v2444
      %2477 = vst.msk [vmem:[#allocation2 + $0x170] sm:$0xff] %vm1040, %v2445
      %v2478 = vld [vmem:[%s165 + $0xc] sm:$0xf]
      %v2479 = vld [vmem:[%s165 + $0x10] sm:$0xf]
      %v2480 = vld [vmem:[%s165 + $0x14] sm:$0xf]
      %v2481 = vld [vmem:[%s165 + $0x18] sm:$0xf]
      %v2482 = vld [vmem:[%s165 + $0x1c] sm:$0xf]
      %v2483 = vld [vmem:[%s165 + $0x20] sm:$0xf]
      %v2484 = vld [vmem:[%s165 + $0x24] sm:$0xf]
      %v2485 = vld [vmem:[%s165 + $0x28] sm:$0xf]
      %v2486 = vld [vmem:[%s165 + $0x2c] sm:$0xf]
      %v2487 = vld [vmem:[%s165 + $0x30] sm:$0xf]
      %v2488 = vld [vmem:[%s165 + $0x34] sm:$0xf]
      %v2489 = vld [vmem:[%s165 + $0x38] sm:$0xf]
      %v2490 = vld [vmem:[%s165 + $0x3c] sm:$0xf]
      %v2491 = vld [vmem:[%s165 + $0x40] sm:$0xf]
      %v2492 = vld [vmem:[%s165 + $0x44] sm:$0xf]
      %v2493 = vld [vmem:[%s165 + $0x48] sm:$0xf]
      %v2494 = vld [vmem:[%s165 + $0x4c] sm:$0xf]
      %v2495 = vld [vmem:[%s165 + $0x50] sm:$0xf]
      %v2496 = vld [vmem:[%s165 + $0x54] sm:$0xf]
      %v2497 = vld [vmem:[%s165 + $0x58] sm:$0xf]
      %v2498 = vld [vmem:[%s165 + $0x5c] sm:$0xf]
      %v2499 = vld [vmem:[%s165 + $0x60] sm:$0xf]
      %v2500 = vld [vmem:[%s165 + $0x64] sm:$0xf]
      %v2501 = vld [vmem:[%s165 + $0x68] sm:$0xf]
      %v2502 = vld [vmem:[%s165 + $0x6c] sm:$0xf]
      %v2503 = vld [vmem:[%s165 + $0x70] sm:$0xf]
      %v2504 = vld [vmem:[%s165 + $0x74] sm:$0xf]
      %v2505 = vld [vmem:[%s165 + $0x78] sm:$0xf]
      %v2506 = vld [vmem:[%s165 + $0x7c] sm:$0xf]
      %v2507 = vld [vmem:[%s165 + $0x80] sm:$0xf]
      %v2508 = vld [vmem:[%s165 + $0x84] sm:$0xf]
      %v2509 = vld [vmem:[%s165 + $0x88] sm:$0xf]
      %v2510 = vld [vmem:[%s165 + $0x8c] sm:$0x1]
      %v2511 = vsel %vm1621, %v2478, 0
      %v2512 = vsel %vm1622, %v2479, 0
      %v2513 = vsel %vm1623, %v2480, 0
      %v2514 = vsel %vm1624, %v2481, 0
      %v2515 = vsel %vm1625, %v2482, 0
      %v2516 = vsel %vm1626, %v2483, 0
      %v2517 = vsel %vm1627, %v2484, 0
      %v2518 = vsel %vm1628, %v2485, 0
      %v2519 = vsel %vm1629, %v2486, 0
      %v2520 = vsel %vm1630, %v2487, 0
      %v2521 = vsel %vm1631, %v2488, 0
      %v2522 = vsel %vm1632, %v2489, 0
      %v2523 = vsel %vm1633, %v2490, 0
      %v2524 = vsel %vm1634, %v2491, 0
      %v2525 = vsel %vm1635, %v2492, 0
      %v2526 = vsel %vm1636, %v2493, 0
      %v2527 = vsel %vm1637, %v2494, 0
      %v2528 = vsel %vm1638, %v2495, 0
      %v2529 = vsel %vm1639, %v2496, 0
      %v2530 = vsel %vm1640, %v2497, 0
      %v2531 = vsel %vm1641, %v2498, 0
      %v2532 = vsel %vm1642, %v2499, 0
      %v2533 = vsel %vm1643, %v2500, 0
      %v2534 = vsel %vm1644, %v2501, 0
      %v2535 = vsel %vm1645, %v2502, 0
      %v2536 = vsel %vm1646, %v2503, 0
      %v2537 = vsel %vm1647, %v2504, 0
      %v2538 = vsel %vm1648, %v2505, 0
      %v2539 = vsel %vm1649, %v2506, 0
      %v2540 = vsel %vm1650, %v2507, 0
      %v2541 = vsel %vm1651, %v2508, 0
      %v2542 = vsel %vm1652, %v2509, 0
      %v2543 = vsel %vm1653, %v2510, 0
      %v2577 = vunpack.c.l.b16 %v2511
      %v2578 = vunpack.c.l.b16 %v2512
      %v2579 = vunpack.c.l.b16 %v2513
      %v2580 = vunpack.c.l.b16 %v2514
      %v2581 = vunpack.c.l.b16 %v2515
      %v2582 = vunpack.c.l.b16 %v2516
      %v2583 = vunpack.c.l.b16 %v2517
      %v2584 = vunpack.c.l.b16 %v2518
      %v2585 = vunpack.c.l.b16 %v2519
      %v2586 = vunpack.c.l.b16 %v2520
      %v2587 = vunpack.c.l.b16 %v2521
      %v2588 = vunpack.c.l.b16 %v2522
      %v2589 = vunpack.c.l.b16 %v2523
      %v2590 = vunpack.c.l.b16 %v2524
      %v2591 = vunpack.c.l.b16 %v2525
      %v2592 = vunpack.c.l.b16 %v2526
      %v2593 = vunpack.c.l.b16 %v2527
      %v2594 = vunpack.c.l.b16 %v2528
      %v2595 = vunpack.c.l.b16 %v2529
      %v2596 = vunpack.c.l.b16 %v2530
      %v2597 = vunpack.c.l.b16 %v2531
      %v2598 = vunpack.c.l.b16 %v2532
      %v2599 = vunpack.c.l.b16 %v2533
      %v2600 = vunpack.c.l.b16 %v2534
      %v2601 = vunpack.c.l.b16 %v2535
      %v2602 = vunpack.c.l.b16 %v2536
      %v2603 = vunpack.c.l.b16 %v2537
      %v2604 = vunpack.c.l.b16 %v2538
      %v2605 = vunpack.c.l.b16 %v2539
      %v2606 = vunpack.c.l.b16 %v2540
      %v2607 = vunpack.c.l.b16 %v2541
      %v2608 = vunpack.c.l.b16 %v2542
      %v2609 = vunpack.c.l.b16 %v2543
      %v2610 = vpack.c.b16 %v2578, %v2577
      %v2611 = vpack.c.b16 %v2580, %v2579
      %v2612 = vpack.c.b16 %v2582, %v2581
      %v2613 = vpack.c.b16 %v2584, %v2583
      %v2614 = vpack.c.b16 %v2586, %v2585
      %v2615 = vpack.c.b16 %v2588, %v2587
      %v2616 = vpack.c.b16 %v2590, %v2589
      %v2617 = vpack.c.b16 %v2592, %v2591
      %v2618 = vpack.c.b16 %v2594, %v2593
      %v2619 = vpack.c.b16 %v2596, %v2595
      %v2620 = vpack.c.b16 %v2598, %v2597
      %v2621 = vpack.c.b16 %v2600, %v2599
      %v2622 = vpack.c.b16 %v2602, %v2601
      %v2623 = vpack.c.b16 %v2604, %v2603
      %v2624 = vpack.c.b16 %v2606, %v2605
      %v2625 = vpack.c.b16 %v2608, %v2607
      %v2626 = vpack.c.b16 %v2609, %v2609
      %v2628 = vshrl.u32 %v2610, 16
      %v2630 = vshll.u32 %v2610, 16
      %v2632 = vrot.slane %v2630, 1
      %v2633 = vor.u32 %v2628, %v2632
      %v2635 = vshll.u32 %v2611, 16
      %v2637 = vrot.slane %v2635, 1
      %v2638 = vsel %vm1770, %v2633, %v2637
      %v2639 = vshrl.u32 %v2611, 16
      %v2641 = vor.u32 %v2639, %v2637
      %v2643 = vshll.u32 %v2612, 16
      %v2645 = vrot.slane %v2643, 1
      %v2646 = vsel %vm1770, %v2641, %v2645
      %v2647 = vshrl.u32 %v2612, 16
      %v2649 = vor.u32 %v2647, %v2645
      %v2651 = vshll.u32 %v2613, 16
      %v2653 = vrot.slane %v2651, 1
      %v2654 = vsel %vm1770, %v2649, %v2653
      %v2655 = vshrl.u32 %v2613, 16
      %v2657 = vor.u32 %v2655, %v2653
      %v2659 = vshll.u32 %v2614, 16
      %v2661 = vrot.slane %v2659, 1
      %v2662 = vsel %vm1770, %v2657, %v2661
      %v2663 = vshrl.u32 %v2614, 16
      %v2665 = vor.u32 %v2663, %v2661
      %v2667 = vshll.u32 %v2615, 16
      %v2669 = vrot.slane %v2667, 1
      %v2670 = vsel %vm1770, %v2665, %v2669
      %v2671 = vshrl.u32 %v2615, 16
      %v2673 = vor.u32 %v2671, %v2669
      %v2675 = vshll.u32 %v2616, 16
      %v2677 = vrot.slane %v2675, 1
      %v2678 = vsel %vm1770, %v2673, %v2677
      %v2679 = vshrl.u32 %v2616, 16
      %v2681 = vor.u32 %v2679, %v2677
      %v2683 = vshll.u32 %v2617, 16
      %v2685 = vrot.slane %v2683, 1
      %v2686 = vsel %vm1770, %v2681, %v2685
      %v2687 = vshrl.u32 %v2617, 16
      %v2689 = vor.u32 %v2687, %v2685
      %v2691 = vshll.u32 %v2618, 16
      %v2693 = vrot.slane %v2691, 1
      %v2694 = vsel %vm1770, %v2689, %v2693
      %v2695 = vshrl.u32 %v2618, 16
      %v2697 = vor.u32 %v2695, %v2693
      %v2699 = vshll.u32 %v2619, 16
      %v2701 = vrot.slane %v2699, 1
      %v2702 = vsel %vm1770, %v2697, %v2701
      %v2703 = vshrl.u32 %v2619, 16
      %v2705 = vor.u32 %v2703, %v2701
      %v2707 = vshll.u32 %v2620, 16
      %v2709 = vrot.slane %v2707, 1
      %v2710 = vsel %vm1770, %v2705, %v2709
      %v2711 = vshrl.u32 %v2620, 16
      %v2713 = vor.u32 %v2711, %v2709
      %v2715 = vshll.u32 %v2621, 16
      %v2717 = vrot.slane %v2715, 1
      %v2718 = vsel %vm1770, %v2713, %v2717
      %v2719 = vshrl.u32 %v2621, 16
      %v2721 = vor.u32 %v2719, %v2717
      %v2723 = vshll.u32 %v2622, 16
      %v2725 = vrot.slane %v2723, 1
      %v2726 = vsel %vm1770, %v2721, %v2725
      %v2727 = vshrl.u32 %v2622, 16
      %v2729 = vor.u32 %v2727, %v2725
      %v2731 = vshll.u32 %v2623, 16
      %v2733 = vrot.slane %v2731, 1
      %v2734 = vsel %vm1770, %v2729, %v2733
      %v2735 = vshrl.u32 %v2623, 16
      %v2737 = vor.u32 %v2735, %v2733
      %v2739 = vshll.u32 %v2624, 16
      %v2741 = vrot.slane %v2739, 1
      %v2742 = vsel %vm1770, %v2737, %v2741
      %v2743 = vshrl.u32 %v2624, 16
      %v2745 = vor.u32 %v2743, %v2741
      %v2747 = vshll.u32 %v2625, 16
      %v2749 = vrot.slane %v2747, 1
      %v2750 = vsel %vm1770, %v2745, %v2749
      %v2751 = vshrl.u32 %v2625, 16
      %v2753 = vor.u32 %v2751, %v2749
      %v2755 = vshll.u32 %v2626, 16
      %v2757 = vrot.slane %v2755, 1
      %v2758 = vsel %vm1770, %v2753, %v2757
      %2759 = vrot.lane.b32.xlu0 %v2638, 32
      %v2760 = vpop.permute.xlu0 %2759
      %2761 = vrot.lane.b32.xlu0 %v2646, 32
      %v2762 = vpop.permute.xlu0 %2761
      %2763 = vrot.lane.b32.xlu0 %v2654, 32
      %v2764 = vpop.permute.xlu0 %2763
      %2765 = vrot.lane.b32.xlu0 %v2662, 32
      %v2766 = vpop.permute.xlu0 %2765
      %2767 = vrot.lane.b32.xlu0 %v2670, 32
      %v2768 = vpop.permute.xlu0 %2767
      %2769 = vrot.lane.b32.xlu0 %v2678, 32
      %v2770 = vpop.permute.xlu0 %2769
      %2771 = vrot.lane.b32.xlu0 %v2686, 32
      %v2772 = vpop.permute.xlu0 %2771
      %2773 = vrot.lane.b32.xlu0 %v2694, 32
      %v2774 = vpop.permute.xlu0 %2773
      %2775 = vrot.lane.b32.xlu0 %v2702, 32
      %v2776 = vpop.permute.xlu0 %2775
      %2777 = vrot.lane.b32.xlu0 %v2710, 32
      %v2778 = vpop.permute.xlu0 %2777
      %2779 = vrot.lane.b32.xlu0 %v2718, 32
      %v2780 = vpop.permute.xlu0 %2779
      %2781 = vrot.lane.b32.xlu0 %v2726, 32
      %v2782 = vpop.permute.xlu0 %2781
      %2783 = vrot.lane.b32.xlu0 %v2734, 32
      %v2784 = vpop.permute.xlu0 %2783
      %2785 = vrot.lane.b32.xlu0 %v2742, 32
      %v2786 = vpop.permute.xlu0 %2785
      %2787 = vrot.lane.b32.xlu0 %v2750, 32
      %v2788 = vpop.permute.xlu0 %2787
      %2789 = vrot.lane.b32.xlu0 %v2758, 32
      %v2790 = vpop.permute.xlu0 %2789
      %2807 = vst.msk [vmem:[#allocation2 + $0x8] sm:$0xff] %vm1217, %v2760
      %2808 = vst.msk [vmem:[#allocation2 + $0x20] sm:$0xff] %vm1217, %v2762
      %2809 = vst.msk [vmem:[#allocation2 + $0x38] sm:$0xff] %vm1217, %v2764
      %2810 = vst.msk [vmem:[#allocation2 + $0x50] sm:$0xff] %vm1217, %v2766
      %2811 = vst.msk [vmem:[#allocation2 + $0x68] sm:$0xff] %vm1217, %v2768
      %2812 = vst.msk [vmem:[#allocation2 + $0x80] sm:$0xff] %vm1217, %v2770
      %2813 = vst.msk [vmem:[#allocation2 + $0x98] sm:$0xff] %vm1217, %v2772
      %2814 = vst.msk [vmem:[#allocation2 + $0xb0] sm:$0xff] %vm1217, %v2774
      %2815 = vst.msk [vmem:[#allocation2 + $0xc8] sm:$0xff] %vm1217, %v2776
      %2816 = vst.msk [vmem:[#allocation2 + $0xe0] sm:$0xff] %vm1217, %v2778
      %2817 = vst.msk [vmem:[#allocation2 + $0xf8] sm:$0xff] %vm1217, %v2780
      %2818 = vst.msk [vmem:[#allocation2 + $0x110] sm:$0xff] %vm1217, %v2782
      %2819 = vst.msk [vmem:[#allocation2 + $0x128] sm:$0xff] %vm1217, %v2784
      %2820 = vst.msk [vmem:[#allocation2 + $0x140] sm:$0xff] %vm1217, %v2786
      %2821 = vst.msk [vmem:[#allocation2 + $0x158] sm:$0xff] %vm1217, %v2788
      %2822 = vst.msk [vmem:[#allocation2 + $0x170] sm:$0xff] %vm1217, %v2790
      %v2823 = vld [vmem:[%s165 + $0x10] sm:$0x8]
      %v2824 = vld [vmem:[%s165 + $0x14] sm:$0xf]
      %v2825 = vld [vmem:[%s165 + $0x18] sm:$0xf]
      %v2826 = vld [vmem:[%s165 + $0x1c] sm:$0xf]
      %v2827 = vld [vmem:[%s165 + $0x20] sm:$0xf]
      %v2828 = vld [vmem:[%s165 + $0x24] sm:$0xf]
      %v2829 = vld [vmem:[%s165 + $0x28] sm:$0xf]
      %v2830 = vld [vmem:[%s165 + $0x2c] sm:$0xf]
      %v2831 = vld [vmem:[%s165 + $0x30] sm:$0xf]
      %v2832 = vld [vmem:[%s165 + $0x34] sm:$0xf]
      %v2833 = vld [vmem:[%s165 + $0x38] sm:$0xf]
      %v2834 = vld [vmem:[%s165 + $0x3c] sm:$0xf]
      %v2835 = vld [vmem:[%s165 + $0x40] sm:$0xf]
      %v2836 = vld [vmem:[%s165 + $0x44] sm:$0xf]
      %v2837 = vld [vmem:[%s165 + $0x48] sm:$0xf]
      %v2838 = vld [vmem:[%s165 + $0x4c] sm:$0xf]
      %v2839 = vld [vmem:[%s165 + $0x50] sm:$0xf]
      %v2840 = vld [vmem:[%s165 + $0x54] sm:$0xf]
      %v2841 = vld [vmem:[%s165 + $0x58] sm:$0xf]
      %v2842 = vld [vmem:[%s165 + $0x5c] sm:$0xf]
      %v2843 = vld [vmem:[%s165 + $0x60] sm:$0xf]
      %v2844 = vld [vmem:[%s165 + $0x64] sm:$0xf]
      %v2845 = vld [vmem:[%s165 + $0x68] sm:$0xf]
      %v2846 = vld [vmem:[%s165 + $0x6c] sm:$0xf]
      %v2847 = vld [vmem:[%s165 + $0x70] sm:$0xf]
      %v2848 = vld [vmem:[%s165 + $0x74] sm:$0xf]
      %v2849 = vld [vmem:[%s165 + $0x78] sm:$0xf]
      %v2850 = vld [vmem:[%s165 + $0x7c] sm:$0xf]
      %v2851 = vld [vmem:[%s165 + $0x80] sm:$0xf]
      %v2852 = vld [vmem:[%s165 + $0x84] sm:$0xf]
      %v2853 = vld [vmem:[%s165 + $0x88] sm:$0xf]
      %v2854 = vld [vmem:[%s165 + $0x8c] sm:$0xf]
      %v2855 = vld [vmem:[%s165 + $0x90] sm:$0xf]
      %v2856 = vsel %vm722, %v2823, 0
      %v2857 = vsel %vm723, %v2824, 0
      %v2858 = vsel %vm724, %v2825, 0
      %v2859 = vsel %vm725, %v2826, 0
      %v2860 = vsel %vm726, %v2827, 0
      %v2861 = vsel %vm727, %v2828, 0
      %v2862 = vsel %vm728, %v2829, 0
      %v2863 = vsel %vm729, %v2830, 0
      %v2864 = vsel %vm730, %v2831, 0
      %v2865 = vsel %vm731, %v2832, 0
      %v2866 = vsel %vm732, %v2833, 0
      %v2867 = vsel %vm733, %v2834, 0
      %v2868 = vsel %vm734, %v2835, 0
      %v2869 = vsel %vm735, %v2836, 0
      %v2870 = vsel %vm736, %v2837, 0
      %v2871 = vsel %vm737, %v2838, 0
      %v2872 = vsel %vm738, %v2839, 0
      %v2873 = vsel %vm739, %v2840, 0
      %v2874 = vsel %vm740, %v2841, 0
      %v2875 = vsel %vm741, %v2842, 0
      %v2876 = vsel %vm742, %v2843, 0
      %v2877 = vsel %vm743, %v2844, 0
      %v2878 = vsel %vm744, %v2845, 0
      %v2879 = vsel %vm745, %v2846, 0
      %v2880 = vsel %vm746, %v2847, 0
      %v2881 = vsel %vm747, %v2848, 0
      %v2882 = vsel %vm748, %v2849, 0
      %v2883 = vsel %vm749, %v2850, 0
      %v2884 = vsel %vm750, %v2851, 0
      %v2885 = vsel %vm751, %v2852, 0
      %v2886 = vsel %vm752, %v2853, 0
      %v2887 = vsel %vm753, %v2854, 0
      %v2888 = vsel %vm754, %v2855, 0
      %v2922 = vunpack.c.l.b16 %v2856
      %v2923 = vunpack.c.l.b16 %v2857
      %v2924 = vunpack.c.l.b16 %v2858
      %v2925 = vunpack.c.l.b16 %v2859
      %v2926 = vunpack.c.l.b16 %v2860
      %v2927 = vunpack.c.l.b16 %v2861
      %v2928 = vunpack.c.l.b16 %v2862
      %v2929 = vunpack.c.l.b16 %v2863
      %v2930 = vunpack.c.l.b16 %v2864
      %v2931 = vunpack.c.l.b16 %v2865
      %v2932 = vunpack.c.l.b16 %v2866
      %v2933 = vunpack.c.l.b16 %v2867
      %v2934 = vunpack.c.l.b16 %v2868
      %v2935 = vunpack.c.l.b16 %v2869
      %v2936 = vunpack.c.l.b16 %v2870
      %v2937 = vunpack.c.l.b16 %v2871
      %v2938 = vunpack.c.l.b16 %v2872
      %v2939 = vunpack.c.l.b16 %v2873
      %v2940 = vunpack.c.l.b16 %v2874
      %v2941 = vunpack.c.l.b16 %v2875
      %v2942 = vunpack.c.l.b16 %v2876
      %v2943 = vunpack.c.l.b16 %v2877
      %v2944 = vunpack.c.l.b16 %v2878
      %v2945 = vunpack.c.l.b16 %v2879
      %v2946 = vunpack.c.l.b16 %v2880
      %v2947 = vunpack.c.l.b16 %v2881
      %v2948 = vunpack.c.l.b16 %v2882
      %v2949 = vunpack.c.l.b16 %v2883
      %v2950 = vunpack.c.l.b16 %v2884
      %v2951 = vunpack.c.l.b16 %v2885
      %v2952 = vunpack.c.l.b16 %v2886
      %v2953 = vunpack.c.l.b16 %v2887
      %v2954 = vunpack.c.l.b16 %v2888
      %v2955 = vpack.c.b16 %v2923, %v2922
      %v2956 = vpack.c.b16 %v2925, %v2924
      %v2957 = vpack.c.b16 %v2927, %v2926
      %v2958 = vpack.c.b16 %v2929, %v2928
      %v2959 = vpack.c.b16 %v2931, %v2930
      %v2960 = vpack.c.b16 %v2933, %v2932
      %v2961 = vpack.c.b16 %v2935, %v2934
      %v2962 = vpack.c.b16 %v2937, %v2936
      %v2963 = vpack.c.b16 %v2939, %v2938
      %v2964 = vpack.c.b16 %v2941, %v2940
      %v2965 = vpack.c.b16 %v2943, %v2942
      %v2966 = vpack.c.b16 %v2945, %v2944
      %v2967 = vpack.c.b16 %v2947, %v2946
      %v2968 = vpack.c.b16 %v2949, %v2948
      %v2969 = vpack.c.b16 %v2951, %v2950
      %v2970 = vpack.c.b16 %v2953, %v2952
      %v2971 = vpack.c.b16 %v2954, %v2954
      %v2973 = vshrl.u32 %v2955, 16
      %v2975 = vrot.slane %v2973, 3
      %v2976 = vshll.u32 %v2955, 16
      %v2978 = vrot.slane %v2976, 4
      %v2979 = vor.u32 %v2975, %v2978
      %v2981 = vshrl.u32 %v2956, 16
      %v2983 = vrot.slane %v2981, 3
      %v2984 = vshll.u32 %v2956, 16
      %v2986 = vrot.slane %v2984, 4
      %v2987 = vor.u32 %v2983, %v2986
      %v2988 = vsel %vm871, %v2979, %v2987
      %v2990 = vshrl.u32 %v2957, 16
      %v2992 = vrot.slane %v2990, 3
      %v2993 = vshll.u32 %v2957, 16
      %v2995 = vrot.slane %v2993, 4
      %v2996 = vor.u32 %v2992, %v2995
      %v2997 = vsel %vm871, %v2987, %v2996
      %v2999 = vshrl.u32 %v2958, 16
      %v3001 = vrot.slane %v2999, 3
      %v3002 = vshll.u32 %v2958, 16
      %v3004 = vrot.slane %v3002, 4
      %v3005 = vor.u32 %v3001, %v3004
      %v3006 = vsel %vm871, %v2996, %v3005
      %v3008 = vshrl.u32 %v2959, 16
      %v3010 = vrot.slane %v3008, 3
      %v3011 = vshll.u32 %v2959, 16
      %v3013 = vrot.slane %v3011, 4
      %v3014 = vor.u32 %v3010, %v3013
      %v3015 = vsel %vm871, %v3005, %v3014
      %v3017 = vshrl.u32 %v2960, 16
      %v3019 = vrot.slane %v3017, 3
      %v3020 = vshll.u32 %v2960, 16
      %v3022 = vrot.slane %v3020, 4
      %v3023 = vor.u32 %v3019, %v3022
      %v3024 = vsel %vm871, %v3014, %v3023
      %v3026 = vshrl.u32 %v2961, 16
      %v3028 = vrot.slane %v3026, 3
      %v3029 = vshll.u32 %v2961, 16
      %v3031 = vrot.slane %v3029, 4
      %v3032 = vor.u32 %v3028, %v3031
      %v3033 = vsel %vm871, %v3023, %v3032
      %v3035 = vshrl.u32 %v2962, 16
      %v3037 = vrot.slane %v3035, 3
      %v3038 = vshll.u32 %v2962, 16
      %v3040 = vrot.slane %v3038, 4
      %v3041 = vor.u32 %v3037, %v3040
      %v3042 = vsel %vm871, %v3032, %v3041
      %v3044 = vshrl.u32 %v2963, 16
      %v3046 = vrot.slane %v3044, 3
      %v3047 = vshll.u32 %v2963, 16
      %v3049 = vrot.slane %v3047, 4
      %v3050 = vor.u32 %v3046, %v3049
      %v3051 = vsel %vm871, %v3041, %v3050
      %v3053 = vshrl.u32 %v2964, 16
      %v3055 = vrot.slane %v3053, 3
      %v3056 = vshll.u32 %v2964, 16
      %v3058 = vrot.slane %v3056, 4
      %v3059 = vor.u32 %v3055, %v3058
      %v3060 = vsel %vm871, %v3050, %v3059
      %v3062 = vshrl.u32 %v2965, 16
      %v3064 = vrot.slane %v3062, 3
      %v3065 = vshll.u32 %v2965, 16
      %v3067 = vrot.slane %v3065, 4
      %v3068 = vor.u32 %v3064, %v3067
      %v3069 = vsel %vm871, %v3059, %v3068
      %v3071 = vshrl.u32 %v2966, 16
      %v3073 = vrot.slane %v3071, 3
      %v3074 = vshll.u32 %v2966, 16
      %v3076 = vrot.slane %v3074, 4
      %v3077 = vor.u32 %v3073, %v3076
      %v3078 = vsel %vm871, %v3068, %v3077
      %v3080 = vshrl.u32 %v2967, 16
      %v3082 = vrot.slane %v3080, 3
      %v3083 = vshll.u32 %v2967, 16
      %v3085 = vrot.slane %v3083, 4
      %v3086 = vor.u32 %v3082, %v3085
      %v3087 = vsel %vm871, %v3077, %v3086
      %v3089 = vshrl.u32 %v2968, 16
      %v3091 = vrot.slane %v3089, 3
      %v3092 = vshll.u32 %v2968, 16
      %v3094 = vrot.slane %v3092, 4
      %v3095 = vor.u32 %v3091, %v3094
      %v3096 = vsel %vm871, %v3086, %v3095
      %v3098 = vshrl.u32 %v2969, 16
      %v3100 = vrot.slane %v3098, 3
      %v3101 = vshll.u32 %v2969, 16
      %v3103 = vrot.slane %v3101, 4
      %v3104 = vor.u32 %v3100, %v3103
      %v3105 = vsel %vm871, %v3095, %v3104
      %v3107 = vshrl.u32 %v2970, 16
      %v3109 = vrot.slane %v3107, 3
      %v3110 = vshll.u32 %v2970, 16
      %v3112 = vrot.slane %v3110, 4
      %v3113 = vor.u32 %v3109, %v3112
      %v3114 = vsel %vm871, %v3104, %v3113
      %v3116 = vshrl.u32 %v2971, 16
      %v3118 = vrot.slane %v3116, 3
      %v3119 = vshll.u32 %v2971, 16
      %v3121 = vrot.slane %v3119, 4
      %v3122 = vor.u32 %v3118, %v3121
      %v3123 = vsel %vm871, %v3113, %v3122
      %3124 = vrot.lane.b32.xlu0 %v2988, 64
      %v3125 = vpop.permute.xlu0 %3124
      %3126 = vrot.lane.b32.xlu0 %v2997, 64
      %v3127 = vpop.permute.xlu0 %3126
      %3128 = vrot.lane.b32.xlu0 %v3006, 64
      %v3129 = vpop.permute.xlu0 %3128
      %3130 = vrot.lane.b32.xlu0 %v3015, 64
      %v3131 = vpop.permute.xlu0 %3130
      %3132 = vrot.lane.b32.xlu0 %v3024, 64
      %v3133 = vpop.permute.xlu0 %3132
      %3134 = vrot.lane.b32.xlu0 %v3033, 64
      %v3135 = vpop.permute.xlu0 %3134
      %3136 = vrot.lane.b32.xlu0 %v3042, 64
      %v3137 = vpop.permute.xlu0 %3136
      %3138 = vrot.lane.b32.xlu0 %v3051, 64
      %v3139 = vpop.permute.xlu0 %3138
      %3140 = vrot.lane.b32.xlu0 %v3060, 64
      %v3141 = vpop.permute.xlu0 %3140
      %3142 = vrot.lane.b32.xlu0 %v3069, 64
      %v3143 = vpop.permute.xlu0 %3142
      %3144 = vrot.lane.b32.xlu0 %v3078, 64
      %v3145 = vpop.permute.xlu0 %3144
      %3146 = vrot.lane.b32.xlu0 %v3087, 64
      %v3147 = vpop.permute.xlu0 %3146
      %3148 = vrot.lane.b32.xlu0 %v3096, 64
      %v3149 = vpop.permute.xlu0 %3148
      %3150 = vrot.lane.b32.xlu0 %v3105, 64
      %v3151 = vpop.permute.xlu0 %3150
      %3152 = vrot.lane.b32.xlu0 %v3114, 64
      %v3153 = vpop.permute.xlu0 %3152
      %3154 = vrot.lane.b32.xlu0 %v3123, 64
      %v3155 = vpop.permute.xlu0 %3154
      %3172 = vst.msk [vmem:[#allocation2 + $0x8] sm:$0xff] %vm1951, %v3125
      %3173 = vst.msk [vmem:[#allocation2 + $0x20] sm:$0xff] %vm1951, %v3127
      %3174 = vst.msk [vmem:[#allocation2 + $0x38] sm:$0xff] %vm1951, %v3129
      %3175 = vst.msk [vmem:[#allocation2 + $0x50] sm:$0xff] %vm1951, %v3131
      %3176 = vst.msk [vmem:[#allocation2 + $0x68] sm:$0xff] %vm1951, %v3133
      %3177 = vst.msk [vmem:[#allocation2 + $0x80] sm:$0xff] %vm1951, %v3135
      %3178 = vst.msk [vmem:[#allocation2 + $0x98] sm:$0xff] %vm1951, %v3137
      %3179 = vst.msk [vmem:[#allocation2 + $0xb0] sm:$0xff] %vm1951, %v3139
      %3180 = vst.msk [vmem:[#allocation2 + $0xc8] sm:$0xff] %vm1951, %v3141
      %3181 = vst.msk [vmem:[#allocation2 + $0xe0] sm:$0xff] %vm1951, %v3143
      %3182 = vst.msk [vmem:[#allocation2 + $0xf8] sm:$0xff] %vm1951, %v3145
      %3183 = vst.msk [vmem:[#allocation2 + $0x110] sm:$0xff] %vm1951, %v3147
      %3184 = vst.msk [vmem:[#allocation2 + $0x128] sm:$0xff] %vm1951, %v3149
      %3185 = vst.msk [vmem:[#allocation2 + $0x140] sm:$0xff] %vm1951, %v3151
      %3186 = vst.msk [vmem:[#allocation2 + $0x158] sm:$0xff] %vm1951, %v3153
      %3187 = vst.msk [vmem:[#allocation2 + $0x170] sm:$0xff] %vm1951, %v3155
      %v3188 = vld [vmem:[%s165 + $0x14] sm:$0xf]
      %v3189 = vld [vmem:[%s165 + $0x18] sm:$0xf]
      %v3190 = vld [vmem:[%s165 + $0x1c] sm:$0xf]
      %v3191 = vld [vmem:[%s165 + $0x20] sm:$0xf]
      %v3192 = vld [vmem:[%s165 + $0x24] sm:$0xf]
      %v3193 = vld [vmem:[%s165 + $0x28] sm:$0xf]
      %v3194 = vld [vmem:[%s165 + $0x2c] sm:$0xf]
      %v3195 = vld [vmem:[%s165 + $0x30] sm:$0xf]
      %v3196 = vld [vmem:[%s165 + $0x34] sm:$0xf]
      %v3197 = vld [vmem:[%s165 + $0x38] sm:$0xf]
      %v3198 = vld [vmem:[%s165 + $0x3c] sm:$0xf]
      %v3199 = vld [vmem:[%s165 + $0x40] sm:$0xf]
      %v3200 = vld [vmem:[%s165 + $0x44] sm:$0xf]
      %v3201 = vld [vmem:[%s165 + $0x48] sm:$0xf]
      %v3202 = vld [vmem:[%s165 + $0x4c] sm:$0xf]
      %v3203 = vld [vmem:[%s165 + $0x50] sm:$0xf]
      %v3204 = vld [vmem:[%s165 + $0x54] sm:$0xf]
      %v3205 = vld [vmem:[%s165 + $0x58] sm:$0xf]
      %v3206 = vld [vmem:[%s165 + $0x5c] sm:$0xf]
      %v3207 = vld [vmem:[%s165 + $0x60] sm:$0xf]
      %v3208 = vld [vmem:[%s165 + $0x64] sm:$0xf]
      %v3209 = vld [vmem:[%s165 + $0x68] sm:$0xf]
      %v3210 = vld [vmem:[%s165 + $0x6c] sm:$0xf]
      %v3211 = vld [vmem:[%s165 + $0x70] sm:$0xf]
      %v3212 = vld [vmem:[%s165 + $0x74] sm:$0xf]
      %v3213 = vld [vmem:[%s165 + $0x78] sm:$0xf]
      %v3214 = vld [vmem:[%s165 + $0x7c] sm:$0xf]
      %v3215 = vld [vmem:[%s165 + $0x80] sm:$0xf]
      %v3216 = vld [vmem:[%s165 + $0x84] sm:$0xf]
      %v3217 = vld [vmem:[%s165 + $0x88] sm:$0xf]
      %v3218 = vld [vmem:[%s165 + $0x8c] sm:$0xf]
      %v3219 = vld [vmem:[%s165 + $0x90] sm:$0xf]
      %v3252 = vunpack.c.l.b16 %v3188
      %v3253 = vunpack.c.l.b16 %v3189
      %v3254 = vunpack.c.l.b16 %v3190
      %v3255 = vunpack.c.l.b16 %v3191
      %v3256 = vunpack.c.l.b16 %v3192
      %v3257 = vunpack.c.l.b16 %v3193
      %v3258 = vunpack.c.l.b16 %v3194
      %v3259 = vunpack.c.l.b16 %v3195
      %v3260 = vunpack.c.l.b16 %v3196
      %v3261 = vunpack.c.l.b16 %v3197
      %v3262 = vunpack.c.l.b16 %v3198
      %v3263 = vunpack.c.l.b16 %v3199
      %v3264 = vunpack.c.l.b16 %v3200
      %v3265 = vunpack.c.l.b16 %v3201
      %v3266 = vunpack.c.l.b16 %v3202
      %v3267 = vunpack.c.l.b16 %v3203
      %v3268 = vunpack.c.l.b16 %v3204
      %v3269 = vunpack.c.l.b16 %v3205
      %v3270 = vunpack.c.l.b16 %v3206
      %v3271 = vunpack.c.l.b16 %v3207
      %v3272 = vunpack.c.l.b16 %v3208
      %v3273 = vunpack.c.l.b16 %v3209
      %v3274 = vunpack.c.l.b16 %v3210
      %v3275 = vunpack.c.l.b16 %v3211
      %v3276 = vunpack.c.l.b16 %v3212
      %v3277 = vunpack.c.l.b16 %v3213
      %v3278 = vunpack.c.l.b16 %v3214
      %v3279 = vunpack.c.l.b16 %v3215
      %v3280 = vunpack.c.l.b16 %v3216
      %v3281 = vunpack.c.l.b16 %v3217
      %v3282 = vunpack.c.l.b16 %v3218
      %v3283 = vunpack.c.l.b16 %v3219
      %v3284 = vpack.c.b16 %v3253, %v3252
      %v3285 = vpack.c.b16 %v3255, %v3254
      %v3286 = vpack.c.b16 %v3257, %v3256
      %v3287 = vpack.c.b16 %v3259, %v3258
      %v3288 = vpack.c.b16 %v3261, %v3260
      %v3289 = vpack.c.b16 %v3263, %v3262
      %v3290 = vpack.c.b16 %v3265, %v3264
      %v3291 = vpack.c.b16 %v3267, %v3266
      %v3292 = vpack.c.b16 %v3269, %v3268
      %v3293 = vpack.c.b16 %v3271, %v3270
      %v3294 = vpack.c.b16 %v3273, %v3272
      %v3295 = vpack.c.b16 %v3275, %v3274
      %v3296 = vpack.c.b16 %v3277, %v3276
      %v3297 = vpack.c.b16 %v3279, %v3278
      %v3298 = vpack.c.b16 %v3281, %v3280
      %v3299 = vpack.c.b16 %v3283, %v3282
      %3300 = vrot.lane.b32.xlu0 %v3284, 96
      %v3301 = vpop.permute.xlu0 %3300
      %3302 = vrot.lane.b32.xlu0 %v3285, 96
      %v3303 = vpop.permute.xlu0 %3302
      %3304 = vrot.lane.b32.xlu0 %v3286, 96
      %v3305 = vpop.permute.xlu0 %3304
      %3306 = vrot.lane.b32.xlu0 %v3287, 96
      %v3307 = vpop.permute.xlu0 %3306
      %3308 = vrot.lane.b32.xlu0 %v3288, 96
      %v3309 = vpop.permute.xlu0 %3308
      %3310 = vrot.lane.b32.xlu0 %v3289, 96
      %v3311 = vpop.permute.xlu0 %3310
      %3312 = vrot.lane.b32.xlu0 %v3290, 96
      %v3313 = vpop.permute.xlu0 %3312
      %3314 = vrot.lane.b32.xlu0 %v3291, 96
      %v3315 = vpop.permute.xlu0 %3314
      %3316 = vrot.lane.b32.xlu0 %v3292, 96
      %v3317 = vpop.permute.xlu0 %3316
      %3318 = vrot.lane.b32.xlu0 %v3293, 96
      %v3319 = vpop.permute.xlu0 %3318
      %3320 = vrot.lane.b32.xlu0 %v3294, 96
      %v3321 = vpop.permute.xlu0 %3320
      %3322 = vrot.lane.b32.xlu0 %v3295, 96
      %v3323 = vpop.permute.xlu0 %3322
      %3324 = vrot.lane.b32.xlu0 %v3296, 96
      %v3325 = vpop.permute.xlu0 %3324
      %3326 = vrot.lane.b32.xlu0 %v3297, 96
      %v3327 = vpop.permute.xlu0 %3326
      %3328 = vrot.lane.b32.xlu0 %v3298, 96
      %v3329 = vpop.permute.xlu0 %3328
      %3330 = vrot.lane.b32.xlu0 %v3299, 96
      %v3331 = vpop.permute.xlu0 %3330
      %3348 = vst.msk [vmem:[#allocation2 + $0x8] sm:$0xff] %vm2317, %v3301
      %3349 = vst.msk [vmem:[#allocation2 + $0x20] sm:$0xff] %vm2317, %v3303
      %3350 = vst.msk [vmem:[#allocation2 + $0x38] sm:$0xff] %vm2317, %v3305
      %3351 = vst.msk [vmem:[#allocation2 + $0x50] sm:$0xff] %vm2317, %v3307
      %3352 = vst.msk [vmem:[#allocation2 + $0x68] sm:$0xff] %vm2317, %v3309
      %3353 = vst.msk [vmem:[#allocation2 + $0x80] sm:$0xff] %vm2317, %v3311
      %3354 = vst.msk [vmem:[#allocation2 + $0x98] sm:$0xff] %vm2317, %v3313
      %3355 = vst.msk [vmem:[#allocation2 + $0xb0] sm:$0xff] %vm2317, %v3315
      %3356 = vst.msk [vmem:[#allocation2 + $0xc8] sm:$0xff] %vm2317, %v3317
      %3357 = vst.msk [vmem:[#allocation2 + $0xe0] sm:$0xff] %vm2317, %v3319
      %3358 = vst.msk [vmem:[#allocation2 + $0xf8] sm:$0xff] %vm2317, %v3321
      %3359 = vst.msk [vmem:[#allocation2 + $0x110] sm:$0xff] %vm2317, %v3323
      %3360 = vst.msk [vmem:[#allocation2 + $0x128] sm:$0xff] %vm2317, %v3325
      %3361 = vst.msk [vmem:[#allocation2 + $0x140] sm:$0xff] %vm2317, %v3327
      %3362 = vst.msk [vmem:[#allocation2 + $0x158] sm:$0xff] %vm2317, %v3329
      %3363 = vst.msk [vmem:[#allocation2 + $0x170] sm:$0xff] %vm2317, %v3331
      %v3364 = vld [vmem:[%s165 + $0x14] sm:$0xf]
      %v3365 = vld [vmem:[%s165 + $0x18] sm:$0xf]
      %v3366 = vld [vmem:[%s165 + $0x1c] sm:$0xf]
      %v3367 = vld [vmem:[%s165 + $0x20] sm:$0xf]
      %v3368 = vld [vmem:[%s165 + $0x24] sm:$0xf]
      %v3369 = vld [vmem:[%s165 + $0x28] sm:$0xf]
      %v3370 = vld [vmem:[%s165 + $0x2c] sm:$0xf]
      %v3371 = vld [vmem:[%s165 + $0x30] sm:$0xf]
      %v3372 = vld [vmem:[%s165 + $0x34] sm:$0xf]
      %v3373 = vld [vmem:[%s165 + $0x38] sm:$0xf]
      %v3374 = vld [vmem:[%s165 + $0x3c] sm:$0xf]
      %v3375 = vld [vmem:[%s165 + $0x40] sm:$0xf]
      %v3376 = vld [vmem:[%s165 + $0x44] sm:$0xf]
      %v3377 = vld [vmem:[%s165 + $0x48] sm:$0xf]
      %v3378 = vld [vmem:[%s165 + $0x4c] sm:$0xf]
      %v3379 = vld [vmem:[%s165 + $0x50] sm:$0xf]
      %v3380 = vld [vmem:[%s165 + $0x54] sm:$0xf]
      %v3381 = vld [vmem:[%s165 + $0x58] sm:$0xf]
      %v3382 = vld [vmem:[%s165 + $0x5c] sm:$0xf]
      %v3383 = vld [vmem:[%s165 + $0x60] sm:$0xf]
      %v3384 = vld [vmem:[%s165 + $0x64] sm:$0xf]
      %v3385 = vld [vmem:[%s165 + $0x68] sm:$0xf]
      %v3386 = vld [vmem:[%s165 + $0x6c] sm:$0xf]
      %v3387 = vld [vmem:[%s165 + $0x70] sm:$0xf]
      %v3388 = vld [vmem:[%s165 + $0x74] sm:$0xf]
      %v3389 = vld [vmem:[%s165 + $0x78] sm:$0xf]
      %v3390 = vld [vmem:[%s165 + $0x7c] sm:$0xf]
      %v3391 = vld [vmem:[%s165 + $0x80] sm:$0xf]
      %v3392 = vld [vmem:[%s165 + $0x84] sm:$0xf]
      %v3393 = vld [vmem:[%s165 + $0x88] sm:$0xf]
      %v3394 = vld [vmem:[%s165 + $0x8c] sm:$0xf]
      %v3395 = vld [vmem:[%s165 + $0x90] sm:$0xf]
      %v3396 = vld [vmem:[%s165 + $0x94] sm:$0x1]
      %v3397 = vsel %vm1621, %v3364, 0
      %v3398 = vsel %vm1622, %v3365, 0
      %v3399 = vsel %vm1623, %v3366, 0
      %v3400 = vsel %vm1624, %v3367, 0
      %v3401 = vsel %vm1625, %v3368, 0
      %v3402 = vsel %vm1626, %v3369, 0
      %v3403 = vsel %vm1627, %v3370, 0
      %v3404 = vsel %vm1628, %v3371, 0
      %v3405 = vsel %vm1629, %v3372, 0
      %v3406 = vsel %vm1630, %v3373, 0
      %v3407 = vsel %vm1631, %v3374, 0
      %v3408 = vsel %vm1632, %v3375, 0
      %v3409 = vsel %vm1633, %v3376, 0
      %v3410 = vsel %vm1634, %v3377, 0
      %v3411 = vsel %vm1635, %v3378, 0
      %v3412 = vsel %vm1636, %v3379, 0
      %v3413 = vsel %vm1637, %v3380, 0
      %v3414 = vsel %vm1638, %v3381, 0
      %v3415 = vsel %vm1639, %v3382, 0
      %v3416 = vsel %vm1640, %v3383, 0
      %v3417 = vsel %vm1641, %v3384, 0
      %v3418 = vsel %vm1642, %v3385, 0
      %v3419 = vsel %vm1643, %v3386, 0
      %v3420 = vsel %vm1644, %v3387, 0
      %v3421 = vsel %vm1645, %v3388, 0
      %v3422 = vsel %vm1646, %v3389, 0
      %v3423 = vsel %vm1647, %v3390, 0
      %v3424 = vsel %vm1648, %v3391, 0
      %v3425 = vsel %vm1649, %v3392, 0
      %v3426 = vsel %vm1650, %v3393, 0
      %v3427 = vsel %vm1651, %v3394, 0
      %v3428 = vsel %vm1652, %v3395, 0
      %v3429 = vsel %vm1653, %v3396, 0
      %v3463 = vunpack.c.l.b16 %v3397
      %v3464 = vunpack.c.l.b16 %v3398
      %v3465 = vunpack.c.l.b16 %v3399
      %v3466 = vunpack.c.l.b16 %v3400
      %v3467 = vunpack.c.l.b16 %v3401
      %v3468 = vunpack.c.l.b16 %v3402
      %v3469 = vunpack.c.l.b16 %v3403
      %v3470 = vunpack.c.l.b16 %v3404
      %v3471 = vunpack.c.l.b16 %v3405
      %v3472 = vunpack.c.l.b16 %v3406
      %v3473 = vunpack.c.l.b16 %v3407
      %v3474 = vunpack.c.l.b16 %v3408
      %v3475 = vunpack.c.l.b16 %v3409
      %v3476 = vunpack.c.l.b16 %v3410
      %v3477 = vunpack.c.l.b16 %v3411
      %v3478 = vunpack.c.l.b16 %v3412
      %v3479 = vunpack.c.l.b16 %v3413
      %v3480 = vunpack.c.l.b16 %v3414
      %v3481 = vunpack.c.l.b16 %v3415
      %v3482 = vunpack.c.l.b16 %v3416
      %v3483 = vunpack.c.l.b16 %v3417
      %v3484 = vunpack.c.l.b16 %v3418
      %v3485 = vunpack.c.l.b16 %v3419
      %v3486 = vunpack.c.l.b16 %v3420
      %v3487 = vunpack.c.l.b16 %v3421
      %v3488 = vunpack.c.l.b16 %v3422
      %v3489 = vunpack.c.l.b16 %v3423
      %v3490 = vunpack.c.l.b16 %v3424
      %v3491 = vunpack.c.l.b16 %v3425
      %v3492 = vunpack.c.l.b16 %v3426
      %v3493 = vunpack.c.l.b16 %v3427
      %v3494 = vunpack.c.l.b16 %v3428
      %v3495 = vunpack.c.l.b16 %v3429
      %v3496 = vpack.c.b16 %v3464, %v3463
      %v3497 = vpack.c.b16 %v3466, %v3465
      %v3498 = vpack.c.b16 %v3468, %v3467
      %v3499 = vpack.c.b16 %v3470, %v3469
      %v3500 = vpack.c.b16 %v3472, %v3471
      %v3501 = vpack.c.b16 %v3474, %v3473
      %v3502 = vpack.c.b16 %v3476, %v3475
      %v3503 = vpack.c.b16 %v3478, %v3477
      %v3504 = vpack.c.b16 %v3480, %v3479
      %v3505 = vpack.c.b16 %v3482, %v3481
      %v3506 = vpack.c.b16 %v3484, %v3483
      %v3507 = vpack.c.b16 %v3486, %v3485
      %v3508 = vpack.c.b16 %v3488, %v3487
      %v3509 = vpack.c.b16 %v3490, %v3489
      %v3510 = vpack.c.b16 %v3492, %v3491
      %v3511 = vpack.c.b16 %v3494, %v3493
      %v3512 = vpack.c.b16 %v3495, %v3495
      %v3514 = vshrl.u32 %v3496, 16
      %v3516 = vshll.u32 %v3496, 16
      %v3518 = vrot.slane %v3516, 1
      %v3519 = vor.u32 %v3514, %v3518
      %v3521 = vshll.u32 %v3497, 16
      %v3523 = vrot.slane %v3521, 1
      %v3524 = vsel %vm1770, %v3519, %v3523
      %v3525 = vshrl.u32 %v3497, 16
      %v3527 = vor.u32 %v3525, %v3523
      %v3529 = vshll.u32 %v3498, 16
      %v3531 = vrot.slane %v3529, 1
      %v3532 = vsel %vm1770, %v3527, %v3531
      %v3533 = vshrl.u32 %v3498, 16
      %v3535 = vor.u32 %v3533, %v3531
      %v3537 = vshll.u32 %v3499, 16
      %v3539 = vrot.slane %v3537, 1
      %v3540 = vsel %vm1770, %v3535, %v3539
      %v3541 = vshrl.u32 %v3499, 16
      %v3543 = vor.u32 %v3541, %v3539
      %v3545 = vshll.u32 %v3500, 16
      %v3547 = vrot.slane %v3545, 1
      %v3548 = vsel %vm1770, %v3543, %v3547
      %v3549 = vshrl.u32 %v3500, 16
      %v3551 = vor.u32 %v3549, %v3547
      %v3553 = vshll.u32 %v3501, 16
      %v3555 = vrot.slane %v3553, 1
      %v3556 = vsel %vm1770, %v3551, %v3555
      %v3557 = vshrl.u32 %v3501, 16
      %v3559 = vor.u32 %v3557, %v3555
      %v3561 = vshll.u32 %v3502, 16
      %v3563 = vrot.slane %v3561, 1
      %v3564 = vsel %vm1770, %v3559, %v3563
      %v3565 = vshrl.u32 %v3502, 16
      %v3567 = vor.u32 %v3565, %v3563
      %v3569 = vshll.u32 %v3503, 16
      %v3571 = vrot.slane %v3569, 1
      %v3572 = vsel %vm1770, %v3567, %v3571
      %v3573 = vshrl.u32 %v3503, 16
      %v3575 = vor.u32 %v3573, %v3571
      %v3577 = vshll.u32 %v3504, 16
      %v3579 = vrot.slane %v3577, 1
      %v3580 = vsel %vm1770, %v3575, %v3579
      %v3581 = vshrl.u32 %v3504, 16
      %v3583 = vor.u32 %v3581, %v3579
      %v3585 = vshll.u32 %v3505, 16
      %v3587 = vrot.slane %v3585, 1
      %v3588 = vsel %vm1770, %v3583, %v3587
      %v3589 = vshrl.u32 %v3505, 16
      %v3591 = vor.u32 %v3589, %v3587
      %v3593 = vshll.u32 %v3506, 16
      %v3595 = vrot.slane %v3593, 1
      %v3596 = vsel %vm1770, %v3591, %v3595
      %v3597 = vshrl.u32 %v3506, 16
      %v3599 = vor.u32 %v3597, %v3595
      %v3601 = vshll.u32 %v3507, 16
      %v3603 = vrot.slane %v3601, 1
      %v3604 = vsel %vm1770, %v3599, %v3603
      %v3605 = vshrl.u32 %v3507, 16
      %v3607 = vor.u32 %v3605, %v3603
      %v3609 = vshll.u32 %v3508, 16
      %v3611 = vrot.slane %v3609, 1
      %v3612 = vsel %vm1770, %v3607, %v3611
      %v3613 = vshrl.u32 %v3508, 16
      %v3615 = vor.u32 %v3613, %v3611
      %v3617 = vshll.u32 %v3509, 16
      %v3619 = vrot.slane %v3617, 1
      %v3620 = vsel %vm1770, %v3615, %v3619
      %v3621 = vshrl.u32 %v3509, 16
      %v3623 = vor.u32 %v3621, %v3619
      %v3625 = vshll.u32 %v3510, 16
      %v3627 = vrot.slane %v3625, 1
      %v3628 = vsel %vm1770, %v3623, %v3627
      %v3629 = vshrl.u32 %v3510, 16
      %v3631 = vor.u32 %v3629, %v3627
      %v3633 = vshll.u32 %v3511, 16
      %v3635 = vrot.slane %v3633, 1
      %v3636 = vsel %vm1770, %v3631, %v3635
      %v3637 = vshrl.u32 %v3511, 16
      %v3639 = vor.u32 %v3637, %v3635
      %v3641 = vshll.u32 %v3512, 16
      %v3643 = vrot.slane %v3641, 1
      %v3644 = vsel %vm1770, %v3639, %v3643
      %3661 = vst.msk [vmem:[#allocation2 + $0x10] sm:$0xff] %vm1040, %v3524
      %3662 = vst.msk [vmem:[#allocation2 + $0x28] sm:$0xff] %vm1040, %v3532
      %3663 = vst.msk [vmem:[#allocation2 + $0x40] sm:$0xff] %vm1040, %v3540
      %3664 = vst.msk [vmem:[#allocation2 + $0x58] sm:$0xff] %vm1040, %v3548
      %3665 = vst.msk [vmem:[#allocation2 + $0x70] sm:$0xff] %vm1040, %v3556
      %3666 = vst.msk [vmem:[#allocation2 + $0x88] sm:$0xff] %vm1040, %v3564
      %3667 = vst.msk [vmem:[#allocation2 + $0xa0] sm:$0xff] %vm1040, %v3572
      %3668 = vst.msk [vmem:[#allocation2 + $0xb8] sm:$0xff] %vm1040, %v3580
      %3669 = vst.msk [vmem:[#allocation2 + $0xd0] sm:$0xff] %vm1040, %v3588
      %3670 = vst.msk [vmem:[#allocation2 + $0xe8] sm:$0xff] %vm1040, %v3596
      %3671 = vst.msk [vmem:[#allocation2 + $0x100] sm:$0xff] %vm1040, %v3604
      %3672 = vst.msk [vmem:[#allocation2 + $0x118] sm:$0xff] %vm1040, %v3612
      %3673 = vst.msk [vmem:[#allocation2 + $0x130] sm:$0xff] %vm1040, %v3620
      %3674 = vst.msk [vmem:[#allocation2 + $0x148] sm:$0xff] %vm1040, %v3628
      %3675 = vst.msk [vmem:[#allocation2 + $0x160] sm:$0xff] %vm1040, %v3636
      %3676 = vst.msk [vmem:[#allocation2 + $0x178] sm:$0xff] %vm1040, %v3644
      %v3677 = vld [vmem:[#allocation2] sm:$0xff]
      %v3678 = vld [vmem:[#allocation2 + $0x8] sm:$0xff]
      %v3679 = vld [vmem:[#allocation2 + $0x10] sm:$0xff]
      %v3680 = vld [vmem:[#allocation2 + $0x18] sm:$0xff]
      %v3681 = vld [vmem:[#allocation2 + $0x20] sm:$0xff]
      %v3682 = vld [vmem:[#allocation2 + $0x28] sm:$0xff]
      %v3683 = vld [vmem:[#allocation2 + $0x30] sm:$0xff]
      %v3684 = vld [vmem:[#allocation2 + $0x38] sm:$0xff]
      %v3685 = vld [vmem:[#allocation2 + $0x40] sm:$0xff]
      %v3686 = vld [vmem:[#allocation2 + $0x48] sm:$0xff]
      %v3687 = vld [vmem:[#allocation2 + $0x50] sm:$0xff]
      %v3688 = vld [vmem:[#allocation2 + $0x58] sm:$0xff]
      %v3689 = vld [vmem:[#allocation2 + $0x60] sm:$0xff]
      %v3690 = vld [vmem:[#allocation2 + $0x68] sm:$0xff]
      %v3691 = vld [vmem:[#allocation2 + $0x70] sm:$0xff]
      %v3692 = vld [vmem:[#allocation2 + $0x78] sm:$0xff]
      %v3693 = vld [vmem:[#allocation2 + $0x80] sm:$0xff]
      %v3694 = vld [vmem:[#allocation2 + $0x88] sm:$0xff]
      %v3695 = vld [vmem:[#allocation2 + $0x90] sm:$0xff]
      %v3696 = vld [vmem:[#allocation2 + $0x98] sm:$0xff]
      %v3697 = vld [vmem:[#allocation2 + $0xa0] sm:$0xff]
      %v3698 = vld [vmem:[#allocation2 + $0xa8] sm:$0xff]
      %v3699 = vld [vmem:[#allocation2 + $0xb0] sm:$0xff]
      %v3700 = vld [vmem:[#allocation2 + $0xb8] sm:$0xff]
      %v3701 = vld [vmem:[#allocation2 + $0xc0] sm:$0xff]
      %v3702 = vld [vmem:[#allocation2 + $0xc8] sm:$0xff]
      %v3703 = vld [vmem:[#allocation2 + $0xd0] sm:$0xff]
      %v3704 = vld [vmem:[#allocation2 + $0xd8] sm:$0xff]
      %v3705 = vld [vmem:[#allocation2 + $0xe0] sm:$0xff]
      %v3706 = vld [vmem:[#allocation2 + $0xe8] sm:$0xff]
      %v3707 = vld [vmem:[#allocation2 + $0xf0] sm:$0xff]
      %v3708 = vld [vmem:[#allocation2 + $0xf8] sm:$0xff]
      %v3709 = vld [vmem:[#allocation2 + $0x100] sm:$0xff]
      %v3710 = vld [vmem:[#allocation2 + $0x108] sm:$0xff]
      %v3711 = vld [vmem:[#allocation2 + $0x110] sm:$0xff]
      %v3712 = vld [vmem:[#allocation2 + $0x118] sm:$0xff]
      %v3713 = vld [vmem:[#allocation2 + $0x120] sm:$0xff]
      %v3714 = vld [vmem:[#allocation2 + $0x128] sm:$0xff]
      %v3715 = vld [vmem:[#allocation2 + $0x130] sm:$0xff]
      %v3716 = vld [vmem:[#allocation2 + $0x138] sm:$0xff]
      %v3717 = vld [vmem:[#allocation2 + $0x140] sm:$0xff]
      %v3718 = vld [vmem:[#allocation2 + $0x148] sm:$0xff]
      %v3719 = vld [vmem:[#allocation2 + $0x150] sm:$0xff]
      %v3720 = vld [vmem:[#allocation2 + $0x158] sm:$0xff]
      %v3721 = vld [vmem:[#allocation2 + $0x160] sm:$0xff]
      %v3722 = vld [vmem:[#allocation2 + $0x168] sm:$0xff]
      %v3723 = vld [vmem:[#allocation2 + $0x170] sm:$0xff]
      %v3724 = vld [vmem:[#allocation2 + $0x178] sm:$0xff]
      %v3725 = vld [vmem:[%s1] sm:$0xf]
      %v3726 = vld [vmem:[%s1 + $0x4] sm:$0xf]
      %v3727 = vld [vmem:[%s1 + $0x8] sm:$0xf]
      %v3728 = vld [vmem:[%s1 + $0xc] sm:$0xf]
      %v3729 = vld [vmem:[%s1 + $0x10] sm:$0xf]
      %v3730 = vld [vmem:[%s1 + $0x14] sm:$0xf]
      %v3731 = vld [vmem:[%s1 + $0x18] sm:$0xf]
      %v3732 = vld [vmem:[%s1 + $0x1c] sm:$0xf]
      %v3733 = vld [vmem:[%s1 + $0x20] sm:$0xf]
      %v3734 = vld [vmem:[%s1 + $0x24] sm:$0xf]
      %v3735 = vld [vmem:[%s1 + $0x28] sm:$0xf]
      %v3736 = vld [vmem:[%s1 + $0x2c] sm:$0xf]
      %v3737 = vld [vmem:[%s1 + $0x30] sm:$0xf]
      %v3738 = vld [vmem:[%s1 + $0x34] sm:$0xf]
      %v3739 = vld [vmem:[%s1 + $0x38] sm:$0xf]
      %v3740 = vld [vmem:[%s1 + $0x3c] sm:$0xf]
      %v3741 = vld [vmem:[%s1 + $0x40] sm:$0xf]
      %v3742 = vld [vmem:[%s1 + $0x44] sm:$0xf]
      %v3743 = vld [vmem:[%s1 + $0x48] sm:$0xf]
      %v3744 = vld [vmem:[%s1 + $0x4c] sm:$0xf]
      %v3745 = vld [vmem:[%s1 + $0x50] sm:$0xf]
      %v3746 = vld [vmem:[%s1 + $0x54] sm:$0xf]
      %v3747 = vld [vmem:[%s1 + $0x58] sm:$0xf]
      %v3748 = vld [vmem:[%s1 + $0x5c] sm:$0xf]
      %v3749 = vld [vmem:[%s1 + $0x60] sm:$0xf]
      %v3750 = vld [vmem:[%s1 + $0x64] sm:$0xf]
      %v3751 = vld [vmem:[%s1 + $0x68] sm:$0xf]
      %v3752 = vld [vmem:[%s1 + $0x6c] sm:$0xf]
      %v3753 = vld [vmem:[%s1 + $0x70] sm:$0xf]
      %v3754 = vld [vmem:[%s1 + $0x74] sm:$0xf]
      %v3755 = vld [vmem:[%s1 + $0x78] sm:$0xf]
      %v3756 = vld [vmem:[%s1 + $0x7c] sm:$0xf]
      %v3757 = vld [vmem:[%s1 + $0x80] sm:$0xf]
      %v3758 = vld [vmem:[%s1 + $0x84] sm:$0xf]
      %v3759 = vld [vmem:[%s1 + $0x88] sm:$0xf]
      %v3760 = vld [vmem:[%s1 + $0x8c] sm:$0xf]
      %v3797 = vunpack.c.l.b16 %v3725
      %v3798 = vunpack.c.l.b16 %v3726
      %v3799 = vunpack.c.l.b16 %v3727
      %v3800 = vunpack.c.l.b16 %v3728
      %v3801 = vunpack.c.l.b16 %v3729
      %v3802 = vunpack.c.l.b16 %v3730
      %v3803 = vunpack.c.l.b16 %v3731
      %v3804 = vunpack.c.l.b16 %v3732
      %v3805 = vunpack.c.l.b16 %v3733
      %v3806 = vunpack.c.l.b16 %v3734
      %v3807 = vunpack.c.l.b16 %v3735
      %v3808 = vunpack.c.l.b16 %v3736
      %v3809 = vunpack.c.l.b16 %v3737
      %v3810 = vunpack.c.l.b16 %v3738
      %v3811 = vunpack.c.l.b16 %v3739
      %v3812 = vunpack.c.l.b16 %v3740
      %v3813 = vunpack.c.l.b16 %v3741
      %v3814 = vunpack.c.l.b16 %v3742
      %v3815 = vunpack.c.l.b16 %v3743
      %v3816 = vunpack.c.l.b16 %v3744
      %v3817 = vunpack.c.l.b16 %v3745
      %v3818 = vunpack.c.l.b16 %v3746
      %v3819 = vunpack.c.l.b16 %v3747
      %v3820 = vunpack.c.l.b16 %v3748
      %v3821 = vunpack.c.l.b16 %v3749
      %v3822 = vunpack.c.l.b16 %v3750
      %v3823 = vunpack.c.l.b16 %v3751
      %v3824 = vunpack.c.l.b16 %v3752
      %v3825 = vunpack.c.l.b16 %v3753
      %v3826 = vunpack.c.l.b16 %v3754
      %v3827 = vunpack.c.l.b16 %v3755
      %v3828 = vunpack.c.l.b16 %v3756
      %v3829 = vunpack.c.l.b16 %v3757
      %v3830 = vunpack.c.l.b16 %v3758
      %v3831 = vunpack.c.l.b16 %v3759
      %v3832 = vunpack.c.l.b16 %v3760
      %v3833 = vpack.c.b16 %v3798, %v3797
      %v3834 = vpack.c.b16 %v3800, %v3799
      %v3835 = vpack.c.b16 %v3802, %v3801
      %v3836 = vpack.c.b16 %v3804, %v3803
      %v3837 = vpack.c.b16 %v3806, %v3805
      %v3838 = vpack.c.b16 %v3808, %v3807
      %v3839 = vpack.c.b16 %v3810, %v3809
      %v3840 = vpack.c.b16 %v3812, %v3811
      %v3841 = vpack.c.b16 %v3814, %v3813
      %v3842 = vpack.c.b16 %v3816, %v3815
      %v3843 = vpack.c.b16 %v3818, %v3817
      %v3844 = vpack.c.b16 %v3820, %v3819
      %v3845 = vpack.c.b16 %v3822, %v3821
      %v3846 = vpack.c.b16 %v3824, %v3823
      %v3847 = vpack.c.b16 %v3826, %v3825
      %v3848 = vpack.c.b16 %v3828, %v3827
      %v3849 = vpack.c.b16 %v3830, %v3829
      %v3850 = vpack.c.b16 %v3832, %v3831
      %v3870 = vsel %vm1040, %v3679, 0
      %v3873 = vsel %vm1040, %v3682, 0
      %v3876 = vsel %vm1040, %v3685, 0
      %v3879 = vsel %vm1040, %v3688, 0
      %v3882 = vsel %vm1040, %v3691, 0
      %v3885 = vsel %vm1040, %v3694, 0
      %v3888 = vsel %vm1040, %v3697, 0
      %v3891 = vsel %vm1040, %v3700, 0
      %v3894 = vsel %vm1040, %v3703, 0
      %v3897 = vsel %vm1040, %v3706, 0
      %v3900 = vsel %vm1040, %v3709, 0
      %v3903 = vsel %vm1040, %v3712, 0
      %v3906 = vsel %vm1040, %v3715, 0
      %v3909 = vsel %vm1040, %v3718, 0
      %v3912 = vsel %vm1040, %v3721, 0
      %v3915 = vsel %vm1040, %v3724, 0
      %3917 = vmatprep.subr.bf16.mxu0 0
      %3918 = vmatpush1.bf16.msra.mxu0 %v3833
      %3919 = vmatprep.subr.bf16.mxu0 0
      %3920 = vmatpush1.bf16.msra.mxu0 %v3834
      %3921 = vmatprep.subr.bf16.mxu0 0
      %3922 = vmatpush1.bf16.msra.mxu0 %v3835
      %3923 = vmatprep.subr.bf16.mxu0 0
      %3924 = vmatpush1.bf16.msra.mxu0 %v3836
      %3925 = vmatprep.subr.bf16.mxu0 0
      %3926 = vmatpush1.bf16.msra.mxu0 %v3837
      %3927 = vmatprep.subr.bf16.mxu0 0
      %3928 = vmatpush1.bf16.msra.mxu0 %v3838
      %3929 = vmatprep.subr.bf16.mxu0 0
      %3930 = vmatpush1.bf16.msra.mxu0 %v3839
      %3931 = vmatprep.subr.bf16.mxu0 0
      %3932 = vmatpush1.bf16.msra.mxu0 %v3840
      %3933 = vmatprep.subr.bf16.mxu0 0
      %3934 = vmatpush1.bf16.msra.mxu0 %v3841
      %3935 = vmatprep.subr.bf16.mxu0 0
      %3936 = vmatpush1.bf16.msra.mxu0 %v3842
      %3937 = vmatprep.subr.bf16.mxu0 0
      %3938 = vmatpush1.bf16.msra.mxu0 %v3843
      %3939 = vmatprep.subr.bf16.mxu0 0
      %3940 = vmatpush1.bf16.msra.mxu0 %v3844
      %3941 = vmatprep.subr.bf16.mxu0 0
      %3942 = vmatpush1.bf16.msra.mxu0 %v3845
      %3943 = vmatprep.subr.bf16.mxu0 0
      %3944 = vmatpush1.bf16.msra.mxu0 %v3846
      %3945 = vmatprep.subr.bf16.mxu0 0
      %3946 = vmatpush1.bf16.msra.mxu0 %v3847
      %3947 = vmatprep.subr.bf16.mxu0 0
      %3948 = vmatpush1.bf16.msra.mxu0 %v3848
      %3949 = vmatprep.mubr.bf16.mxu0 %v3678
      %3950 = vmatmul.mubr.bf16.gmra.mrb[0].mxu0 %v3677
      %v3951 = vpop.f32.mrb[0].mxu0
      %v3952 = vadd.f32 0.0, %v3951
      %v3953 = vpop.f32.mrb[0].mxu0
      %v3954 = vpop.f32.mrb[0].mxu0
      %v3955 = vadd.f32 0.0, %v3954
      %v3956 = vpop.f32.mrb[0].mxu0
      %3957 = vmatprep.mubr.bf16.mxu0 %v3681
      %3958 = vmatmul.mubr.bf16.gmra.mrb[0].mxu0 %v3680
      %v3959 = vpop.f32.mrb[0].mxu0
      %v3960 = vadd.f32 0.0, %v3959
      %v3961 = vpop.f32.mrb[0].mxu0
      %v3962 = vpop.f32.mrb[0].mxu0
      %v3963 = vadd.f32 0.0, %v3962
      %v3964 = vpop.f32.mrb[0].mxu0
      %3965 = vmatprep.mubr.bf16.mxu0 %v3684
      %3966 = vmatmul.mubr.bf16.gmra.mrb[0].mxu0 %v3683
      %v3967 = vpop.f32.mrb[0].mxu0
      %v3968 = vadd.f32 0.0, %v3967
      %v3969 = vpop.f32.mrb[0].mxu0
      %v3970 = vpop.f32.mrb[0].mxu0
      %v3971 = vadd.f32 0.0, %v3970
      %v3972 = vpop.f32.mrb[0].mxu0
      %3973 = vmatprep.mubr.bf16.mxu0 %v3687
      %3974 = vmatmul.mubr.bf16.gmra.mrb[0].mxu0 %v3686
      %v3975 = vpop.f32.mrb[0].mxu0
      %v3976 = vadd.f32 0.0, %v3975
      %v3977 = vpop.f32.mrb[0].mxu0
      %v3978 = vpop.f32.mrb[0].mxu0
      %v3979 = vadd.f32 0.0, %v3978
      %v3980 = vpop.f32.mrb[0].mxu0
      %3981 = vmatprep.mubr.bf16.mxu0 %v3690
      %3982 = vmatmul.mubr.bf16.gmra.mrb[0].mxu0 %v3689
      %v3983 = vpop.f32.mrb[0].mxu0
      %v3984 = vadd.f32 0.0, %v3983
      %v3985 = vpop.f32.mrb[0].mxu0
      %v3986 = vpop.f32.mrb[0].mxu0
      %v3987 = vadd.f32 0.0, %v3986
      %v3988 = vpop.f32.mrb[0].mxu0
      %3989 = vmatprep.mubr.bf16.mxu0 %v3693
      %3990 = vmatmul.mubr.bf16.gmra.mrb[0].mxu0 %v3692
      %v3991 = vpop.f32.mrb[0].mxu0
      %v3992 = vadd.f32 0.0, %v3991
      %v3993 = vpop.f32.mrb[0].mxu0
      %v3994 = vpop.f32.mrb[0].mxu0
      %v3995 = vadd.f32 0.0, %v3994
      %v3996 = vpop.f32.mrb[0].mxu0
      %3997 = vmatprep.mubr.bf16.mxu0 %v3696
      %3998 = vmatmul.mubr.bf16.gmra.mrb[0].mxu0 %v3695
      %v3999 = vpop.f32.mrb[0].mxu0
      %v4000 = vadd.f32 0.0, %v3999
      %v4001 = vpop.f32.mrb[0].mxu0
      %v4002 = vpop.f32.mrb[0].mxu0
      %v4003 = vadd.f32 0.0, %v4002
      %v4004 = vpop.f32.mrb[0].mxu0
      %4005 = vmatprep.mubr.bf16.mxu0 %v3699
      %4006 = vmatmul.mubr.bf16.gmra.mrb[0].mxu0 %v3698
      %v4007 = vpop.f32.mrb[0].mxu0
      %v4008 = vadd.f32 0.0, %v4007
      %v4009 = vpop.f32.mrb[0].mxu0
      %v4010 = vpop.f32.mrb[0].mxu0
      %v4011 = vadd.f32 0.0, %v4010
      %v4012 = vpop.f32.mrb[0].mxu0
      %4013 = vmatprep.mubr.bf16.mxu0 %v3702
      %4014 = vmatmul.mubr.bf16.gmra.mrb[0].mxu0 %v3701
      %v4015 = vpop.f32.mrb[0].mxu0
      %v4016 = vadd.f32 0.0, %v4015
      %v4017 = vpop.f32.mrb[0].mxu0
      %v4018 = vpop.f32.mrb[0].mxu0
      %v4019 = vadd.f32 0.0, %v4018
      %v4020 = vpop.f32.mrb[0].mxu0
      %4021 = vmatprep.mubr.bf16.mxu0 %v3705
      %4022 = vmatmul.mubr.bf16.gmra.mrb[0].mxu0 %v3704
      %v4023 = vpop.f32.mrb[0].mxu0
      %v4024 = vadd.f32 0.0, %v4023
      %v4025 = vpop.f32.mrb[0].mxu0
      %v4026 = vpop.f32.mrb[0].mxu0
      %v4027 = vadd.f32 0.0, %v4026
      %v4028 = vpop.f32.mrb[0].mxu0
      %4029 = vmatprep.mubr.bf16.mxu0 %v3708
      %4030 = vmatmul.mubr.bf16.gmra.mrb[0].mxu0 %v3707
      %v4031 = vpop.f32.mrb[0].mxu0
      %v4032 = vadd.f32 0.0, %v4031
      %v4033 = vpop.f32.mrb[0].mxu0
      %v4034 = vpop.f32.mrb[0].mxu0
      %v4035 = vadd.f32 0.0, %v4034
      %v4036 = vpop.f32.mrb[0].mxu0
      %4037 = vmatprep.mubr.bf16.mxu0 %v3711
      %4038 = vmatmul.mubr.bf16.gmra.mrb[0].mxu0 %v3710
      %v4039 = vpop.f32.mrb[0].mxu0
      %v4040 = vadd.f32 0.0, %v4039
      %v4041 = vpop.f32.mrb[0].mxu0
      %v4042 = vpop.f32.mrb[0].mxu0
      %v4043 = vadd.f32 0.0, %v4042
      %v4044 = vpop.f32.mrb[0].mxu0
      %4045 = vmatprep.mubr.bf16.mxu0 %v3714
      %4046 = vmatmul.mubr.bf16.gmra.mrb[0].mxu0 %v3713
      %v4047 = vpop.f32.mrb[0].mxu0
      %v4048 = vadd.f32 0.0, %v4047
      %v4049 = vpop.f32.mrb[0].mxu0
      %v4050 = vpop.f32.mrb[0].mxu0
      %v4051 = vadd.f32 0.0, %v4050
      %v4052 = vpop.f32.mrb[0].mxu0
      %4053 = vmatprep.mubr.bf16.mxu0 %v3717
      %4054 = vmatmul.mubr.bf16.gmra.mrb[0].mxu0 %v3716
      %v4055 = vpop.f32.mrb[0].mxu0
      %v4056 = vadd.f32 0.0, %v4055
      %v4057 = vpop.f32.mrb[0].mxu0
      %v4058 = vpop.f32.mrb[0].mxu0
      %v4059 = vadd.f32 0.0, %v4058
      %v4060 = vpop.f32.mrb[0].mxu0
      %4061 = vmatprep.mubr.bf16.mxu0 %v3720
      %4062 = vmatmul.mubr.bf16.gmra.mrb[0].mxu0 %v3719
      %v4063 = vpop.f32.mrb[0].mxu0
      %v4064 = vadd.f32 0.0, %v4063
      %v4065 = vpop.f32.mrb[0].mxu0
      %v4066 = vpop.f32.mrb[0].mxu0
      %v4067 = vadd.f32 0.0, %v4066
      %v4068 = vpop.f32.mrb[0].mxu0
      %4069 = vmatprep.mubr.bf16.mxu0 %v3723
      %4070 = vmatmul.mubr.bf16.gmra.mrb[0].mxu0 %v3722
      %v4071 = vpop.f32.mrb[0].mxu0
      %v4072 = vadd.f32 0.0, %v4071
      %v4073 = vpop.f32.mrb[0].mxu0
      %v4074 = vpop.f32.mrb[0].mxu0
      %v4075 = vadd.f32 0.0, %v4074
      %v4076 = vpop.f32.mrb[0].mxu0
      %4077 = vdwg.mxu0
      %4078 = vmatprep.subr.bf16.mxu0 0
      %4079 = vmatpush1.bf16.msra.mxu0 %v3849
      %4080 = vmatprep.subr.bf16.mxu0 0
      %4081 = vmatpush1.bf16.msra.mxu0 %v3850
      %4082 = vmatprep.subr.bf16.mxu0 0
      %4083 = vmatpush1.bf16.msra.mxu0 0
      %4084 = vmatprep.subr.bf16.mxu0 0
      %4085 = vmatpush1.bf16.msra.mxu0 0
      %4086 = vmatprep.subr.bf16.mxu0 0
      %4087 = vmatpush1.bf16.msra.mxu0 0
      %4088 = vmatprep.subr.bf16.mxu0 0
      %4089 = vmatpush1.bf16.msra.mxu0 0
      %4090 = vmatprep.subr.bf16.mxu0 0
      %4091 = vmatpush1.bf16.msra.mxu0 0
      %4092 = vmatprep.subr.bf16.mxu0 0
      %4093 = vmatpush1.bf16.msra.mxu0 0
      %4094 = vmatprep.subr.bf16.mxu0 0
      %4095 = vmatpush1.bf16.msra.mxu0 0
      %4096 = vmatprep.subr.bf16.mxu0 0
      %4097 = vmatpush1.bf16.msra.mxu0 0
      %4098 = vmatprep.subr.bf16.mxu0 0
      %4099 = vmatpush1.bf16.msra.mxu0 0
      %4100 = vmatprep.subr.bf16.mxu0 0
      %4101 = vmatpush1.bf16.msra.mxu0 0
      %4102 = vmatprep.subr.bf16.mxu0 0
      %4103 = vmatpush1.bf16.msra.mxu0 0
      %4104 = vmatprep.subr.bf16.mxu0 0
      %4105 = vmatpush1.bf16.msra.mxu0 0
      %4106 = vmatprep.subr.bf16.mxu0 0
      %4107 = vmatpush1.bf16.msra.mxu0 0
      %4108 = vmatprep.subr.bf16.mxu0 0
      %4109 = vmatpush1.bf16.msra.mxu0 0
      %4110 = vmatprep.mubr.bf16.mxu0 0
      %4111 = vmatmul.mubr.bf16.gmra.mrb[0].mxu0 %v3870
      %v4112 = vpop.f32.mrb[0].mxu0
      %v4113 = vadd.f32 %v3952, %v4112
      %v4114 = vpop.f32.mrb[0].mxu0
      %v4115 = vpop.f32.mrb[0].mxu0
      %v4116 = vadd.f32 %v3955, %v4115
      %v4117 = vpop.f32.mrb[0].mxu0
      %4118 = vmatprep.mubr.bf16.mxu0 0
      %4119 = vmatmul.mubr.bf16.gmra.mrb[0].mxu0 %v3873
      %v4120 = vpop.f32.mrb[0].mxu0
      %v4121 = vadd.f32 %v3960, %v4120
      %v4122 = vpop.f32.mrb[0].mxu0
      %v4123 = vpop.f32.mrb[0].mxu0
      %v4124 = vadd.f32 %v3963, %v4123
      %v4125 = vpop.f32.mrb[0].mxu0
      %4126 = vmatprep.mubr.bf16.mxu0 0
      %4127 = vmatmul.mubr.bf16.gmra.mrb[0].mxu0 %v3876
      %v4128 = vpop.f32.mrb[0].mxu0
      %v4129 = vadd.f32 %v3968, %v4128
      %v4130 = vpop.f32.mrb[0].mxu0
      %v4131 = vpop.f32.mrb[0].mxu0
      %v4132 = vadd.f32 %v3971, %v4131
      %v4133 = vpop.f32.mrb[0].mxu0
      %4134 = vmatprep.mubr.bf16.mxu0 0
      %4135 = vmatmul.mubr.bf16.gmra.mrb[0].mxu0 %v3879
      %v4136 = vpop.f32.mrb[0].mxu0
      %v4137 = vadd.f32 %v3976, %v4136
      %v4138 = vpop.f32.mrb[0].mxu0
      %v4139 = vpop.f32.mrb[0].mxu0
      %v4140 = vadd.f32 %v3979, %v4139
      %v4141 = vpop.f32.mrb[0].mxu0
      %4142 = vmatprep.mubr.bf16.mxu0 0
      %4143 = vmatmul.mubr.bf16.gmra.mrb[0].mxu0 %v3882
      %v4144 = vpop.f32.mrb[0].mxu0
      %v4145 = vadd.f32 %v3984, %v4144
      %v4146 = vpop.f32.mrb[0].mxu0
      %v4147 = vpop.f32.mrb[0].mxu0
      %v4148 = vadd.f32 %v3987, %v4147
      %v4149 = vpop.f32.mrb[0].mxu0
      %4150 = vmatprep.mubr.bf16.mxu0 0
      %4151 = vmatmul.mubr.bf16.gmra.mrb[0].mxu0 %v3885
      %v4152 = vpop.f32.mrb[0].mxu0
      %v4153 = vadd.f32 %v3992, %v4152
      %v4154 = vpop.f32.mrb[0].mxu0
      %v4155 = vpop.f32.mrb[0].mxu0
      %v4156 = vadd.f32 %v3995, %v4155
      %v4157 = vpop.f32.mrb[0].mxu0
      %4158 = vmatprep.mubr.bf16.mxu0 0
      %4159 = vmatmul.mubr.bf16.gmra.mrb[0].mxu0 %v3888
      %v4160 = vpop.f32.mrb[0].mxu0
      %v4161 = vadd.f32 %v4000, %v4160
      %v4162 = vpop.f32.mrb[0].mxu0
      %v4163 = vpop.f32.mrb[0].mxu0
      %v4164 = vadd.f32 %v4003, %v4163
      %v4165 = vpop.f32.mrb[0].mxu0
      %4166 = vmatprep.mubr.bf16.mxu0 0
      %4167 = vmatmul.mubr.bf16.gmra.mrb[0].mxu0 %v3891
      %v4168 = vpop.f32.mrb[0].mxu0
      %v4169 = vadd.f32 %v4008, %v4168
      %v4170 = vpop.f32.mrb[0].mxu0
      %v4171 = vpop.f32.mrb[0].mxu0
      %v4172 = vadd.f32 %v4011, %v4171
      %v4173 = vpop.f32.mrb[0].mxu0
      %4174 = vmatprep.mubr.bf16.mxu0 0
      %4175 = vmatmul.mubr.bf16.gmra.mrb[0].mxu0 %v3894
      %v4176 = vpop.f32.mrb[0].mxu0
      %v4177 = vadd.f32 %v4016, %v4176
      %v4178 = vpop.f32.mrb[0].mxu0
      %v4179 = vpop.f32.mrb[0].mxu0
      %v4180 = vadd.f32 %v4019, %v4179
      %v4181 = vpop.f32.mrb[0].mxu0
      %4182 = vmatprep.mubr.bf16.mxu0 0
      %4183 = vmatmul.mubr.bf16.gmra.mrb[0].mxu0 %v3897
      %v4184 = vpop.f32.mrb[0].mxu0
      %v4185 = vadd.f32 %v4024, %v4184
      %v4186 = vpop.f32.mrb[0].mxu0
      %v4187 = vpop.f32.mrb[0].mxu0
      %v4188 = vadd.f32 %v4027, %v4187
      %v4189 = vpop.f32.mrb[0].mxu0
      %4190 = vmatprep.mubr.bf16.mxu0 0
      %4191 = vmatmul.mubr.bf16.gmra.mrb[0].mxu0 %v3900
      %v4192 = vpop.f32.mrb[0].mxu0
      %v4193 = vadd.f32 %v4032, %v4192
      %v4194 = vpop.f32.mrb[0].mxu0
      %v4195 = vpop.f32.mrb[0].mxu0
      %v4196 = vadd.f32 %v4035, %v4195
      %v4197 = vpop.f32.mrb[0].mxu0
      %4198 = vmatprep.mubr.bf16.mxu0 0
      %4199 = vmatmul.mubr.bf16.gmra.mrb[0].mxu0 %v3903
      %v4200 = vpop.f32.mrb[0].mxu0
      %v4201 = vadd.f32 %v4040, %v4200
      %v4202 = vpop.f32.mrb[0].mxu0
      %v4203 = vpop.f32.mrb[0].mxu0
      %v4204 = vadd.f32 %v4043, %v4203
      %v4205 = vpop.f32.mrb[0].mxu0
      %4206 = vmatprep.mubr.bf16.mxu0 0
      %4207 = vmatmul.mubr.bf16.gmra.mrb[0].mxu0 %v3906
      %v4208 = vpop.f32.mrb[0].mxu0
      %v4209 = vadd.f32 %v4048, %v4208
      %v4210 = vpop.f32.mrb[0].mxu0
      %v4211 = vpop.f32.mrb[0].mxu0
      %v4212 = vadd.f32 %v4051, %v4211
      %v4213 = vpop.f32.mrb[0].mxu0
      %4214 = vmatprep.mubr.bf16.mxu0 0
      %4215 = vmatmul.mubr.bf16.gmra.mrb[0].mxu0 %v3909
      %v4216 = vpop.f32.mrb[0].mxu0
      %v4217 = vadd.f32 %v4056, %v4216
      %v4218 = vpop.f32.mrb[0].mxu0
      %v4219 = vpop.f32.mrb[0].mxu0
      %v4220 = vadd.f32 %v4059, %v4219
      %v4221 = vpop.f32.mrb[0].mxu0
      %4222 = vmatprep.mubr.bf16.mxu0 0
      %4223 = vmatmul.mubr.bf16.gmra.mrb[0].mxu0 %v3912
      %v4224 = vpop.f32.mrb[0].mxu0
      %v4225 = vadd.f32 %v4064, %v4224
      %v4226 = vpop.f32.mrb[0].mxu0
      %v4227 = vpop.f32.mrb[0].mxu0
      %v4228 = vadd.f32 %v4067, %v4227
      %v4229 = vpop.f32.mrb[0].mxu0
      %4230 = vmatprep.mubr.bf16.mxu0 0
      %4231 = vmatmul.mubr.bf16.gmra.mrb[0].mxu0 %v3915
      %v4232 = vpop.f32.mrb[0].mxu0
      %v4233 = vadd.f32 %v4072, %v4232
      %v4234 = vpop.f32.mrb[0].mxu0
      %v4235 = vpop.f32.mrb[0].mxu0
      %v4236 = vadd.f32 %v4075, %v4235
      %v4237 = vpop.f32.mrb[0].mxu0
      %4238 = vdwg.mxu0
      %4239 = vst.msk [vmem:[#allocation3] sm:$0xff] %vm1040, %v4113
      %4240 = vst.msk [vmem:[#allocation3 + $0x8] sm:$0xff] %vm1040, %v4116
      %4241 = vst.msk [vmem:[#allocation3 + $0x10] sm:$0xff] %vm1040, %v4121
      %4242 = vst.msk [vmem:[#allocation3 + $0x18] sm:$0xff] %vm1040, %v4124
      %4243 = vst.msk [vmem:[#allocation3 + $0x20] sm:$0xff] %vm1040, %v4129
      %4244 = vst.msk [vmem:[#allocation3 + $0x28] sm:$0xff] %vm1040, %v4132
      %4245 = vst.msk [vmem:[#allocation3 + $0x30] sm:$0xff] %vm1040, %v4137
      %4246 = vst.msk [vmem:[#allocation3 + $0x38] sm:$0xff] %vm1040, %v4140
      %4247 = vst.msk [vmem:[#allocation3 + $0x40] sm:$0xff] %vm1040, %v4145
      %4248 = vst.msk [vmem:[#allocation3 + $0x48] sm:$0xff] %vm1040, %v4148
      %4249 = vst.msk [vmem:[#allocation3 + $0x50] sm:$0xff] %vm1040, %v4153
      %4250 = vst.msk [vmem:[#allocation3 + $0x58] sm:$0xff] %vm1040, %v4156
      %4251 = vst.msk [vmem:[#allocation3 + $0x60] sm:$0xff] %vm1040, %v4161
      %4252 = vst.msk [vmem:[#allocation3 + $0x68] sm:$0xff] %vm1040, %v4164
      %4253 = vst.msk [vmem:[#allocation3 + $0x70] sm:$0xff] %vm1040, %v4169
      %4254 = vst.msk [vmem:[#allocation3 + $0x78] sm:$0xff] %vm1040, %v4172
      %4255 = vst.msk [vmem:[#allocation3 + $0x80] sm:$0xff] %vm1040, %v4177
      %4256 = vst.msk [vmem:[#allocation3 + $0x88] sm:$0xff] %vm1040, %v4180
      %4257 = vst.msk [vmem:[#allocation3 + $0x90] sm:$0xff] %vm1040, %v4185
      %4258 = vst.msk [vmem:[#allocation3 + $0x98] sm:$0xff] %vm1040, %v4188
      %4259 = vst.msk [vmem:[#allocation3 + $0xa0] sm:$0xff] %vm1040, %v4193
      %4260 = vst.msk [vmem:[#allocation3 + $0xa8] sm:$0xff] %vm1040, %v4196
      %4261 = vst.msk [vmem:[#allocation3 + $0xb0] sm:$0xff] %vm1040, %v4201
      %4262 = vst.msk [vmem:[#allocation3 + $0xb8] sm:$0xff] %vm1040, %v4204
      %4263 = vst.msk [vmem:[#allocation3 + $0xc0] sm:$0xff] %vm1040, %v4209
      %4264 = vst.msk [vmem:[#allocation3 + $0xc8] sm:$0xff] %vm1040, %v4212
      %4265 = vst.msk [vmem:[#allocation3 + $0xd0] sm:$0xff] %vm1040, %v4217
      %4266 = vst.msk [vmem:[#allocation3 + $0xd8] sm:$0xff] %vm1040, %v4220
      %4267 = vst.msk [vmem:[#allocation3 + $0xe0] sm:$0xff] %vm1040, %v4225
      %4268 = vst.msk [vmem:[#allocation3 + $0xe8] sm:$0xff] %vm1040, %v4228
      %4269 = vst.msk [vmem:[#allocation3 + $0xf0] sm:$0xff] %vm1040, %v4233
      %4270 = vst.msk [vmem:[#allocation3 + $0xf8] sm:$0xff] %vm1040, %v4236
      %v4271 = vld [vmem:[%s2] sm:$0x1]
      %v4272 = vsel %vm1040, %v4113, 0.0
      %v4273 = vsel %vm1040, %v4116, 0.0
      %v4274 = vadd.f32 %v4272, %v4273
      %v4275 = vsel %vm1040, %v4121, 0.0
      %v4276 = vadd.f32 %v4274, %v4275
      %v4277 = vsel %vm1040, %v4124, 0.0
      %v4278 = vadd.f32 %v4276, %v4277
      %v4279 = vsel %vm1040, %v4129, 0.0
      %v4280 = vadd.f32 %v4278, %v4279
      %v4281 = vsel %vm1040, %v4132, 0.0
      %v4282 = vadd.f32 %v4280, %v4281
      %v4283 = vsel %vm1040, %v4137, 0.0
      %v4284 = vadd.f32 %v4282, %v4283
      %v4285 = vsel %vm1040, %v4140, 0.0
      %v4286 = vadd.f32 %v4284, %v4285
      %v4287 = vsel %vm1040, %v4145, 0.0
      %v4288 = vadd.f32 %v4286, %v4287
      %v4289 = vsel %vm1040, %v4148, 0.0
      %v4290 = vadd.f32 %v4288, %v4289
      %v4291 = vsel %vm1040, %v4153, 0.0
      %v4292 = vadd.f32 %v4290, %v4291
      %v4293 = vsel %vm1040, %v4156, 0.0
      %v4294 = vadd.f32 %v4292, %v4293
      %v4295 = vsel %vm1040, %v4161, 0.0
      %v4296 = vadd.f32 %v4294, %v4295
      %v4297 = vsel %vm1040, %v4164, 0.0
      %v4298 = vadd.f32 %v4296, %v4297
      %v4299 = vsel %vm1040, %v4169, 0.0
      %v4300 = vadd.f32 %v4298, %v4299
      %v4301 = vsel %vm1040, %v4172, 0.0
      %v4302 = vadd.f32 %v4300, %v4301
      %v4303 = vsel %vm1040, %v4177, 0.0
      %v4304 = vadd.f32 %v4302, %v4303
      %v4305 = vsel %vm1040, %v4180, 0.0
      %v4306 = vadd.f32 %v4304, %v4305
      %v4307 = vsel %vm1040, %v4185, 0.0
      %v4308 = vadd.f32 %v4306, %v4307
      %v4309 = vsel %vm1040, %v4188, 0.0
      %v4310 = vadd.f32 %v4308, %v4309
      %v4311 = vsel %vm1040, %v4193, 0.0
      %v4312 = vadd.f32 %v4310, %v4311
      %v4313 = vsel %vm1040, %v4196, 0.0
      %v4314 = vadd.f32 %v4312, %v4313
      %v4315 = vsel %vm1040, %v4201, 0.0
      %v4316 = vadd.f32 %v4314, %v4315
      %v4317 = vsel %vm1040, %v4204, 0.0
      %v4318 = vadd.f32 %v4316, %v4317
      %v4319 = vsel %vm1040, %v4209, 0.0
      %v4320 = vadd.f32 %v4318, %v4319
      %v4321 = vsel %vm1040, %v4212, 0.0
      %v4322 = vadd.f32 %v4320, %v4321
      %v4323 = vsel %vm1040, %v4217, 0.0
      %v4324 = vadd.f32 %v4322, %v4323
      %v4325 = vsel %vm1040, %v4220, 0.0
      %v4326 = vadd.f32 %v4324, %v4325
      %v4327 = vsel %vm1040, %v4225, 0.0
      %v4328 = vadd.f32 %v4326, %v4327
      %v4329 = vsel %vm1040, %v4228, 0.0
      %v4330 = vadd.f32 %v4328, %v4329
      %v4331 = vsel %vm1040, %v4233, 0.0
      %v4332 = vadd.f32 %v4330, %v4331
      %v4333 = vsel %vm1040, %v4236, 0.0
      %v4334 = vadd.f32 %v4332, %v4333
      %v4335 = vrot.slane %v4334, 4
      %v4336 = vadd.f32 %v4334, %v4335
      %v4337 = vrot.slane %v4336, 2
      %v4338 = vadd.f32 %v4336, %v4337
      %v4339 = vrot.slane %v4338, 1
      %v4340 = vadd.f32 %v4338, %v4339
      %v4341 = vrcp.pop 256.0
      %v4342 = vmul.f32 %v4340, %v4341
      %v4343 = vadd.f32 %v4342, %v4271
      %v4344 = vld [vmem:[%s2 + $0x1] sm:$0x1]
      %v4345 = vld [vmem:[%s2 + $0x2] sm:$0x1]
      %v4346 = vmul.f32 %v4343, %v4345
      %vm4347 = vcmask 253952
      %v4348 = vsel %vm4347, %v4346, 0.0
      %4349 = vadd.xlane.f32.xlu0 %v4348
      %v4350 = vpop.xlane.xlu0 %4349
      %v4351 = vld [vmem:[%s2 + $0x6] sm:$0x1]
      %v4352 = vadd.f32 %v4350, %v4351
      %v4353 = vmax.f32 %v4352, 0.0
      %v4354 = vld [vmem:[%s2 + $0x4] sm:$0x1]
      %4356 = vset.pattern.permute.xlu0 0
      %4357 = vperm.xlu0 %4356, %v4353
      %v4358 = vpop.permute.xlu0 %4357
      %v4360 = vmul.f32 %v4358, %v4354
      %v4361 = vadd.f32 %v4344, %v4360
      %v4362 = vld [vmem:[%s2 + $0x3] sm:$0x1]
      %v4363 = vmul.f32 %v4343, %v4362
      %v4364 = vsel %vm4347, %v4363, 0.0
      %4365 = vadd.xlane.f32.xlu0 %v4364
      %v4366 = vpop.xlane.xlu0 %4365
      %v4367 = vld [vmem:[%s2 + $0x7] sm:$0x1]
      %v4368 = vadd.f32 %v4366, %v4367
      %v4369 = vmax.f32 %v4368, 0.0
      %v4370 = vld [vmem:[%s2 + $0x5] sm:$0x1]
      %4372 = vset.pattern.permute.xlu0 0
      %4373 = vperm.xlu0 %4372, %v4369
      %v4374 = vpop.permute.xlu0 %4373
      %v4376 = vmul.f32 %v4374, %v4370
      %v4377 = vadd.f32 %v4361, %v4376
      %v4378 = vxor.u32 %v4377, 2147483648
      %v4379 = vmul.f32 %v4378, 1.442695
      %v4380 = vpow.pop %v4379
      %v4381 = vadd.f32 %v4380, 1.0
      %v4382 = vrcp.pop %v4381
      %v4383 = vmul.f32 1.0, %v4382
      %v4384 = vlaneseq
      %v4385 = vshrl.u32 %v4384, 7
      %v4386 = vsub.s32 0, %v4385
      %v4387 = vrot.slane %v4383, %v4386
      %v4388 = vmul.f32 %v4271, %v4383
      %v4389 = vlaneseq
      %v4390 = vshrl.u32 %v4389, 7
      %v4391 = vsub.s32 0, %v4390
      %v4392 = vrot.slane %v4388, %v4391
      loop: start=0, step=1, limit=4
      $region33: #{tpu_custom_call.1} parent=31 // loop_pre_header
        _
      $region34: #{tpu_custom_call.1} parent=31 // loop_header
        %s4394 = sphi 0, %s4398
        %p4395 = scmp.ge.s32.totalorder %s4394, 4
      $region35: #{tpu_custom_call.1} parent=31 // loop_header_branch
        %4397 = sbr.rel (%p4395) target = $region39
      $region36: #{tpu_custom_call.1} parent=31 // loop_body
        %s4399 = smul.u32 %s4394, 64
        %s4400 = scalar_lea.vmem [#allocation3], %s4399
        %v4401 = vld [vmem:[%s4400] sm:$0xff]
        %v4402 = vld [vmem:[%s4400 + $0x8] sm:$0xff]
        %v4403 = vld [vmem:[%s4400 + $0x10] sm:$0xff]
        %v4404 = vld [vmem:[%s4400 + $0x18] sm:$0xff]
        %v4405 = vld [vmem:[%s4400 + $0x20] sm:$0xff]
        %v4406 = vld [vmem:[%s4400 + $0x28] sm:$0xff]
        %v4407 = vld [vmem:[%s4400 + $0x30] sm:$0xff]
        %v4408 = vld [vmem:[%s4400 + $0x38] sm:$0xff]
        %v4409 = vmul.f32 %v4401, %v4387
        %v4410 = vmul.f32 %v4402, %v4387
        %v4411 = vmul.f32 %v4403, %v4387
        %v4412 = vmul.f32 %v4404, %v4387
        %v4413 = vmul.f32 %v4405, %v4387
        %v4414 = vmul.f32 %v4406, %v4387
        %v4415 = vmul.f32 %v4407, %v4387
        %v4416 = vmul.f32 %v4408, %v4387
        %v4417 = vadd.f32 %v4409, %v4392
        %v4418 = vadd.f32 %v4410, %v4392
        %v4419 = vadd.f32 %v4411, %v4392
        %v4420 = vadd.f32 %v4412, %v4392
        %v4421 = vadd.f32 %v4413, %v4392
        %v4422 = vadd.f32 %v4414, %v4392
        %v4423 = vadd.f32 %v4415, %v4392
        %v4424 = vadd.f32 %v4416, %v4392
        %v4425 = vmul.f32 %v4417, %v4417
        %v4426 = vmul.f32 %v4418, %v4418
        %v4427 = vmul.f32 %v4419, %v4419
        %v4428 = vmul.f32 %v4420, %v4420
        %v4429 = vmul.f32 %v4421, %v4421
        %v4430 = vmul.f32 %v4422, %v4422
        %v4431 = vmul.f32 %v4423, %v4423
        %v4432 = vmul.f32 %v4424, %v4424
        %v4433 = vmul.f32 %v4417, %v4425
        %v4434 = vmul.f32 %v4418, %v4426
        %v4435 = vmul.f32 %v4419, %v4427
        %v4436 = vmul.f32 %v4420, %v4428
        %v4437 = vmul.f32 %v4421, %v4429
        %v4438 = vmul.f32 %v4422, %v4430
        %v4439 = vmul.f32 %v4423, %v4431
        %v4440 = vmul.f32 %v4424, %v4432
        %v4441 = vmul.f32 %v4433, 0.044715
        %v4442 = vmul.f32 %v4434, 0.044715
        %v4443 = vmul.f32 %v4435, 0.044715
        %v4444 = vmul.f32 %v4436, 0.044715
        %v4445 = vmul.f32 %v4437, 0.044715
        %v4446 = vmul.f32 %v4438, 0.044715
        %v4447 = vmul.f32 %v4439, 0.044715
        %v4448 = vmul.f32 %v4440, 0.044715
        %v4449 = vadd.f32 %v4417, %v4441
        %v4450 = vadd.f32 %v4418, %v4442
        %v4451 = vadd.f32 %v4419, %v4443
        %v4452 = vadd.f32 %v4420, %v4444
        %v4453 = vadd.f32 %v4421, %v4445
        %v4454 = vadd.f32 %v4422, %v4446
        %v4455 = vadd.f32 %v4423, %v4447
        %v4456 = vadd.f32 %v4424, %v4448
        %v4457 = vmul.f32 %v4449, 0.7978846
        %v4458 = vmul.f32 %v4450, 0.7978846
        %v4459 = vmul.f32 %v4451, 0.7978846
        %v4460 = vmul.f32 %v4452, 0.7978846
        %v4461 = vmul.f32 %v4453, 0.7978846
        %v4462 = vmul.f32 %v4454, 0.7978846
        %v4463 = vmul.f32 %v4455, 0.7978846
        %v4464 = vmul.f32 %v4456, 0.7978846
        %v4465 = vtanh.pop %v4457
        %v4466 = vtanh.pop %v4458
        %v4467 = vtanh.pop %v4459
        %v4468 = vtanh.pop %v4460
        %v4469 = vtanh.pop %v4461
        %v4470 = vtanh.pop %v4462
        %v4471 = vtanh.pop %v4463
        %v4472 = vtanh.pop %v4464
        %v4473 = vadd.f32 %v4465, 1.0
        %v4474 = vadd.f32 %v4466, 1.0
        %v4475 = vadd.f32 %v4467, 1.0
        %v4476 = vadd.f32 %v4468, 1.0
        %v4477 = vadd.f32 %v4469, 1.0
        %v4478 = vadd.f32 %v4470, 1.0
        %v4479 = vadd.f32 %v4471, 1.0
        %v4480 = vadd.f32 %v4472, 1.0
        %v4481 = vmul.f32 %v4473, 0.5
        %v4482 = vmul.f32 %v4474, 0.5
        %v4483 = vmul.f32 %v4475, 0.5
        %v4484 = vmul.f32 %v4476, 0.5
        %v4485 = vmul.f32 %v4477, 0.5
        %v4486 = vmul.f32 %v4478, 0.5
        %v4487 = vmul.f32 %v4479, 0.5
        %v4488 = vmul.f32 %v4480, 0.5
        %v4489 = vmul.f32 %v4417, %v4481
        %v4490 = vmul.f32 %v4418, %v4482
        %v4491 = vmul.f32 %v4419, %v4483
        %v4492 = vmul.f32 %v4420, %v4484
        %v4493 = vmul.f32 %v4421, %v4485
        %v4494 = vmul.f32 %v4422, %v4486
        %v4495 = vmul.f32 %v4423, %v4487
        %v4496 = vmul.f32 %v4424, %v4488
        %v4497 = vpack.c.bf16 %v4490, %v4489
        %v4498 = vpack.c.bf16 %v4492, %v4491
        %v4499 = vpack.c.bf16 %v4494, %v4493
        %v4500 = vpack.c.bf16 %v4496, %v4495
        %v4505 = vunpack.c.l.b16 %v4497
        %v4506 = vunpack.c.h.b16 %v4497
        %v4507 = vunpack.c.l.b16 %v4498
        %v4508 = vunpack.c.h.b16 %v4498
        %v4509 = vunpack.c.l.b16 %v4499
        %v4510 = vunpack.c.h.b16 %v4499
        %v4511 = vunpack.c.l.b16 %v4500
        %v4512 = vunpack.c.h.b16 %v4500
        %v4513 = vpack.c.b16 %v4505, %v4505
        %v4514 = vpack.c.b16 %v4506, %v4506
        %v4515 = vpack.c.b16 %v4507, %v4507
        %v4516 = vpack.c.b16 %v4508, %v4508
        %v4517 = vpack.c.b16 %v4509, %v4509
        %v4518 = vpack.c.b16 %v4510, %v4510
        %v4519 = vpack.c.b16 %v4511, %v4511
        %v4520 = vpack.c.b16 %v4512, %v4512
        %s4529 = sshra.s32 %s4399, 3
        %s4530 = sand.u32 %s4399, 7
        %s4531 = smul.addr %s4529, 4
        %s4532 = scalar_lea.vmem %s170, %s4531
        %vm4533 = vcmask 257024
        %4534 = vst.msk [vmem:[%s4532] sm:$0xf] %vm4533, %v4513
        %4535 = vst.msk [vmem:[%s4532 + $0x4] sm:$0xf] %vm4533, %v4514
        %4536 = vst.msk [vmem:[%s4532 + $0x8] sm:$0xf] %vm4533, %v4515
        %4537 = vst.msk [vmem:[%s4532 + $0xc] sm:$0xf] %vm4533, %v4516
        %4538 = vst.msk [vmem:[%s4532 + $0x10] sm:$0xf] %vm4533, %v4517
        %4539 = vst.msk [vmem:[%s4532 + $0x14] sm:$0xf] %vm4533, %v4518
        %4540 = vst.msk [vmem:[%s4532 + $0x18] sm:$0xf] %vm4533, %v4519
        %4541 = vst.msk [vmem:[%s4532 + $0x1c] sm:$0xf] %vm4533, %v4520
      $region37: #{tpu_custom_call.1} parent=31 // loop_footer
        %s4398 = sadd.s32 1, %s4394
      $region38: #{tpu_custom_call.1} parent=31 // loop_footer_branch
        %4393 = sbr.rel target = $region34
      $region39: #{tpu_custom_call.1} parent=31 // loop_exit
        _
      %p4542 = scmp.lt.s32.totalorder %s14, 1
      %s4543 = scalar_select %p4542, %s14, 1
      %s4544 = smul.addr %s4543, 32
      %s4545 = smul.addr %s4544, 4
      %s4546 = scalar_lea.vmem %s3, %s4545
      // Predicated region
      $region40: #{tpu_custom_call.1} parent=31 // pred_check
        %p4547 = pneg %p100
      $region41: #{tpu_custom_call.1} parent=31 // pred_check_branch
        %4549 = sbr.rel (%p4547) target = $region43
      $region42: #{tpu_custom_call.1} parent=31 // pred_region
        _
      $region43: #{tpu_custom_call.1} parent=31 // pred_fallthru
        _
    $region32: #{tpu_custom_call.1} parent=5 // pred_fallthru
      _
    %p4550 = scmp.le.s32.totalorder 2, %s9
    // Predicated region
    $region44: #{tpu_custom_call.1} parent=5 // pred_check
      %p4551 = pneg %p4550
    $region45: #{tpu_custom_call.1} parent=5 // pred_check_branch
      %4553 = sbr.rel (%p4551) target = $region47
    $region46: #{tpu_custom_call.1} parent=5 // pred_region
      %s4554 = ssub.s32 %s9, 2
      // Predicated region
      $region48: #{tpu_custom_call.1} parent=46 // pred_check
        %p4555 = pneg %p106
      $region49: #{tpu_custom_call.1} parent=46 // pred_check_branch
        %4557 = sbr.rel (%p4555) target = $region51
      $region50: #{tpu_custom_call.1} parent=46 // pred_region
        %p4558 = scmp.lt.s32.totalorder %s15, 1
        %s4559 = scalar_select %p4558, %s15, 1
        %s4560 = smul.addr %s4559, 32
        %s4561 = smul.addr %s4560, 4
        %s4562 = scalar_lea.vmem %s3, %s4561
      $region51: #{tpu_custom_call.1} parent=46 // pred_fallthru
        _
    $region47: #{tpu_custom_call.1} parent=5 // pred_fallthru
      _
  $region6: #{tpu_custom_call.1} parent=0 // loop_footer
    %s13 = sadd.s32 1, %s9
  $region7: #{tpu_custom_call.1} parent=0 // loop_footer_branch
    %8 = sbr.rel target = $region3
  $region8: #{tpu_custom_call.1} parent=0 // loop_exit
    _

</llo_original>
